<compile_context>
chip_gen: v6e
topology: v6e:2x2x1
jax: 0.10.0
libtpu: 0.0.40
codegen_flags: <defaults>
</compile_context>

<pallas_src>
import math

import jax
import jax.numpy as jnp
from jax.experimental import pallas as pl
from jax.experimental.pallas import tpu as pltpu


def _round_up(x, m):
    return ((x + m - 1) // m) * m


def _make_gauss_kernel(n_gauss_layers: int, matmul_dtype):
    """Fused MLP body. Layer count is a static Python int; loop is unrolled."""

    def kernel(x_ref, *refs):
        o_ref = refs[-1]
        params = refs[:-1]

        h = x_ref[...].astype(jnp.float32)        # [C_in, T]  (lane-dense on T)

        idx = 0
        for _ in range(n_gauss_layers):
            w = params[idx][...]                  # [C_out, C_in]  (scale folded in)
            b = params[idx + 1][...]              # [C_out, 1]     (scale folded in)
            idx += 2
            z = jnp.dot(w.astype(matmul_dtype), h.astype(matmul_dtype),
                        preferred_element_type=jnp.float32) + b
            h = jnp.exp(-(z * z))                 # exp(-(scale*lin)^2), scale pre-folded

        # Final linear layer (asi pair already fused into a single W/b in wrapper).
        wl = params[idx][...]
        bl = params[idx + 1][...]
        out = jnp.dot(wl.astype(matmul_dtype), h.astype(matmul_dtype),
                      preferred_element_type=jnp.float32) + bl
        o_ref[...] = out.astype(o_ref.dtype)

    return kernel


def _prepare_params(params, scale, asi_if):
    """Fold `scale` into Gauss-layer params, fuse asi final layers, reshape biases.

    params: flat list [W0, b0, W1, b1, ..., W_last, b_last(, W_asi, b_asi)]
            weights in PyTorch layout [out, in], biases [out].
    Returns (prepped_params, n_gauss_layers) with weights [out, in] and biases [out, 1].
    """
    n_last = 2 if asi_if else 1
    n_linear = len(params) // 2
    n_gauss = n_linear - n_last

    prepped = []
    for li in range(n_gauss):
        w, b = params[2 * li], params[2 * li + 1]
        prepped.append((scale * w).astype(jnp.float32))
        prepped.append((scale * b).reshape(-1, 1).astype(jnp.float32))

    idx = 2 * n_gauss
    wl, bl = params[idx], params[idx + 1]
    if asi_if:
        wa, ba = params[idx + 2], params[idx + 3]
        c = math.sqrt(2.0) / 2.0
        wl = (wl - wa) * c          # exact algebraic fusion of the asi difference
        bl = (bl - ba) * c
    prepped.append(jnp.asarray(wl, jnp.float32))
    prepped.append(jnp.asarray(bl, jnp.float32).reshape(-1, 1))
    return prepped, n_gauss


def gauss_forward(coords, params, *, scale=30.0, asi_if=False, tile_cols=2048,
                  matmul_dtype=jnp.float32):
    """Gauss INR forward with one fused Pallas kernel.

    coords: [N, in_features] float32
    params: PyTorch-layout flat list (weights [out, in], biases [out]).
    Returns [N, out_features] float32.
    """
    N, in_features = coords.shape
    prepped, n_gauss = _prepare_params(params, float(scale), asi_if)
    out_features = prepped[-2].shape[0]

    # Lane-dense layout: put the big point dimension on the 128-wide lane axis.
    x_t = jnp.transpose(coords).astype(jnp.float32)            # [in_features, N]

    tc = min(int(tile_cols), _round_up(N, 128))
    tc = max(128, _round_up(tc, 128))
    n_pad = _round_up(N, tc)
    if n_pad != N:
        x_t = jnp.pad(x_t, ((0, 0), (0, n_pad - N)))

    grid = (n_pad // tc,)

    # Coords / output tiled along the lane (point) axis; every weight/bias is a
    # single full-array block resident in VMEM for the whole grid.
    in_specs = [pl.BlockSpec((in_features, tc), lambda i: (0, i))]
    for p in prepped:
        r, c = p.shape
        in_specs.append(pl.BlockSpec((r, c), lambda i: (0, 0)))
    out_spec = pl.BlockSpec((out_features, tc), lambda i: (0, i))

    out_t = pl.pallas_call(
        _make_gauss_kernel(n_gauss, matmul_dtype),
        out_shape=jax.ShapeDtypeStruct((out_features, n_pad), jnp.float32),
        grid_spec=pltpu.PrefetchScalarGridSpec(
            num_scalar_prefetch=0,
            grid=grid,
            in_specs=in_specs,
            out_specs=out_spec,
        ),
        compiler_params=pltpu.CompilerParams(
            dimension_semantics=("parallel",),
        ),
    )(x_t, *prepped)

    return jnp.transpose(out_t[:, :N])                          # [N, out_features]


def init_gauss_params(key, in_features, hidden_features, hidden_layers,
                      out_features, asi_if=False):
    """PyTorch nn.Linear-style init: W [out, in], b [out], U(-1/sqrt(fan_in), +)."""
    dims = [in_features] + [hidden_features] * (hidden_layers + 1)

    def linear_init(k, fan_in, fan_out):
        kw, kb = jax.random.split(k)
        bound = 1.0 / math.sqrt(fan_in)
        w = jax.random.uniform(kw, (fan_out, fan_in), jnp.float32, -bound, bound)
        b = jax.random.uniform(kb, (fan_out,), jnp.float32, -bound, bound)
        return w, b

    keys = jax.random.split(key, hidden_layers + 2)
    params = []
    for li in range(hidden_layers + 1):            # GaussLayer stack
        w, b = linear_init(keys[li], dims[li], dims[li + 1])
        params += [w, b]
    wl, bl = linear_init(keys[-1], hidden_features, out_features)
    params += [wl, bl]
    if asi_if:
        params += [wl, bl]                         # asi layer initialized as exact copy
    return params


def gauss_reference(coords, params, *, scale=30.0, asi_if=False):
    """Plain-JAX reference faithful to the PyTorch module (no folding/fusion)."""
    n_last = 2 if asi_if else 1
    n_gauss = len(params) // 2 - n_last
    h = coords
    for li in range(n_gauss):
        w, b = params[2 * li], params[2 * li + 1]
        h = jnp.exp(-jnp.square(scale * (h @ w.T + b)))
    idx = 2 * n_gauss
    out = h @ params[idx].T + params[idx + 1]
    if asi_if:
        out2 = h @ params[idx + 2].T + params[idx + 3]
        out = (out - out2) * (math.sqrt(2.0) / 2.0)
    return out


if __name__ == "__main__":
    # Small INR-style config: 2-D coords -> 32 hidden (2 hidden layers) -> 3 outputs.
    in_features, hidden_features, hidden_layers, out_features = 2, 32, 2, 3
    scale = 30.0
    N = 4096           # number of coordinate points
    tile_cols = 2048   # big lane-dense tiles; 2 grid steps keep both v7x TCs busy

    key = jax.random.PRNGKey(0)
    k_params, k_coords, k_asi = jax.random.split(key, 3)

    coords = jax.random.uniform(k_coords, (N, in_features), jnp.float32, -1.0, 1.0)

    # --- standard path (asi_if=False) ---
    params = init_gauss_params(k_params, in_features, hidden_features,
                               hidden_layers, out_features, asi_if=False)
    out = gauss_forward(coords, params, scale=scale, asi_if=False,
                        tile_cols=tile_cols)
    out = jax.block_until_ready(out)
    ref = gauss_reference(coords, params, scale=scale, asi_if=False)
    assert out.shape == (N, out_features)
    assert jnp.allclose(out, ref, atol=5e-4, rtol=5e-4), "mismatch vs reference"

    # --- asi path (perturb the asi copy so the fused difference is nontrivial) ---
    params_asi = init_gauss_params(k_params, in_features, hidden_features,
                                   hidden_layers, out_features, asi_if=True)
    ka, kb = jax.random.split(k_asi)
    params_asi[-2] = params_asi[-2] + 0.05 * jax.random.normal(
        ka, params_asi[-2].shape, jnp.float32)
    params_asi[-1] = params_asi[-1] + 0.05 * jax.random.normal(
        kb, params_asi[-1].shape, jnp.float32)
    out_asi = gauss_forward(coords, params_asi, scale=scale, asi_if=True,
                            tile_cols=tile_cols)
    out_asi = jax.block_until_ready(out_asi)
    ref_asi = gauss_reference(coords, params_asi, scale=scale, asi_if=True)
    assert out_asi.shape == (N, out_features)
    assert jnp.allclose(out_asi, ref_asi, atol=5e-4, rtol=5e-4), "asi mismatch vs reference"

    print("KERNEL_OK")
</pallas_src>

<mosaic_0001>
module attributes {stable_mosaic.version = 11 : i64} {
  func.func @kernel(%arg0: i32, %arg1: memref<2x2048xf32, #tpu.memory_space<vmem>>, %arg2: memref<32x2xf32, #tpu.memory_space<vmem>>, %arg3: memref<32x1xf32, #tpu.memory_space<vmem>>, %arg4: memref<32x32xf32, #tpu.memory_space<vmem>>, %arg5: memref<32x1xf32, #tpu.memory_space<vmem>>, %arg6: memref<32x32xf32, #tpu.memory_space<vmem>>, %arg7: memref<32x1xf32, #tpu.memory_space<vmem>>, %arg8: memref<3x32xf32, #tpu.memory_space<vmem>>, %arg9: memref<3x1xf32, #tpu.memory_space<vmem>>, %arg10: memref<3x2048xf32, #tpu.memory_space<vmem>>) attributes {dimension_semantics = [#tpu.dimension_semantics<parallel>], iteration_bounds = array<i64: 2>, scalar_prefetch = 0 : i64, scratch_operands = 0 : i64, tpu.core_type = #tpu.core_type<tc>, window_params = [{transform_indices = @transform_0, window_bounds = array<i64: 2, 2048>}, {pipeline_mode = #tpu.pipeline_mode<synchronous>, transform_indices = @transform_1, window_bounds = array<i64: 32, 2>}, {pipeline_mode = #tpu.pipeline_mode<synchronous>, transform_indices = @transform_2, window_bounds = array<i64: 32, 1>}, {pipeline_mode = #tpu.pipeline_mode<synchronous>, transform_indices = @transform_3, window_bounds = array<i64: 32, 32>}, {pipeline_mode = #tpu.pipeline_mode<synchronous>, transform_indices = @transform_4, window_bounds = array<i64: 32, 1>}, {pipeline_mode = #tpu.pipeline_mode<synchronous>, transform_indices = @transform_5, window_bounds = array<i64: 32, 32>}, {pipeline_mode = #tpu.pipeline_mode<synchronous>, transform_indices = @transform_6, window_bounds = array<i64: 32, 1>}, {pipeline_mode = #tpu.pipeline_mode<synchronous>, transform_indices = @transform_7, window_bounds = array<i64: 3, 32>}, {pipeline_mode = #tpu.pipeline_mode<synchronous>, transform_indices = @transform_8, window_bounds = array<i64: 3, 1>}, {transform_indices = @transform_9, window_bounds = array<i64: 3, 2048>}]} {
    %c0 = arith.constant 0 : index
    %c0_0 = arith.constant 0 : index
    %0 = vector.load %arg1[%c0, %c0_0] : memref<2x2048xf32, #tpu.memory_space<vmem>>, vector<2x2048xf32>
    %c0_1 = arith.constant 0 : index
    %c0_2 = arith.constant 0 : index
    %1 = vector.load %arg2[%c0_1, %c0_2] : memref<32x2xf32, #tpu.memory_space<vmem>>, vector<32x2xf32>
    %c0_3 = arith.constant 0 : index
    %c0_4 = arith.constant 0 : index
    %2 = vector.load %arg3[%c0_3, %c0_4] : memref<32x1xf32, #tpu.memory_space<vmem>>, vector<32x1xf32>
    %cst = arith.constant dense<0.000000e+00> : vector<32x2048xf32>
    %3 = tpu.matmul %1, %0, %cst {dimension_numbers = #tpu.dot_dimension_numbers<[1], [0], [0], [1], [0, 0, 1, 1], [], []>} : vector<32x2xf32>, vector<2x2048xf32>, vector<32x2048xf32> -> vector<32x2048xf32>
    %4 = vector.broadcast %2 : vector<32x1xf32> to vector<32x2048xf32>
    %5 = arith.addf %3, %4 : vector<32x2048xf32>
    %6 = arith.mulf %5, %5 : vector<32x2048xf32>
    %cst_5 = arith.constant 0.000000e+00 : f32
    %7 = vector.broadcast %cst_5 : f32 to vector<32x2048xf32>
    %8 = arith.subf %7, %6 : vector<32x2048xf32>
    %9 = math.exp %8 : vector<32x2048xf32>
    %c0_6 = arith.constant 0 : index
    %c0_7 = arith.constant 0 : index
    %10 = vector.load %arg4[%c0_6, %c0_7] : memref<32x32xf32, #tpu.memory_space<vmem>>, vector<32x32xf32>
    %c0_8 = arith.constant 0 : index
    %c0_9 = arith.constant 0 : index
    %11 = vector.load %arg5[%c0_8, %c0_9] : memref<32x1xf32, #tpu.memory_space<vmem>>, vector<32x1xf32>
    %cst_10 = arith.constant dense<0.000000e+00> : vector<32x2048xf32>
    %12 = tpu.matmul %10, %9, %cst_10 {dimension_numbers = #tpu.dot_dimension_numbers<[1], [0], [0], [1], [0, 0, 1, 1], [], []>} : vector<32x32xf32>, vector<32x2048xf32>, vector<32x2048xf32> -> vector<32x2048xf32>
    %13 = vector.broadcast %11 : vector<32x1xf32> to vector<32x2048xf32>
    %14 = arith.addf %12, %13 : vector<32x2048xf32>
    %15 = arith.mulf %14, %14 : vector<32x2048xf32>
    %cst_11 = arith.constant 0.000000e+00 : f32
    %16 = vector.broadcast %cst_11 : f32 to vector<32x2048xf32>
    %17 = arith.subf %16, %15 : vector<32x2048xf32>
    %18 = math.exp %17 : vector<32x2048xf32>
    %c0_12 = arith.constant 0 : index
    %c0_13 = arith.constant 0 : index
    %19 = vector.load %arg6[%c0_12, %c0_13] : memref<32x32xf32, #tpu.memory_space<vmem>>, vector<32x32xf32>
    %c0_14 = arith.constant 0 : index
    %c0_15 = arith.constant 0 : index
    %20 = vector.load %arg7[%c0_14, %c0_15] : memref<32x1xf32, #tpu.memory_space<vmem>>, vector<32x1xf32>
    %cst_16 = arith.constant dense<0.000000e+00> : vector<32x2048xf32>
    %21 = tpu.matmul %19, %18, %cst_16 {dimension_numbers = #tpu.dot_dimension_numbers<[1], [0], [0], [1], [0, 0, 1, 1], [], []>} : vector<32x32xf32>, vector<32x2048xf32>, vector<32x2048xf32> -> vector<32x2048xf32>
    %22 = vector.broadcast %20 : vector<32x1xf32> to vector<32x2048xf32>
    %23 = arith.addf %21, %22 : vector<32x2048xf32>
    %24 = arith.mulf %23, %23 : vector<32x2048xf32>
    %cst_17 = arith.constant 0.000000e+00 : f32
    %25 = vector.broadcast %cst_17 : f32 to vector<32x2048xf32>
    %26 = arith.subf %25, %24 : vector<32x2048xf32>
    %27 = math.exp %26 : vector<32x2048xf32>
    %c0_18 = arith.constant 0 : index
    %c0_19 = arith.constant 0 : index
    %28 = vector.load %arg8[%c0_18, %c0_19] : memref<3x32xf32, #tpu.memory_space<vmem>>, vector<3x32xf32>
    %c0_20 = arith.constant 0 : index
    %c0_21 = arith.constant 0 : index
    %29 = vector.load %arg9[%c0_20, %c0_21] : memref<3x1xf32, #tpu.memory_space<vmem>>, vector<3x1xf32>
    %cst_22 = arith.constant dense<0.000000e+00> : vector<3x2048xf32>
    %30 = tpu.matmul %28, %27, %cst_22 {dimension_numbers = #tpu.dot_dimension_numbers<[1], [0], [0], [1], [0, 0, 1, 1], [], []>} : vector<3x32xf32>, vector<32x2048xf32>, vector<3x2048xf32> -> vector<3x2048xf32>
    %31 = vector.broadcast %29 : vector<3x1xf32> to vector<3x2048xf32>
    %32 = arith.addf %30, %31 : vector<3x2048xf32>
    %c0_23 = arith.constant 0 : index
    %c0_24 = arith.constant 0 : index
    %33 = vector.load %arg10[%c0_23, %c0_24] : memref<3x2048xf32, #tpu.memory_space<vmem>>, vector<3x2048xf32>
    tpu.vector_store %arg10[%c0_23, %c0_24], %32 {strides = array<i32>} : memref<3x2048xf32, #tpu.memory_space<vmem>>, vector<3x2048xf32>,
    return
  }
  func.func @transform_0(%arg0: i32) -> (i32, i32) {
    %c0_i32 = arith.constant 0 : i32
    %c0_i32_0 = arith.constant 0 : i32
    return %c0_i32, %arg0 : i32, i32
  }
  func.func @transform_1(%arg0: i32) -> (i32, i32) {
    %c0_i32 = arith.constant 0 : i32
    %c0_i32_0 = arith.constant 0 : i32
    %c0_i32_1 = arith.constant 0 : i32
    return %c0_i32, %c0_i32_0 : i32, i32
  }
  func.func @transform_2(%arg0: i32) -> (i32, i32) {
    %c0_i32 = arith.constant 0 : i32
    %c0_i32_0 = arith.constant 0 : i32
    %c0_i32_1 = arith.constant 0 : i32
    return %c0_i32, %c0_i32_0 : i32, i32
  }
  func.func @transform_3(%arg0: i32) -> (i32, i32) {
    %c0_i32 = arith.constant 0 : i32
    %c0_i32_0 = arith.constant 0 : i32
    %c0_i32_1 = arith.constant 0 : i32
    return %c0_i32, %c0_i32_0 : i32, i32
  }
  func.func @transform_4(%arg0: i32) -> (i32, i32) {
    %c0_i32 = arith.constant 0 : i32
    %c0_i32_0 = arith.constant 0 : i32
    %c0_i32_1 = arith.constant 0 : i32
    return %c0_i32, %c0_i32_0 : i32, i32
  }
  func.func @transform_5(%arg0: i32) -> (i32, i32) {
    %c0_i32 = arith.constant 0 : i32
    %c0_i32_0 = arith.constant 0 : i32
    %c0_i32_1 = arith.constant 0 : i32
    return %c0_i32, %c0_i32_0 : i32, i32
  }
  func.func @transform_6(%arg0: i32) -> (i32, i32) {
    %c0_i32 = arith.constant 0 : i32
    %c0_i32_0 = arith.constant 0 : i32
    %c0_i32_1 = arith.constant 0 : i32
    return %c0_i32, %c0_i32_0 : i32, i32
  }
  func.func @transform_7(%arg0: i32) -> (i32, i32) {
    %c0_i32 = arith.constant 0 : i32
    %c0_i32_0 = arith.constant 0 : i32
    %c0_i32_1 = arith.constant 0 : i32
    return %c0_i32, %c0_i32_0 : i32, i32
  }
  func.func @transform_8(%arg0: i32) -> (i32, i32) {
    %c0_i32 = arith.constant 0 : i32
    %c0_i32_0 = arith.constant 0 : i32
    %c0_i32_1 = arith.constant 0 : i32
    return %c0_i32, %c0_i32_0 : i32, i32
  }
  func.func @transform_9(%arg0: i32) -> (i32, i32) {
    %c0_i32 = arith.constant 0 : i32
    %c0_i32_0 = arith.constant 0 : i32
    return %c0_i32, %arg0 : i32, i32
  }
}

</mosaic_0001>

<llo_original>
// kernel: tpu_custom_call.1
$region0: #{tpu_custom_call.1}
  #allocation0 [shape = 'u32[]', space=smem, size = 0x4, offset = 0x4, fixed_abs, tag = 'smem constant byte address 0x4 - core index']
  #allocation1 [shape = 'u32[144,128]{1,0:T(1,128)}', space=vmem, size = 0x12000, scoped, tag = 'internal scratch']
  %s0 = inlined_call_operand.vmem [shape: f32[2,4096], index: 0, kind: input, shape index: {}]
  %s1 = inlined_call_operand.vmem [shape: f32[32,2], index: 1, kind: input, shape index: {}]
  %s2 = inlined_call_operand.vmem [shape: f32[32,1], index: 2, kind: input, shape index: {}]
  %s3 = inlined_call_operand.vmem [shape: f32[32,32], index: 3, kind: input, shape index: {}]
  %s4 = inlined_call_operand.vmem [shape: f32[32,1], index: 4, kind: input, shape index: {}]
  %s5 = inlined_call_operand.vmem [shape: f32[32,32], index: 5, kind: input, shape index: {}]
  %s6 = inlined_call_operand.vmem [shape: f32[32,1], index: 6, kind: input, shape index: {}]
  %s7 = inlined_call_operand.vmem [shape: f32[3,32], index: 7, kind: input, shape index: {}]
  %s8 = inlined_call_operand.vmem [shape: f32[3,1], index: 8, kind: input, shape index: {}]
  %s9 = inlined_call_operand.hbm [shape: f32[3,4096], index: 9, kind: output, shape index: {}]
  %s10 = sld [smem:[#allocation0]]
  $region69: #{tpu_custom_call.1} parent=0
    _
  %s12 = ssub.s32 1, %s10
  %s13 = scalar_select 0, %s12, %s10
  $region1: #{tpu_custom_call.1} parent=0
    #allocation2 [shape = 'u8[65536]{0}', space=vmem, size = 0x10000, scoped, tag = 'output window, operand 0']
    #allocation3 [shape = 's32[2]{0}', space=sflag, size = 0x8, scoped, tag = 'scoped memory for tpu_custom_call.1']
    %14 = vsyncpa [#allocation3], 0
    %s15 = scalar_lea.sflag [#allocation3], 1
    %16 = vsyncpa %s15, 0
    loop: start=0, step=1, limit=4
    $region2: #{tpu_custom_call.1} parent=1 // loop_pre_header
      _
    $region3: #{tpu_custom_call.1} parent=1 // loop_header
      %s18 = sphi 0, %s22
      %p19 = scmp.ge.s32.totalorder %s18, 4
      %s28 = sphi 0, %s30
      %s31 = sphi 0, %s28
      %s32 = sphi 0, %s31
      %s48 = sphi 0, %s32
      %s52 = sphi 0, %s52
      %s54 = sphi 0, %s52
      %s55 = sphi 0, %s54
      %s69 = sphi 0, %s55
      %s73 = sphi 0, %s73
      %s75 = sphi 0, %s73
      %s76 = sphi 0, %s75
      %s90 = sphi 0, %s76
      %s94 = sphi 0, %s94
      %s96 = sphi 0, %s94
      %s97 = sphi 0, %s96
      %s111 = sphi 0, %s97
      %s115 = sphi 0, %s115
      %s117 = sphi 0, %s115
      %s118 = sphi 0, %s117
      %s132 = sphi 0, %s118
      %s136 = sphi 0, %s136
      %s138 = sphi 0, %s136
      %s139 = sphi 0, %s138
      %s153 = sphi 0, %s139
      %s157 = sphi 0, %s157
      %s159 = sphi 0, %s157
      %s160 = sphi 0, %s159
      %s174 = sphi 0, %s160
      %s178 = sphi 0, %s178
      %s180 = sphi 0, %s178
      %s181 = sphi 0, %s180
      %s195 = sphi 0, %s181
      %s199 = sphi 0, %s199
      %s201 = sphi 0, %s199
      %s202 = sphi 0, %s201
      %s216 = sphi 0, %s202
      %s222 = sphi 0, %s224
      %s225 = sphi 0, %s222
      %s226 = sphi 0, %s225
      %s242 = sphi 0, %s226
    $region4: #{tpu_custom_call.1} parent=1 // loop_header_branch
      %21 = sbr.rel (%p19) target = $region8
    $region5: #{tpu_custom_call.1} parent=1 // loop_body
      %s23 = ssub.s32 %s18, 1
      %s24 = ssub.s32 %s18, 2
      %s25 = sadd.s32 %s18, 1
      %s26 = ssub.s32 %s18, %s25
      %p27 = scmp.eq.s32.totalorder %s26, 0
      %s29 = sadd.s32 %s28, 1
      %s30 = scalar_select %p27, %s28, %s29
      %p33 = pneg %p27
      %p34 = scmp.eq.s32.totalorder %s18, 1
      %p35 = por %p33, %p34
      %p36 = scmp.ne.s32.totalorder %s28, %s31
      %p37 = scmp.eq.s32.totalorder %s18, 0
      %p38 = por %p36, %p37
      %p39 = scmp.ne.s32.totalorder %s28, %s31
      %p40 = scmp.eq.s32.totalorder %s23, 1
      %p41 = por %p39, %p40
      %p42 = scmp.ne.s32.totalorder %s31, %s32
      %p43 = scmp.eq.s32.totalorder %s23, 0
      %p44 = por %p42, %p43
      %p45 = scmp.ne.s32.totalorder %s31, %s32
      %p46 = scmp.eq.s32.totalorder %s24, 1
      %p47 = por %p45, %p46
      %p49 = scmp.ne.s32.totalorder %s32, %s48
      %p50 = scmp.eq.s32.totalorder %s24, 0
      %p51 = por %p49, %p50
      %s53 = sadd.s32 %s52, 1
      %p56 = scmp.eq.s32.totalorder %s18, 1
      %p57 = scmp.ne.s32.totalorder %s52, %s54
      %p58 = scmp.eq.s32.totalorder %s18, 0
      %p59 = por %p57, %p58
      %p60 = scmp.ne.s32.totalorder %s52, %s54
      %p61 = scmp.eq.s32.totalorder %s23, 1
      %p62 = por %p60, %p61
      %p63 = scmp.ne.s32.totalorder %s54, %s55
      %p64 = scmp.eq.s32.totalorder %s23, 0
      %p65 = por %p63, %p64
      %p66 = scmp.ne.s32.totalorder %s54, %s55
      %p67 = scmp.eq.s32.totalorder %s24, 1
      %p68 = por %p66, %p67
      %p70 = scmp.ne.s32.totalorder %s55, %s69
      %p71 = scmp.eq.s32.totalorder %s24, 0
      %p72 = por %p70, %p71
      %s74 = sadd.s32 %s73, 1
      %p77 = scmp.eq.s32.totalorder %s18, 1
      %p78 = scmp.ne.s32.totalorder %s73, %s75
      %p79 = scmp.eq.s32.totalorder %s18, 0
      %p80 = por %p78, %p79
      %p81 = scmp.ne.s32.totalorder %s73, %s75
      %p82 = scmp.eq.s32.totalorder %s23, 1
      %p83 = por %p81, %p82
      %p84 = scmp.ne.s32.totalorder %s75, %s76
      %p85 = scmp.eq.s32.totalorder %s23, 0
      %p86 = por %p84, %p85
      %p87 = scmp.ne.s32.totalorder %s75, %s76
      %p88 = scmp.eq.s32.totalorder %s24, 1
      %p89 = por %p87, %p88
      %p91 = scmp.ne.s32.totalorder %s76, %s90
      %p92 = scmp.eq.s32.totalorder %s24, 0
      %p93 = por %p91, %p92
      %s95 = sadd.s32 %s94, 1
      %p98 = scmp.eq.s32.totalorder %s18, 1
      %p99 = scmp.ne.s32.totalorder %s94, %s96
      %p100 = scmp.eq.s32.totalorder %s18, 0
      %p101 = por %p99, %p100
      %p102 = scmp.ne.s32.totalorder %s94, %s96
      %p103 = scmp.eq.s32.totalorder %s23, 1
      %p104 = por %p102, %p103
      %p105 = scmp.ne.s32.totalorder %s96, %s97
      %p106 = scmp.eq.s32.totalorder %s23, 0
      %p107 = por %p105, %p106
      %p108 = scmp.ne.s32.totalorder %s96, %s97
      %p109 = scmp.eq.s32.totalorder %s24, 1
      %p110 = por %p108, %p109
      %p112 = scmp.ne.s32.totalorder %s97, %s111
      %p113 = scmp.eq.s32.totalorder %s24, 0
      %p114 = por %p112, %p113
      %s116 = sadd.s32 %s115, 1
      %p119 = scmp.eq.s32.totalorder %s18, 1
      %p120 = scmp.ne.s32.totalorder %s115, %s117
      %p121 = scmp.eq.s32.totalorder %s18, 0
      %p122 = por %p120, %p121
      %p123 = scmp.ne.s32.totalorder %s115, %s117
      %p124 = scmp.eq.s32.totalorder %s23, 1
      %p125 = por %p123, %p124
      %p126 = scmp.ne.s32.totalorder %s117, %s118
      %p127 = scmp.eq.s32.totalorder %s23, 0
      %p128 = por %p126, %p127
      %p129 = scmp.ne.s32.totalorder %s117, %s118
      %p130 = scmp.eq.s32.totalorder %s24, 1
      %p131 = por %p129, %p130
      %p133 = scmp.ne.s32.totalorder %s118, %s132
      %p134 = scmp.eq.s32.totalorder %s24, 0
      %p135 = por %p133, %p134
      %s137 = sadd.s32 %s136, 1
      %p140 = scmp.eq.s32.totalorder %s18, 1
      %p141 = scmp.ne.s32.totalorder %s136, %s138
      %p142 = scmp.eq.s32.totalorder %s18, 0
      %p143 = por %p141, %p142
      %p144 = scmp.ne.s32.totalorder %s136, %s138
      %p145 = scmp.eq.s32.totalorder %s23, 1
      %p146 = por %p144, %p145
      %p147 = scmp.ne.s32.totalorder %s138, %s139
      %p148 = scmp.eq.s32.totalorder %s23, 0
      %p149 = por %p147, %p148
      %p150 = scmp.ne.s32.totalorder %s138, %s139
      %p151 = scmp.eq.s32.totalorder %s24, 1
      %p152 = por %p150, %p151
      %p154 = scmp.ne.s32.totalorder %s139, %s153
      %p155 = scmp.eq.s32.totalorder %s24, 0
      %p156 = por %p154, %p155
      %s158 = sadd.s32 %s157, 1
      %p161 = scmp.eq.s32.totalorder %s18, 1
      %p162 = scmp.ne.s32.totalorder %s157, %s159
      %p163 = scmp.eq.s32.totalorder %s18, 0
      %p164 = por %p162, %p163
      %p165 = scmp.ne.s32.totalorder %s157, %s159
      %p166 = scmp.eq.s32.totalorder %s23, 1
      %p167 = por %p165, %p166
      %p168 = scmp.ne.s32.totalorder %s159, %s160
      %p169 = scmp.eq.s32.totalorder %s23, 0
      %p170 = por %p168, %p169
      %p171 = scmp.ne.s32.totalorder %s159, %s160
      %p172 = scmp.eq.s32.totalorder %s24, 1
      %p173 = por %p171, %p172
      %p175 = scmp.ne.s32.totalorder %s160, %s174
      %p176 = scmp.eq.s32.totalorder %s24, 0
      %p177 = por %p175, %p176
      %s179 = sadd.s32 %s178, 1
      %p182 = scmp.eq.s32.totalorder %s18, 1
      %p183 = scmp.ne.s32.totalorder %s178, %s180
      %p184 = scmp.eq.s32.totalorder %s18, 0
      %p185 = por %p183, %p184
      %p186 = scmp.ne.s32.totalorder %s178, %s180
      %p187 = scmp.eq.s32.totalorder %s23, 1
      %p188 = por %p186, %p187
      %p189 = scmp.ne.s32.totalorder %s180, %s181
      %p190 = scmp.eq.s32.totalorder %s23, 0
      %p191 = por %p189, %p190
      %p192 = scmp.ne.s32.totalorder %s180, %s181
      %p193 = scmp.eq.s32.totalorder %s24, 1
      %p194 = por %p192, %p193
      %p196 = scmp.ne.s32.totalorder %s181, %s195
      %p197 = scmp.eq.s32.totalorder %s24, 0
      %p198 = por %p196, %p197
      %s200 = sadd.s32 %s199, 1
      %p203 = scmp.eq.s32.totalorder %s18, 1
      %p204 = scmp.ne.s32.totalorder %s199, %s201
      %p205 = scmp.eq.s32.totalorder %s18, 0
      %p206 = por %p204, %p205
      %p207 = scmp.ne.s32.totalorder %s199, %s201
      %p208 = scmp.eq.s32.totalorder %s23, 1
      %p209 = por %p207, %p208
      %p210 = scmp.ne.s32.totalorder %s201, %s202
      %p211 = scmp.eq.s32.totalorder %s23, 0
      %p212 = por %p210, %p211
      %p213 = scmp.ne.s32.totalorder %s201, %s202
      %p214 = scmp.eq.s32.totalorder %s24, 1
      %p215 = por %p213, %p214
      %p217 = scmp.ne.s32.totalorder %s202, %s216
      %p218 = scmp.eq.s32.totalorder %s24, 0
      %p219 = por %p217, %p218
      %s220 = ssub.s32 %s18, %s25
      %p221 = scmp.eq.s32.totalorder %s220, 0
      %s223 = sadd.s32 %s222, 1
      %s224 = scalar_select %p221, %s222, %s223
      %p227 = pneg %p221
      %p228 = scmp.eq.s32.totalorder %s18, 1
      %p229 = por %p227, %p228
      %p230 = scmp.ne.s32.totalorder %s222, %s225
      %p231 = scmp.eq.s32.totalorder %s18, 0
      %p232 = por %p230, %p231
      %p233 = scmp.ne.s32.totalorder %s222, %s225
      %p234 = scmp.eq.s32.totalorder %s23, 1
      %p235 = por %p233, %p234
      %p236 = scmp.ne.s32.totalorder %s225, %s226
      %p237 = scmp.eq.s32.totalorder %s23, 0
      %p238 = por %p236, %p237
      %p239 = scmp.ne.s32.totalorder %s225, %s226
      %p240 = scmp.eq.s32.totalorder %s24, 1
      %p241 = por %p239, %p240
      %p243 = scmp.ne.s32.totalorder %s226, %s242
      %p244 = scmp.eq.s32.totalorder %s24, 0
      %p245 = por %p243, %p244
      %p246 = scmp.le.s32.totalorder 1, %s18
      %p247 = scmp.lt.s32.totalorder %s18, 3
      %p248 = pnand %p246, %p247
      %p249 = pneg %p248
      // Predicated region
      $region9: #{tpu_custom_call.1} parent=5 // pred_check
        _
      $region10: #{tpu_custom_call.1} parent=5 // pred_check_branch
        %251 = sbr.rel (%p248) target = $region12
      $region11: #{tpu_custom_call.1} parent=5 // pred_region
        %s252 = ssub.s32 %s18, 1
        // Predicated region
        $region13: #{tpu_custom_call.1} parent=11 // pred_check
          %p253 = pneg %p65
        $region14: #{tpu_custom_call.1} parent=11 // pred_check_branch
          %255 = sbr.rel (%p253) target = $region16
        $region15: #{tpu_custom_call.1} parent=11 // pred_region
          _
        $region16: #{tpu_custom_call.1} parent=11 // pred_fallthru
          _
        // Predicated region
        $region17: #{tpu_custom_call.1} parent=11 // pred_check
          %p256 = pneg %p86
        $region18: #{tpu_custom_call.1} parent=11 // pred_check_branch
          %258 = sbr.rel (%p256) target = $region20
        $region19: #{tpu_custom_call.1} parent=11 // pred_region
          _
        $region20: #{tpu_custom_call.1} parent=11 // pred_fallthru
          _
        // Predicated region
        $region21: #{tpu_custom_call.1} parent=11 // pred_check
          %p259 = pneg %p107
        $region22: #{tpu_custom_call.1} parent=11 // pred_check_branch
          %261 = sbr.rel (%p259) target = $region24
        $region23: #{tpu_custom_call.1} parent=11 // pred_region
          _
        $region24: #{tpu_custom_call.1} parent=11 // pred_fallthru
          _
        // Predicated region
        $region25: #{tpu_custom_call.1} parent=11 // pred_check
          %p262 = pneg %p128
        $region26: #{tpu_custom_call.1} parent=11 // pred_check_branch
          %264 = sbr.rel (%p262) target = $region28
        $region27: #{tpu_custom_call.1} parent=11 // pred_region
          _
        $region28: #{tpu_custom_call.1} parent=11 // pred_fallthru
          _
        // Predicated region
        $region29: #{tpu_custom_call.1} parent=11 // pred_check
          %p265 = pneg %p149
        $region30: #{tpu_custom_call.1} parent=11 // pred_check_branch
          %267 = sbr.rel (%p265) target = $region32
        $region31: #{tpu_custom_call.1} parent=11 // pred_region
          _
        $region32: #{tpu_custom_call.1} parent=11 // pred_fallthru
          _
        // Predicated region
        $region33: #{tpu_custom_call.1} parent=11 // pred_check
          %p268 = pneg %p170
        $region34: #{tpu_custom_call.1} parent=11 // pred_check_branch
          %270 = sbr.rel (%p268) target = $region36
        $region35: #{tpu_custom_call.1} parent=11 // pred_region
          _
        $region36: #{tpu_custom_call.1} parent=11 // pred_fallthru
          _
        // Predicated region
        $region37: #{tpu_custom_call.1} parent=11 // pred_check
          %p271 = pneg %p191
        $region38: #{tpu_custom_call.1} parent=11 // pred_check_branch
          %273 = sbr.rel (%p271) target = $region40
        $region39: #{tpu_custom_call.1} parent=11 // pred_region
          _
        $region40: #{tpu_custom_call.1} parent=11 // pred_fallthru
          _
        // Predicated region
        $region41: #{tpu_custom_call.1} parent=11 // pred_check
          %p274 = pneg %p212
        $region42: #{tpu_custom_call.1} parent=11 // pred_check_branch
          %276 = sbr.rel (%p274) target = $region44
        $region43: #{tpu_custom_call.1} parent=11 // pred_region
          _
        $region44: #{tpu_custom_call.1} parent=11 // pred_fallthru
          _
      $region12: #{tpu_custom_call.1} parent=5 // pred_fallthru
        _
      %p277 = scmp.lt.s32.totalorder %s18, 2
      // Predicated region
      $region45: #{tpu_custom_call.1} parent=5 // pred_check
        %p278 = pneg %p277
      $region46: #{tpu_custom_call.1} parent=5 // pred_check_branch
        %280 = sbr.rel (%p278) target = $region48
      $region47: #{tpu_custom_call.1} parent=5 // pred_region
        // Predicated region
        $region49: #{tpu_custom_call.1} parent=47 // pred_check
          %p281 = pneg %p38
        $region50: #{tpu_custom_call.1} parent=47 // pred_check_branch
          %283 = sbr.rel (%p281) target = $region52
        $region51: #{tpu_custom_call.1} parent=47 // pred_region
          %s284 = smul.u32 16, %s18
          %p285 = scmp.lt.s32.totalorder %s284, 31
          %s286 = scalar_select %p285, %s284, 31
          %s287 = smul.addr %s286, 2
          %s288 = scalar_lea.vmem %s0, %s287
          %s289 = smul.u32 16, %s18
        $region52: #{tpu_custom_call.1} parent=47 // pred_fallthru
          _
      $region48: #{tpu_custom_call.1} parent=5 // pred_fallthru
        _
      %p290 = scmp.le.s32.totalorder 1, %s18
      %p291 = scmp.lt.s32.totalorder %s18, 3
      %p292 = pnand %p290, %p291
      %p293 = pneg %p292
      // Predicated region
      $region53: #{tpu_custom_call.1} parent=5 // pred_check
        _
      $region54: #{tpu_custom_call.1} parent=5 // pred_check_branch
        %295 = sbr.rel (%p292) target = $region56
      $region55: #{tpu_custom_call.1} parent=5 // pred_region
        %s296 = ssub.s32 %s18, 1
        %s297 = smul.u32 16, %s23
        %p298 = scmp.lt.s32.totalorder %s297, 31
        %s299 = scalar_select %p298, %s297, 31
        %s300 = smul.addr %s299, 2
        %s301 = scalar_lea.vmem %s0, %s300
        %p302 = pneg %p44
        %p303 = pneg %p41
        %p304 = pneg %p65
        %p305 = pneg %p62
        %p306 = pneg %p86
        %p307 = pneg %p83
        %p308 = pneg %p107
        %p309 = pneg %p104
        %p310 = pneg %p128
        %p311 = pneg %p125
        %p312 = pneg %p149
        %p313 = pneg %p146
        %p314 = pneg %p170
        %p315 = pneg %p167
        %p316 = pneg %p191
        %p317 = pneg %p188
        %p318 = pneg %p212
        %p319 = pneg %p209
        %p320 = pneg %p238
        %p321 = pneg %p235
        %s322 = sand.u32 %s225, 1
        %s323 = scalar_lea.sflag [#allocation3], %s322
        %s324 = sand.u32 %s225, 1
        %s325 = smul.addr %s324, 64
        %s326 = scalar_lea.vmem [#allocation2], %s325
        %s327 = smul.u32 16, %s23
        %p328 = scmp.lt.s32.totalorder %s327, 31
        %s329 = scalar_select %p328, %s327, 31
        %s330 = smul.addr %s329, 2
        %s331 = scalar_lea.vmem %s0, %s330
        %s332 = smul.u32 16, %s23
        %s333 = smul.u32 16, %s23
        %v334 = vld [vmem:[%s331] sm:$0xff]
        %v335 = vld [vmem:[%s331 + $0x8] sm:$0xff]
        %v336 = vld [vmem:[%s331 + $0x10] sm:$0xff]
        %v337 = vld [vmem:[%s331 + $0x18] sm:$0xff]
        %v338 = vld [vmem:[%s1] sm:$0xff]
        %v339 = vld [vmem:[%s1 + $0x8] sm:$0xff]
        %v340 = vld [vmem:[%s1 + $0x10] sm:$0xff]
        %v341 = vld [vmem:[%s1 + $0x18] sm:$0xff]
        %v342 = vld [vmem:[%s2] sm:$0xff]
        %v343 = vld [vmem:[%s2 + $0x8] sm:$0xff]
        %v344 = vld [vmem:[%s2 + $0x10] sm:$0xff]
        %v345 = vld [vmem:[%s2 + $0x18] sm:$0xff]
        %347 = vset.pattern.permute.xlu0 0
        %348 = vperm.xlu0 %347, %v342
        %v349 = vpop.permute.xlu0 %348
        %352 = vset.pattern.permute.xlu0 0
        %353 = vperm.xlu0 %352, %v343
        %v354 = vpop.permute.xlu0 %353
        %357 = vset.pattern.permute.xlu0 0
        %358 = vperm.xlu0 %357, %v344
        %v359 = vpop.permute.xlu0 %358
        %362 = vset.pattern.permute.xlu0 0
        %363 = vperm.xlu0 %362, %v345
        %v364 = vpop.permute.xlu0 %363
        %v370 = vcombine.high %v334, %v334
        %v372 = vunpack.c.l.s4 1983009808
        %v373 = vunpack.c.0.s8 %v372
        %v374 = vlaneseq
        %v375 = vshrl.u32 %v374, 7
        %v376 = vsub.s32 %v373, %v375
        %v377 = vrot.slane %v334, %v376
        %v379 = vunpack.c.l.s4 1983009808
        %v380 = vunpack.c.0.s8 %v379
        %v381 = vlaneseq
        %v382 = vshrl.u32 %v381, 7
        %v383 = vsub.s32 %v380, %v382
        %v384 = vrot.slane %v370, %v383
        %v385 = vcombine.high %v377, %v377
        %v386 = vcombine.high %v384, %v384
        %v387 = vcombine.high %v335, %v335
        %v389 = vunpack.c.l.s4 1983009808
        %v390 = vunpack.c.0.s8 %v389
        %v391 = vlaneseq
        %v392 = vshrl.u32 %v391, 7
        %v393 = vsub.s32 %v390, %v392
        %v394 = vrot.slane %v335, %v393
        %v396 = vunpack.c.l.s4 1983009808
        %v397 = vunpack.c.0.s8 %v396
        %v398 = vlaneseq
        %v399 = vshrl.u32 %v398, 7
        %v400 = vsub.s32 %v397, %v399
        %v401 = vrot.slane %v387, %v400
        %v402 = vcombine.high %v394, %v394
        %v403 = vcombine.high %v401, %v401
        %v404 = vcombine.high %v336, %v336
        %v406 = vunpack.c.l.s4 1983009808
        %v407 = vunpack.c.0.s8 %v406
        %v408 = vlaneseq
        %v409 = vshrl.u32 %v408, 7
        %v410 = vsub.s32 %v407, %v409
        %v411 = vrot.slane %v336, %v410
        %v413 = vunpack.c.l.s4 1983009808
        %v414 = vunpack.c.0.s8 %v413
        %v415 = vlaneseq
        %v416 = vshrl.u32 %v415, 7
        %v417 = vsub.s32 %v414, %v416
        %v418 = vrot.slane %v404, %v417
        %v419 = vcombine.high %v411, %v411
        %v420 = vcombine.high %v418, %v418
        %v421 = vcombine.high %v337, %v337
        %v423 = vunpack.c.l.s4 1983009808
        %v424 = vunpack.c.0.s8 %v423
        %v425 = vlaneseq
        %v426 = vshrl.u32 %v425, 7
        %v427 = vsub.s32 %v424, %v426
        %v428 = vrot.slane %v337, %v427
        %v430 = vunpack.c.l.s4 1983009808
        %v431 = vunpack.c.0.s8 %v430
        %v432 = vlaneseq
        %v433 = vshrl.u32 %v432, 7
        %v434 = vsub.s32 %v431, %v433
        %v435 = vrot.slane %v421, %v434
        %v436 = vcombine.high %v428, %v428
        %v437 = vcombine.high %v435, %v435
        %vm438 = vcmask 15360
        %v440 = vsel %vm438, %v338, 0
        %v443 = vsel %vm438, %v339, 0
        %v446 = vsel %vm438, %v340, 0
        %v449 = vsel %vm438, %v341, 0
        %vm451 = vcmask 1041408
        %v452 = vsel %vm451, %v377, 0
        %v454 = vsel %vm451, %v385, 0
        %v456 = vsel %vm451, %v384, 0
        %v458 = vsel %vm451, %v386, 0
        %v460 = vsel %vm451, %v394, 0
        %v462 = vsel %vm451, %v402, 0
        %v464 = vsel %vm451, %v401, 0
        %v466 = vsel %vm451, %v403, 0
        %v468 = vsel %vm451, %v411, 0
        %v470 = vsel %vm451, %v419, 0
        %v472 = vsel %vm451, %v418, 0
        %v474 = vsel %vm451, %v420, 0
        %v476 = vsel %vm451, %v428, 0
        %v478 = vsel %vm451, %v436, 0
        %v480 = vsel %vm451, %v435, 0
        %v482 = vsel %vm451, %v437, 0
        %484 = vmatprep.subr.mxu0 0.0
        %485 = vmatpush1.msra.mxu0 0.0
        %486 = vmatprep.subr.mxu0 0.0
        %487 = vmatpush1.msra.mxu0 0.0
        %488 = vmatprep.subr.mxu0 0.0
        %489 = vmatpush1.msra.mxu0 0.0
        %490 = vmatprep.subr.mxu0 0.0
        %491 = vmatpush1.msra.mxu0 0.0
        %492 = vmatprep.subr.mxu0 0.0
        %493 = vmatpush1.msra.mxu0 0.0
        %494 = vmatprep.subr.mxu0 0.0
        %495 = vmatpush1.msra.mxu0 0.0
        %496 = vmatprep.subr.mxu0 0.0
        %497 = vmatpush1.msra.mxu0 0.0
        %498 = vmatprep.subr.mxu0 0.0
        %499 = vmatpush1.msra.mxu0 0.0
        %500 = vmatprep.subr.mxu0 0.0
        %501 = vmatpush1.msra.mxu0 0.0
        %502 = vmatprep.subr.mxu0 0.0
        %503 = vmatpush1.msra.mxu0 0.0
        %504 = vmatprep.subr.mxu0 0.0
        %505 = vmatpush1.msra.mxu0 0.0
        %506 = vmatprep.subr.mxu0 0.0
        %507 = vmatpush1.msra.mxu0 0.0
        %508 = vmatprep.subr.mxu0 0.0
        %509 = vmatpush1.msra.mxu0 0.0
        %510 = vmatprep.subr.mxu0 0.0
        %511 = vmatpush1.msra.mxu0 0.0
        %512 = vmatprep.subr.mxu0 0.0
        %513 = vmatpush1.msra.mxu0 0.0
        %514 = vmatprep.subr.mxu0 %v454
        %515 = vmatpush1.msra.mxu0 %v452
        %516 = vmatprep.subr.mxu0 0.0
        %517 = vmatpush2.msra.mxu0 0.0
        %518 = vmatprep.subr.mxu0 0.0
        %519 = vmatpush2.msra.mxu0 0.0
        %520 = vmatprep.subr.mxu0 0.0
        %521 = vmatpush2.msra.mxu0 0.0
        %522 = vmatprep.subr.mxu0 0.0
        %523 = vmatpush2.msra.mxu0 0.0
        %524 = vmatprep.subr.mxu0 0.0
        %525 = vmatpush2.msra.mxu0 0.0
        %526 = vmatprep.subr.mxu0 0.0
        %527 = vmatpush2.msra.mxu0 0.0
        %528 = vmatprep.subr.mxu0 0.0
        %529 = vmatpush2.msra.mxu0 0.0
        %530 = vmatprep.subr.mxu0 0.0
        %531 = vmatpush2.msra.mxu0 0.0
        %532 = vmatprep.subr.mxu0 0.0
        %533 = vmatpush2.msra.mxu0 0.0
        %534 = vmatprep.subr.mxu0 0.0
        %535 = vmatpush2.msra.mxu0 0.0
        %536 = vmatprep.subr.mxu0 0.0
        %537 = vmatpush2.msra.mxu0 0.0
        %538 = vmatprep.subr.mxu0 0.0
        %539 = vmatpush2.msra.mxu0 0.0
        %540 = vmatprep.subr.mxu0 0.0
        %541 = vmatpush2.msra.mxu0 0.0
        %542 = vmatprep.subr.mxu0 0.0
        %543 = vmatpush2.msra.mxu0 0.0
        %544 = vmatprep.subr.mxu0 0.0
        %545 = vmatpush2.msra.mxu0 0.0
        %546 = vmatprep.subr.mxu0 0.0
        %547 = vmatpush2.msra.mxu0 0.0
        %548 = vmatprep.mubr.f32.mxu0 0.0
        %549 = vmatmul.mubr.f32.gmra.mxu0 %v440
        %v550 = vpop.f32.mrf.mxu0
        %v551 = vadd.f32 %v349, %v550
        %v552 = vpop.f32.mrf.mxu0
        %v553 = vadd.f32 %v349, %v552
        %554 = vmatprep.mubr.f32.mxu0 0.0
        %555 = vmatmul.mubr.f32.gmra.mxu0 %v443
        %v556 = vpop.f32.mrf.mxu0
        %v557 = vadd.f32 %v354, %v556
        %v558 = vpop.f32.mrf.mxu0
        %v559 = vadd.f32 %v354, %v558
        %560 = vmatprep.mubr.f32.mxu0 0.0
        %561 = vmatmul.mubr.f32.gmra.mxu0 %v446
        %v562 = vpop.f32.mrf.mxu0
        %v563 = vadd.f32 %v359, %v562
        %v564 = vpop.f32.mrf.mxu0
        %v565 = vadd.f32 %v359, %v564
        %566 = vmatprep.mubr.f32.mxu0 0.0
        %567 = vmatmul.mubr.f32.gmra.mxu0 %v449
        %v568 = vpop.f32.mrf.mxu0
        %v569 = vadd.f32 %v364, %v568
        %v570 = vpop.f32.mrf.mxu0
        %v571 = vadd.f32 %v364, %v570
        %572 = vdwg.mxu0
        %573 = vmatprep.subr.mxu0 0.0
        %574 = vmatpush1.msra.mxu0 0.0
        %575 = vmatprep.subr.mxu0 0.0
        %576 = vmatpush1.msra.mxu0 0.0
        %577 = vmatprep.subr.mxu0 0.0
        %578 = vmatpush1.msra.mxu0 0.0
        %579 = vmatprep.subr.mxu0 0.0
        %580 = vmatpush1.msra.mxu0 0.0
        %581 = vmatprep.subr.mxu0 0.0
        %582 = vmatpush1.msra.mxu0 0.0
        %583 = vmatprep.subr.mxu0 0.0
        %584 = vmatpush1.msra.mxu0 0.0
        %585 = vmatprep.subr.mxu0 0.0
        %586 = vmatpush1.msra.mxu0 0.0
        %587 = vmatprep.subr.mxu0 0.0
        %588 = vmatpush1.msra.mxu0 0.0
        %589 = vmatprep.subr.mxu0 0.0
        %590 = vmatpush1.msra.mxu0 0.0
        %591 = vmatprep.subr.mxu0 0.0
        %592 = vmatpush1.msra.mxu0 0.0
        %593 = vmatprep.subr.mxu0 0.0
        %594 = vmatpush1.msra.mxu0 0.0
        %595 = vmatprep.subr.mxu0 0.0
        %596 = vmatpush1.msra.mxu0 0.0
        %597 = vmatprep.subr.mxu0 0.0
        %598 = vmatpush1.msra.mxu0 0.0
        %599 = vmatprep.subr.mxu0 0.0
        %600 = vmatpush1.msra.mxu0 0.0
        %601 = vmatprep.subr.mxu0 0.0
        %602 = vmatpush1.msra.mxu0 0.0
        %603 = vmatprep.subr.mxu0 %v458
        %604 = vmatpush1.msra.mxu0 %v456
        %605 = vmatprep.subr.mxu0 0.0
        %606 = vmatpush2.msra.mxu0 0.0
        %607 = vmatprep.subr.mxu0 0.0
        %608 = vmatpush2.msra.mxu0 0.0
        %609 = vmatprep.subr.mxu0 0.0
        %610 = vmatpush2.msra.mxu0 0.0
        %611 = vmatprep.subr.mxu0 0.0
        %612 = vmatpush2.msra.mxu0 0.0
        %613 = vmatprep.subr.mxu0 0.0
        %614 = vmatpush2.msra.mxu0 0.0
        %615 = vmatprep.subr.mxu0 0.0
        %616 = vmatpush2.msra.mxu0 0.0
        %617 = vmatprep.subr.mxu0 0.0
        %618 = vmatpush2.msra.mxu0 0.0
        %619 = vmatprep.subr.mxu0 0.0
        %620 = vmatpush2.msra.mxu0 0.0
        %621 = vmatprep.subr.mxu0 0.0
        %622 = vmatpush2.msra.mxu0 0.0
        %623 = vmatprep.subr.mxu0 0.0
        %624 = vmatpush2.msra.mxu0 0.0
        %625 = vmatprep.subr.mxu0 0.0
        %626 = vmatpush2.msra.mxu0 0.0
        %627 = vmatprep.subr.mxu0 0.0
        %628 = vmatpush2.msra.mxu0 0.0
        %629 = vmatprep.subr.mxu0 0.0
        %630 = vmatpush2.msra.mxu0 0.0
        %631 = vmatprep.subr.mxu0 0.0
        %632 = vmatpush2.msra.mxu0 0.0
        %633 = vmatprep.subr.mxu0 0.0
        %634 = vmatpush2.msra.mxu0 0.0
        %635 = vmatprep.subr.mxu0 0.0
        %636 = vmatpush2.msra.mxu0 0.0
        %637 = vmatprep.mubr.f32.mxu0 0.0
        %638 = vmatmul.mubr.f32.gmra.mxu0 %v440
        %v639 = vpop.f32.mrf.mxu0
        %v640 = vadd.f32 %v349, %v639
        %v641 = vpop.f32.mrf.mxu0
        %v642 = vadd.f32 %v349, %v641
        %643 = vmatprep.mubr.f32.mxu0 0.0
        %644 = vmatmul.mubr.f32.gmra.mxu0 %v443
        %v645 = vpop.f32.mrf.mxu0
        %v646 = vadd.f32 %v354, %v645
        %v647 = vpop.f32.mrf.mxu0
        %v648 = vadd.f32 %v354, %v647
        %649 = vmatprep.mubr.f32.mxu0 0.0
        %650 = vmatmul.mubr.f32.gmra.mxu0 %v446
        %v651 = vpop.f32.mrf.mxu0
        %v652 = vadd.f32 %v359, %v651
        %v653 = vpop.f32.mrf.mxu0
        %v654 = vadd.f32 %v359, %v653
        %655 = vmatprep.mubr.f32.mxu0 0.0
        %656 = vmatmul.mubr.f32.gmra.mxu0 %v449
        %v657 = vpop.f32.mrf.mxu0
        %v658 = vadd.f32 %v364, %v657
        %v659 = vpop.f32.mrf.mxu0
        %v660 = vadd.f32 %v364, %v659
        %661 = vdwg.mxu0
        %662 = vmatprep.subr.mxu0 0.0
        %663 = vmatpush1.msra.mxu0 0.0
        %664 = vmatprep.subr.mxu0 0.0
        %665 = vmatpush1.msra.mxu0 0.0
        %666 = vmatprep.subr.mxu0 0.0
        %667 = vmatpush1.msra.mxu0 0.0
        %668 = vmatprep.subr.mxu0 0.0
        %669 = vmatpush1.msra.mxu0 0.0
        %670 = vmatprep.subr.mxu0 0.0
        %671 = vmatpush1.msra.mxu0 0.0
        %672 = vmatprep.subr.mxu0 0.0
        %673 = vmatpush1.msra.mxu0 0.0
        %674 = vmatprep.subr.mxu0 0.0
        %675 = vmatpush1.msra.mxu0 0.0
        %676 = vmatprep.subr.mxu0 0.0
        %677 = vmatpush1.msra.mxu0 0.0
        %678 = vmatprep.subr.mxu0 0.0
        %679 = vmatpush1.msra.mxu0 0.0
        %680 = vmatprep.subr.mxu0 0.0
        %681 = vmatpush1.msra.mxu0 0.0
        %682 = vmatprep.subr.mxu0 0.0
        %683 = vmatpush1.msra.mxu0 0.0
        %684 = vmatprep.subr.mxu0 0.0
        %685 = vmatpush1.msra.mxu0 0.0
        %686 = vmatprep.subr.mxu0 0.0
        %687 = vmatpush1.msra.mxu0 0.0
        %688 = vmatprep.subr.mxu0 0.0
        %689 = vmatpush1.msra.mxu0 0.0
        %690 = vmatprep.subr.mxu0 0.0
        %691 = vmatpush1.msra.mxu0 0.0
        %692 = vmatprep.subr.mxu0 %v462
        %693 = vmatpush1.msra.mxu0 %v460
        %694 = vmatprep.subr.mxu0 0.0
        %695 = vmatpush2.msra.mxu0 0.0
        %696 = vmatprep.subr.mxu0 0.0
        %697 = vmatpush2.msra.mxu0 0.0
        %698 = vmatprep.subr.mxu0 0.0
        %699 = vmatpush2.msra.mxu0 0.0
        %700 = vmatprep.subr.mxu0 0.0
        %701 = vmatpush2.msra.mxu0 0.0
        %702 = vmatprep.subr.mxu0 0.0
        %703 = vmatpush2.msra.mxu0 0.0
        %704 = vmatprep.subr.mxu0 0.0
        %705 = vmatpush2.msra.mxu0 0.0
        %706 = vmatprep.subr.mxu0 0.0
        %707 = vmatpush2.msra.mxu0 0.0
        %708 = vmatprep.subr.mxu0 0.0
        %709 = vmatpush2.msra.mxu0 0.0
        %710 = vmatprep.subr.mxu0 0.0
        %711 = vmatpush2.msra.mxu0 0.0
        %712 = vmatprep.subr.mxu0 0.0
        %713 = vmatpush2.msra.mxu0 0.0
        %714 = vmatprep.subr.mxu0 0.0
        %715 = vmatpush2.msra.mxu0 0.0
        %716 = vmatprep.subr.mxu0 0.0
        %717 = vmatpush2.msra.mxu0 0.0
        %718 = vmatprep.subr.mxu0 0.0
        %719 = vmatpush2.msra.mxu0 0.0
        %720 = vmatprep.subr.mxu0 0.0
        %721 = vmatpush2.msra.mxu0 0.0
        %722 = vmatprep.subr.mxu0 0.0
        %723 = vmatpush2.msra.mxu0 0.0
        %724 = vmatprep.subr.mxu0 0.0
        %725 = vmatpush2.msra.mxu0 0.0
        %726 = vmatprep.mubr.f32.mxu0 0.0
        %727 = vmatmul.mubr.f32.gmra.mxu0 %v440
        %v728 = vpop.f32.mrf.mxu0
        %v729 = vadd.f32 %v349, %v728
        %v730 = vpop.f32.mrf.mxu0
        %v731 = vadd.f32 %v349, %v730
        %732 = vmatprep.mubr.f32.mxu0 0.0
        %733 = vmatmul.mubr.f32.gmra.mxu0 %v443
        %v734 = vpop.f32.mrf.mxu0
        %v735 = vadd.f32 %v354, %v734
        %v736 = vpop.f32.mrf.mxu0
        %v737 = vadd.f32 %v354, %v736
        %738 = vmatprep.mubr.f32.mxu0 0.0
        %739 = vmatmul.mubr.f32.gmra.mxu0 %v446
        %v740 = vpop.f32.mrf.mxu0
        %v741 = vadd.f32 %v359, %v740
        %v742 = vpop.f32.mrf.mxu0
        %v743 = vadd.f32 %v359, %v742
        %744 = vmatprep.mubr.f32.mxu0 0.0
        %745 = vmatmul.mubr.f32.gmra.mxu0 %v449
        %v746 = vpop.f32.mrf.mxu0
        %v747 = vadd.f32 %v364, %v746
        %v748 = vpop.f32.mrf.mxu0
        %v749 = vadd.f32 %v364, %v748
        %750 = vdwg.mxu0
        %751 = vmatprep.subr.mxu0 0.0
        %752 = vmatpush1.msra.mxu0 0.0
        %753 = vmatprep.subr.mxu0 0.0
        %754 = vmatpush1.msra.mxu0 0.0
        %755 = vmatprep.subr.mxu0 0.0
        %756 = vmatpush1.msra.mxu0 0.0
        %757 = vmatprep.subr.mxu0 0.0
        %758 = vmatpush1.msra.mxu0 0.0
        %759 = vmatprep.subr.mxu0 0.0
        %760 = vmatpush1.msra.mxu0 0.0
        %761 = vmatprep.subr.mxu0 0.0
        %762 = vmatpush1.msra.mxu0 0.0
        %763 = vmatprep.subr.mxu0 0.0
        %764 = vmatpush1.msra.mxu0 0.0
        %765 = vmatprep.subr.mxu0 0.0
        %766 = vmatpush1.msra.mxu0 0.0
        %767 = vmatprep.subr.mxu0 0.0
        %768 = vmatpush1.msra.mxu0 0.0
        %769 = vmatprep.subr.mxu0 0.0
        %770 = vmatpush1.msra.mxu0 0.0
        %771 = vmatprep.subr.mxu0 0.0
        %772 = vmatpush1.msra.mxu0 0.0
        %773 = vmatprep.subr.mxu0 0.0
        %774 = vmatpush1.msra.mxu0 0.0
        %775 = vmatprep.subr.mxu0 0.0
        %776 = vmatpush1.msra.mxu0 0.0
        %777 = vmatprep.subr.mxu0 0.0
        %778 = vmatpush1.msra.mxu0 0.0
        %779 = vmatprep.subr.mxu0 0.0
        %780 = vmatpush1.msra.mxu0 0.0
        %781 = vmatprep.subr.mxu0 %v466
        %782 = vmatpush1.msra.mxu0 %v464
        %783 = vmatprep.subr.mxu0 0.0
        %784 = vmatpush2.msra.mxu0 0.0
        %785 = vmatprep.subr.mxu0 0.0
        %786 = vmatpush2.msra.mxu0 0.0
        %787 = vmatprep.subr.mxu0 0.0
        %788 = vmatpush2.msra.mxu0 0.0
        %789 = vmatprep.subr.mxu0 0.0
        %790 = vmatpush2.msra.mxu0 0.0
        %791 = vmatprep.subr.mxu0 0.0
        %792 = vmatpush2.msra.mxu0 0.0
        %793 = vmatprep.subr.mxu0 0.0
        %794 = vmatpush2.msra.mxu0 0.0
        %795 = vmatprep.subr.mxu0 0.0
        %796 = vmatpush2.msra.mxu0 0.0
        %797 = vmatprep.subr.mxu0 0.0
        %798 = vmatpush2.msra.mxu0 0.0
        %799 = vmatprep.subr.mxu0 0.0
        %800 = vmatpush2.msra.mxu0 0.0
        %801 = vmatprep.subr.mxu0 0.0
        %802 = vmatpush2.msra.mxu0 0.0
        %803 = vmatprep.subr.mxu0 0.0
        %804 = vmatpush2.msra.mxu0 0.0
        %805 = vmatprep.subr.mxu0 0.0
        %806 = vmatpush2.msra.mxu0 0.0
        %807 = vmatprep.subr.mxu0 0.0
        %808 = vmatpush2.msra.mxu0 0.0
        %809 = vmatprep.subr.mxu0 0.0
        %810 = vmatpush2.msra.mxu0 0.0
        %811 = vmatprep.subr.mxu0 0.0
        %812 = vmatpush2.msra.mxu0 0.0
        %813 = vmatprep.subr.mxu0 0.0
        %814 = vmatpush2.msra.mxu0 0.0
        %815 = vmatprep.mubr.f32.mxu0 0.0
        %816 = vmatmul.mubr.f32.gmra.mxu0 %v440
        %v817 = vpop.f32.mrf.mxu0
        %v818 = vadd.f32 %v349, %v817
        %v819 = vpop.f32.mrf.mxu0
        %v820 = vadd.f32 %v349, %v819
        %821 = vmatprep.mubr.f32.mxu0 0.0
        %822 = vmatmul.mubr.f32.gmra.mxu0 %v443
        %v823 = vpop.f32.mrf.mxu0
        %v824 = vadd.f32 %v354, %v823
        %v825 = vpop.f32.mrf.mxu0
        %v826 = vadd.f32 %v354, %v825
        %827 = vmatprep.mubr.f32.mxu0 0.0
        %828 = vmatmul.mubr.f32.gmra.mxu0 %v446
        %v829 = vpop.f32.mrf.mxu0
        %v830 = vadd.f32 %v359, %v829
        %v831 = vpop.f32.mrf.mxu0
        %v832 = vadd.f32 %v359, %v831
        %833 = vmatprep.mubr.f32.mxu0 0.0
        %834 = vmatmul.mubr.f32.gmra.mxu0 %v449
        %v835 = vpop.f32.mrf.mxu0
        %v836 = vadd.f32 %v364, %v835
        %v837 = vpop.f32.mrf.mxu0
        %v838 = vadd.f32 %v364, %v837
        %839 = vdwg.mxu0
        %840 = vmatprep.subr.mxu0 0.0
        %841 = vmatpush1.msra.mxu0 0.0
        %842 = vmatprep.subr.mxu0 0.0
        %843 = vmatpush1.msra.mxu0 0.0
        %844 = vmatprep.subr.mxu0 0.0
        %845 = vmatpush1.msra.mxu0 0.0
        %846 = vmatprep.subr.mxu0 0.0
        %847 = vmatpush1.msra.mxu0 0.0
        %848 = vmatprep.subr.mxu0 0.0
        %849 = vmatpush1.msra.mxu0 0.0
        %850 = vmatprep.subr.mxu0 0.0
        %851 = vmatpush1.msra.mxu0 0.0
        %852 = vmatprep.subr.mxu0 0.0
        %853 = vmatpush1.msra.mxu0 0.0
        %854 = vmatprep.subr.mxu0 0.0
        %855 = vmatpush1.msra.mxu0 0.0
        %856 = vmatprep.subr.mxu0 0.0
        %857 = vmatpush1.msra.mxu0 0.0
        %858 = vmatprep.subr.mxu0 0.0
        %859 = vmatpush1.msra.mxu0 0.0
        %860 = vmatprep.subr.mxu0 0.0
        %861 = vmatpush1.msra.mxu0 0.0
        %862 = vmatprep.subr.mxu0 0.0
        %863 = vmatpush1.msra.mxu0 0.0
        %864 = vmatprep.subr.mxu0 0.0
        %865 = vmatpush1.msra.mxu0 0.0
        %866 = vmatprep.subr.mxu0 0.0
        %867 = vmatpush1.msra.mxu0 0.0
        %868 = vmatprep.subr.mxu0 0.0
        %869 = vmatpush1.msra.mxu0 0.0
        %870 = vmatprep.subr.mxu0 %v470
        %871 = vmatpush1.msra.mxu0 %v468
        %872 = vmatprep.subr.mxu0 0.0
        %873 = vmatpush2.msra.mxu0 0.0
        %874 = vmatprep.subr.mxu0 0.0
        %875 = vmatpush2.msra.mxu0 0.0
        %876 = vmatprep.subr.mxu0 0.0
        %877 = vmatpush2.msra.mxu0 0.0
        %878 = vmatprep.subr.mxu0 0.0
        %879 = vmatpush2.msra.mxu0 0.0
        %880 = vmatprep.subr.mxu0 0.0
        %881 = vmatpush2.msra.mxu0 0.0
        %882 = vmatprep.subr.mxu0 0.0
        %883 = vmatpush2.msra.mxu0 0.0
        %884 = vmatprep.subr.mxu0 0.0
        %885 = vmatpush2.msra.mxu0 0.0
        %886 = vmatprep.subr.mxu0 0.0
        %887 = vmatpush2.msra.mxu0 0.0
        %888 = vmatprep.subr.mxu0 0.0
        %889 = vmatpush2.msra.mxu0 0.0
        %890 = vmatprep.subr.mxu0 0.0
        %891 = vmatpush2.msra.mxu0 0.0
        %892 = vmatprep.subr.mxu0 0.0
        %893 = vmatpush2.msra.mxu0 0.0
        %894 = vmatprep.subr.mxu0 0.0
        %895 = vmatpush2.msra.mxu0 0.0
        %896 = vmatprep.subr.mxu0 0.0
        %897 = vmatpush2.msra.mxu0 0.0
        %898 = vmatprep.subr.mxu0 0.0
        %899 = vmatpush2.msra.mxu0 0.0
        %900 = vmatprep.subr.mxu0 0.0
        %901 = vmatpush2.msra.mxu0 0.0
        %902 = vmatprep.subr.mxu0 0.0
        %903 = vmatpush2.msra.mxu0 0.0
        %904 = vmatprep.mubr.f32.mxu0 0.0
        %905 = vmatmul.mubr.f32.gmra.mxu0 %v440
        %v906 = vpop.f32.mrf.mxu0
        %v907 = vadd.f32 %v349, %v906
        %v908 = vpop.f32.mrf.mxu0
        %v909 = vadd.f32 %v349, %v908
        %910 = vmatprep.mubr.f32.mxu0 0.0
        %911 = vmatmul.mubr.f32.gmra.mxu0 %v443
        %v912 = vpop.f32.mrf.mxu0
        %v913 = vadd.f32 %v354, %v912
        %v914 = vpop.f32.mrf.mxu0
        %v915 = vadd.f32 %v354, %v914
        %916 = vmatprep.mubr.f32.mxu0 0.0
        %917 = vmatmul.mubr.f32.gmra.mxu0 %v446
        %v918 = vpop.f32.mrf.mxu0
        %v919 = vadd.f32 %v359, %v918
        %v920 = vpop.f32.mrf.mxu0
        %v921 = vadd.f32 %v359, %v920
        %922 = vmatprep.mubr.f32.mxu0 0.0
        %923 = vmatmul.mubr.f32.gmra.mxu0 %v449
        %v924 = vpop.f32.mrf.mxu0
        %v925 = vadd.f32 %v364, %v924
        %v926 = vpop.f32.mrf.mxu0
        %v927 = vadd.f32 %v364, %v926
        %928 = vdwg.mxu0
        %929 = vmatprep.subr.mxu0 0.0
        %930 = vmatpush1.msra.mxu0 0.0
        %931 = vmatprep.subr.mxu0 0.0
        %932 = vmatpush1.msra.mxu0 0.0
        %933 = vmatprep.subr.mxu0 0.0
        %934 = vmatpush1.msra.mxu0 0.0
        %935 = vmatprep.subr.mxu0 0.0
        %936 = vmatpush1.msra.mxu0 0.0
        %937 = vmatprep.subr.mxu0 0.0
        %938 = vmatpush1.msra.mxu0 0.0
        %939 = vmatprep.subr.mxu0 0.0
        %940 = vmatpush1.msra.mxu0 0.0
        %941 = vmatprep.subr.mxu0 0.0
        %942 = vmatpush1.msra.mxu0 0.0
        %943 = vmatprep.subr.mxu0 0.0
        %944 = vmatpush1.msra.mxu0 0.0
        %945 = vmatprep.subr.mxu0 0.0
        %946 = vmatpush1.msra.mxu0 0.0
        %947 = vmatprep.subr.mxu0 0.0
        %948 = vmatpush1.msra.mxu0 0.0
        %949 = vmatprep.subr.mxu0 0.0
        %950 = vmatpush1.msra.mxu0 0.0
        %951 = vmatprep.subr.mxu0 0.0
        %952 = vmatpush1.msra.mxu0 0.0
        %953 = vmatprep.subr.mxu0 0.0
        %954 = vmatpush1.msra.mxu0 0.0
        %955 = vmatprep.subr.mxu0 0.0
        %956 = vmatpush1.msra.mxu0 0.0
        %957 = vmatprep.subr.mxu0 0.0
        %958 = vmatpush1.msra.mxu0 0.0
        %959 = vmatprep.subr.mxu0 %v474
        %960 = vmatpush1.msra.mxu0 %v472
        %961 = vmatprep.subr.mxu0 0.0
        %962 = vmatpush2.msra.mxu0 0.0
        %963 = vmatprep.subr.mxu0 0.0
        %964 = vmatpush2.msra.mxu0 0.0
        %965 = vmatprep.subr.mxu0 0.0
        %966 = vmatpush2.msra.mxu0 0.0
        %967 = vmatprep.subr.mxu0 0.0
        %968 = vmatpush2.msra.mxu0 0.0
        %969 = vmatprep.subr.mxu0 0.0
        %970 = vmatpush2.msra.mxu0 0.0
        %971 = vmatprep.subr.mxu0 0.0
        %972 = vmatpush2.msra.mxu0 0.0
        %973 = vmatprep.subr.mxu0 0.0
        %974 = vmatpush2.msra.mxu0 0.0
        %975 = vmatprep.subr.mxu0 0.0
        %976 = vmatpush2.msra.mxu0 0.0
        %977 = vmatprep.subr.mxu0 0.0
        %978 = vmatpush2.msra.mxu0 0.0
        %979 = vmatprep.subr.mxu0 0.0
        %980 = vmatpush2.msra.mxu0 0.0
        %981 = vmatprep.subr.mxu0 0.0
        %982 = vmatpush2.msra.mxu0 0.0
        %983 = vmatprep.subr.mxu0 0.0
        %984 = vmatpush2.msra.mxu0 0.0
        %985 = vmatprep.subr.mxu0 0.0
        %986 = vmatpush2.msra.mxu0 0.0
        %987 = vmatprep.subr.mxu0 0.0
        %988 = vmatpush2.msra.mxu0 0.0
        %989 = vmatprep.subr.mxu0 0.0
        %990 = vmatpush2.msra.mxu0 0.0
        %991 = vmatprep.subr.mxu0 0.0
        %992 = vmatpush2.msra.mxu0 0.0
        %993 = vmatprep.mubr.f32.mxu0 0.0
        %994 = vmatmul.mubr.f32.gmra.mxu0 %v440
        %v995 = vpop.f32.mrf.mxu0
        %v996 = vadd.f32 %v349, %v995
        %v997 = vpop.f32.mrf.mxu0
        %v998 = vadd.f32 %v349, %v997
        %999 = vmatprep.mubr.f32.mxu0 0.0
        %1000 = vmatmul.mubr.f32.gmra.mxu0 %v443
        %v1001 = vpop.f32.mrf.mxu0
        %v1002 = vadd.f32 %v354, %v1001
        %v1003 = vpop.f32.mrf.mxu0
        %v1004 = vadd.f32 %v354, %v1003
        %1005 = vmatprep.mubr.f32.mxu0 0.0
        %1006 = vmatmul.mubr.f32.gmra.mxu0 %v446
        %v1007 = vpop.f32.mrf.mxu0
        %v1008 = vadd.f32 %v359, %v1007
        %v1009 = vpop.f32.mrf.mxu0
        %v1010 = vadd.f32 %v359, %v1009
        %1011 = vmatprep.mubr.f32.mxu0 0.0
        %1012 = vmatmul.mubr.f32.gmra.mxu0 %v449
        %v1013 = vpop.f32.mrf.mxu0
        %v1014 = vadd.f32 %v364, %v1013
        %v1015 = vpop.f32.mrf.mxu0
        %v1016 = vadd.f32 %v364, %v1015
        %1017 = vdwg.mxu0
        %1018 = vmatprep.subr.mxu0 0.0
        %1019 = vmatpush1.msra.mxu0 0.0
        %1020 = vmatprep.subr.mxu0 0.0
        %1021 = vmatpush1.msra.mxu0 0.0
        %1022 = vmatprep.subr.mxu0 0.0
        %1023 = vmatpush1.msra.mxu0 0.0
        %1024 = vmatprep.subr.mxu0 0.0
        %1025 = vmatpush1.msra.mxu0 0.0
        %1026 = vmatprep.subr.mxu0 0.0
        %1027 = vmatpush1.msra.mxu0 0.0
        %1028 = vmatprep.subr.mxu0 0.0
        %1029 = vmatpush1.msra.mxu0 0.0
        %1030 = vmatprep.subr.mxu0 0.0
        %1031 = vmatpush1.msra.mxu0 0.0
        %1032 = vmatprep.subr.mxu0 0.0
        %1033 = vmatpush1.msra.mxu0 0.0
        %1034 = vmatprep.subr.mxu0 0.0
        %1035 = vmatpush1.msra.mxu0 0.0
        %1036 = vmatprep.subr.mxu0 0.0
        %1037 = vmatpush1.msra.mxu0 0.0
        %1038 = vmatprep.subr.mxu0 0.0
        %1039 = vmatpush1.msra.mxu0 0.0
        %1040 = vmatprep.subr.mxu0 0.0
        %1041 = vmatpush1.msra.mxu0 0.0
        %1042 = vmatprep.subr.mxu0 0.0
        %1043 = vmatpush1.msra.mxu0 0.0
        %1044 = vmatprep.subr.mxu0 0.0
        %1045 = vmatpush1.msra.mxu0 0.0
        %1046 = vmatprep.subr.mxu0 0.0
        %1047 = vmatpush1.msra.mxu0 0.0
        %1048 = vmatprep.subr.mxu0 %v478
        %1049 = vmatpush1.msra.mxu0 %v476
        %1050 = vmatprep.subr.mxu0 0.0
        %1051 = vmatpush2.msra.mxu0 0.0
        %1052 = vmatprep.subr.mxu0 0.0
        %1053 = vmatpush2.msra.mxu0 0.0
        %1054 = vmatprep.subr.mxu0 0.0
        %1055 = vmatpush2.msra.mxu0 0.0
        %1056 = vmatprep.subr.mxu0 0.0
        %1057 = vmatpush2.msra.mxu0 0.0
        %1058 = vmatprep.subr.mxu0 0.0
        %1059 = vmatpush2.msra.mxu0 0.0
        %1060 = vmatprep.subr.mxu0 0.0
        %1061 = vmatpush2.msra.mxu0 0.0
        %1062 = vmatprep.subr.mxu0 0.0
        %1063 = vmatpush2.msra.mxu0 0.0
        %1064 = vmatprep.subr.mxu0 0.0
        %1065 = vmatpush2.msra.mxu0 0.0
        %1066 = vmatprep.subr.mxu0 0.0
        %1067 = vmatpush2.msra.mxu0 0.0
        %1068 = vmatprep.subr.mxu0 0.0
        %1069 = vmatpush2.msra.mxu0 0.0
        %1070 = vmatprep.subr.mxu0 0.0
        %1071 = vmatpush2.msra.mxu0 0.0
        %1072 = vmatprep.subr.mxu0 0.0
        %1073 = vmatpush2.msra.mxu0 0.0
        %1074 = vmatprep.subr.mxu0 0.0
        %1075 = vmatpush2.msra.mxu0 0.0
        %1076 = vmatprep.subr.mxu0 0.0
        %1077 = vmatpush2.msra.mxu0 0.0
        %1078 = vmatprep.subr.mxu0 0.0
        %1079 = vmatpush2.msra.mxu0 0.0
        %1080 = vmatprep.subr.mxu0 0.0
        %1081 = vmatpush2.msra.mxu0 0.0
        %1082 = vmatprep.mubr.f32.mxu0 0.0
        %1083 = vmatmul.mubr.f32.gmra.mxu0 %v440
        %v1084 = vpop.f32.mrf.mxu0
        %v1085 = vadd.f32 %v349, %v1084
        %v1086 = vpop.f32.mrf.mxu0
        %v1087 = vadd.f32 %v349, %v1086
        %1088 = vmatprep.mubr.f32.mxu0 0.0
        %1089 = vmatmul.mubr.f32.gmra.mxu0 %v443
        %v1090 = vpop.f32.mrf.mxu0
        %v1091 = vadd.f32 %v354, %v1090
        %v1092 = vpop.f32.mrf.mxu0
        %v1093 = vadd.f32 %v354, %v1092
        %1094 = vmatprep.mubr.f32.mxu0 0.0
        %1095 = vmatmul.mubr.f32.gmra.mxu0 %v446
        %v1096 = vpop.f32.mrf.mxu0
        %v1097 = vadd.f32 %v359, %v1096
        %v1098 = vpop.f32.mrf.mxu0
        %v1099 = vadd.f32 %v359, %v1098
        %1100 = vmatprep.mubr.f32.mxu0 0.0
        %1101 = vmatmul.mubr.f32.gmra.mxu0 %v449
        %v1102 = vpop.f32.mrf.mxu0
        %v1103 = vadd.f32 %v364, %v1102
        %v1104 = vpop.f32.mrf.mxu0
        %v1105 = vadd.f32 %v364, %v1104
        %1106 = vdwg.mxu0
        %1107 = vmatprep.subr.mxu0 0.0
        %1108 = vmatpush1.msra.mxu0 0.0
        %1109 = vmatprep.subr.mxu0 0.0
        %1110 = vmatpush1.msra.mxu0 0.0
        %1111 = vmatprep.subr.mxu0 0.0
        %1112 = vmatpush1.msra.mxu0 0.0
        %1113 = vmatprep.subr.mxu0 0.0
        %1114 = vmatpush1.msra.mxu0 0.0
        %1115 = vmatprep.subr.mxu0 0.0
        %1116 = vmatpush1.msra.mxu0 0.0
        %1117 = vmatprep.subr.mxu0 0.0
        %1118 = vmatpush1.msra.mxu0 0.0
        %1119 = vmatprep.subr.mxu0 0.0
        %1120 = vmatpush1.msra.mxu0 0.0
        %1121 = vmatprep.subr.mxu0 0.0
        %1122 = vmatpush1.msra.mxu0 0.0
        %1123 = vmatprep.subr.mxu0 0.0
        %1124 = vmatpush1.msra.mxu0 0.0
        %1125 = vmatprep.subr.mxu0 0.0
        %1126 = vmatpush1.msra.mxu0 0.0
        %1127 = vmatprep.subr.mxu0 0.0
        %1128 = vmatpush1.msra.mxu0 0.0
        %1129 = vmatprep.subr.mxu0 0.0
        %1130 = vmatpush1.msra.mxu0 0.0
        %1131 = vmatprep.subr.mxu0 0.0
        %1132 = vmatpush1.msra.mxu0 0.0
        %1133 = vmatprep.subr.mxu0 0.0
        %1134 = vmatpush1.msra.mxu0 0.0
        %1135 = vmatprep.subr.mxu0 0.0
        %1136 = vmatpush1.msra.mxu0 0.0
        %1137 = vmatprep.subr.mxu0 %v482
        %1138 = vmatpush1.msra.mxu0 %v480
        %1139 = vmatprep.subr.mxu0 0.0
        %1140 = vmatpush2.msra.mxu0 0.0
        %1141 = vmatprep.subr.mxu0 0.0
        %1142 = vmatpush2.msra.mxu0 0.0
        %1143 = vmatprep.subr.mxu0 0.0
        %1144 = vmatpush2.msra.mxu0 0.0
        %1145 = vmatprep.subr.mxu0 0.0
        %1146 = vmatpush2.msra.mxu0 0.0
        %1147 = vmatprep.subr.mxu0 0.0
        %1148 = vmatpush2.msra.mxu0 0.0
        %1149 = vmatprep.subr.mxu0 0.0
        %1150 = vmatpush2.msra.mxu0 0.0
        %1151 = vmatprep.subr.mxu0 0.0
        %1152 = vmatpush2.msra.mxu0 0.0
        %1153 = vmatprep.subr.mxu0 0.0
        %1154 = vmatpush2.msra.mxu0 0.0
        %1155 = vmatprep.subr.mxu0 0.0
        %1156 = vmatpush2.msra.mxu0 0.0
        %1157 = vmatprep.subr.mxu0 0.0
        %1158 = vmatpush2.msra.mxu0 0.0
        %1159 = vmatprep.subr.mxu0 0.0
        %1160 = vmatpush2.msra.mxu0 0.0
        %1161 = vmatprep.subr.mxu0 0.0
        %1162 = vmatpush2.msra.mxu0 0.0
        %1163 = vmatprep.subr.mxu0 0.0
        %1164 = vmatpush2.msra.mxu0 0.0
        %1165 = vmatprep.subr.mxu0 0.0
        %1166 = vmatpush2.msra.mxu0 0.0
        %1167 = vmatprep.subr.mxu0 0.0
        %1168 = vmatpush2.msra.mxu0 0.0
        %1169 = vmatprep.subr.mxu0 0.0
        %1170 = vmatpush2.msra.mxu0 0.0
        %1171 = vmatprep.mubr.f32.mxu0 0.0
        %1172 = vmatmul.mubr.f32.gmra.mxu0 %v440
        %v1173 = vpop.f32.mrf.mxu0
        %v1174 = vadd.f32 %v349, %v1173
        %v1175 = vpop.f32.mrf.mxu0
        %v1176 = vadd.f32 %v349, %v1175
        %1177 = vmatprep.mubr.f32.mxu0 0.0
        %1178 = vmatmul.mubr.f32.gmra.mxu0 %v443
        %v1179 = vpop.f32.mrf.mxu0
        %v1180 = vadd.f32 %v354, %v1179
        %v1181 = vpop.f32.mrf.mxu0
        %v1182 = vadd.f32 %v354, %v1181
        %1183 = vmatprep.mubr.f32.mxu0 0.0
        %1184 = vmatmul.mubr.f32.gmra.mxu0 %v446
        %v1185 = vpop.f32.mrf.mxu0
        %v1186 = vadd.f32 %v359, %v1185
        %v1187 = vpop.f32.mrf.mxu0
        %v1188 = vadd.f32 %v359, %v1187
        %1189 = vmatprep.mubr.f32.mxu0 0.0
        %1190 = vmatmul.mubr.f32.gmra.mxu0 %v449
        %v1191 = vpop.f32.mrf.mxu0
        %v1192 = vadd.f32 %v364, %v1191
        %v1193 = vpop.f32.mrf.mxu0
        %v1194 = vadd.f32 %v364, %v1193
        %1195 = vdwg.mxu0
        %v1196 = vmul.f32 %v551, %v551
        %v1197 = vmul.f32 %v553, %v553
        %v1198 = vmul.f32 %v640, %v640
        %v1199 = vmul.f32 %v642, %v642
        %v1200 = vmul.f32 %v729, %v729
        %v1201 = vmul.f32 %v731, %v731
        %v1202 = vmul.f32 %v818, %v818
        %v1203 = vmul.f32 %v820, %v820
        %v1204 = vmul.f32 %v907, %v907
        %v1205 = vmul.f32 %v909, %v909
        %v1206 = vmul.f32 %v996, %v996
        %v1207 = vmul.f32 %v998, %v998
        %v1208 = vmul.f32 %v1085, %v1085
        %v1209 = vmul.f32 %v1087, %v1087
        %v1210 = vmul.f32 %v1174, %v1174
        %v1211 = vmul.f32 %v1176, %v1176
        %v1212 = vmul.f32 %v557, %v557
        %v1213 = vmul.f32 %v559, %v559
        %v1214 = vmul.f32 %v646, %v646
        %v1215 = vmul.f32 %v648, %v648
        %v1216 = vmul.f32 %v735, %v735
        %v1217 = vmul.f32 %v737, %v737
        %v1218 = vmul.f32 %v824, %v824
        %v1219 = vmul.f32 %v826, %v826
        %v1220 = vmul.f32 %v913, %v913
        %v1221 = vmul.f32 %v915, %v915
        %v1222 = vmul.f32 %v1002, %v1002
        %v1223 = vmul.f32 %v1004, %v1004
        %v1224 = vmul.f32 %v1091, %v1091
        %v1225 = vmul.f32 %v1093, %v1093
        %v1226 = vmul.f32 %v1180, %v1180
        %v1227 = vmul.f32 %v1182, %v1182
        %v1228 = vmul.f32 %v563, %v563
        %v1229 = vmul.f32 %v565, %v565
        %v1230 = vmul.f32 %v652, %v652
        %v1231 = vmul.f32 %v654, %v654
        %v1232 = vmul.f32 %v741, %v741
        %v1233 = vmul.f32 %v743, %v743
        %v1234 = vmul.f32 %v830, %v830
        %v1235 = vmul.f32 %v832, %v832
        %v1236 = vmul.f32 %v919, %v919
        %v1237 = vmul.f32 %v921, %v921
        %v1238 = vmul.f32 %v1008, %v1008
        %v1239 = vmul.f32 %v1010, %v1010
        %v1240 = vmul.f32 %v1097, %v1097
        %v1241 = vmul.f32 %v1099, %v1099
        %v1242 = vmul.f32 %v1186, %v1186
        %v1243 = vmul.f32 %v1188, %v1188
        %v1244 = vmul.f32 %v569, %v569
        %v1245 = vmul.f32 %v571, %v571
        %v1246 = vmul.f32 %v658, %v658
        %v1247 = vmul.f32 %v660, %v660
        %v1248 = vmul.f32 %v747, %v747
        %v1249 = vmul.f32 %v749, %v749
        %v1250 = vmul.f32 %v836, %v836
        %v1251 = vmul.f32 %v838, %v838
        %v1252 = vmul.f32 %v925, %v925
        %v1253 = vmul.f32 %v927, %v927
        %v1254 = vmul.f32 %v1014, %v1014
        %v1255 = vmul.f32 %v1016, %v1016
        %v1256 = vmul.f32 %v1103, %v1103
        %v1257 = vmul.f32 %v1105, %v1105
        %v1258 = vmul.f32 %v1192, %v1192
        %v1259 = vmul.f32 %v1194, %v1194
        %v1260 = vsub.f32 0.0, %v1196
        %v1261 = vsub.f32 0.0, %v1197
        %v1262 = vsub.f32 0.0, %v1198
        %v1263 = vsub.f32 0.0, %v1199
        %v1264 = vsub.f32 0.0, %v1200
        %v1265 = vsub.f32 0.0, %v1201
        %v1266 = vsub.f32 0.0, %v1202
        %v1267 = vsub.f32 0.0, %v1203
        %v1268 = vsub.f32 0.0, %v1204
        %v1269 = vsub.f32 0.0, %v1205
        %v1270 = vsub.f32 0.0, %v1206
        %v1271 = vsub.f32 0.0, %v1207
        %v1272 = vsub.f32 0.0, %v1208
        %v1273 = vsub.f32 0.0, %v1209
        %v1274 = vsub.f32 0.0, %v1210
        %v1275 = vsub.f32 0.0, %v1211
        %v1276 = vsub.f32 0.0, %v1212
        %v1277 = vsub.f32 0.0, %v1213
        %v1278 = vsub.f32 0.0, %v1214
        %v1279 = vsub.f32 0.0, %v1215
        %v1280 = vsub.f32 0.0, %v1216
        %v1281 = vsub.f32 0.0, %v1217
        %v1282 = vsub.f32 0.0, %v1218
        %v1283 = vsub.f32 0.0, %v1219
        %v1284 = vsub.f32 0.0, %v1220
        %v1285 = vsub.f32 0.0, %v1221
        %v1286 = vsub.f32 0.0, %v1222
        %v1287 = vsub.f32 0.0, %v1223
        %v1288 = vsub.f32 0.0, %v1224
        %v1289 = vsub.f32 0.0, %v1225
        %v1290 = vsub.f32 0.0, %v1226
        %v1291 = vsub.f32 0.0, %v1227
        %v1292 = vsub.f32 0.0, %v1228
        %v1293 = vsub.f32 0.0, %v1229
        %v1294 = vsub.f32 0.0, %v1230
        %v1295 = vsub.f32 0.0, %v1231
        %v1296 = vsub.f32 0.0, %v1232
        %v1297 = vsub.f32 0.0, %v1233
        %v1298 = vsub.f32 0.0, %v1234
        %v1299 = vsub.f32 0.0, %v1235
        %v1300 = vsub.f32 0.0, %v1236
        %v1301 = vsub.f32 0.0, %v1237
        %v1302 = vsub.f32 0.0, %v1238
        %v1303 = vsub.f32 0.0, %v1239
        %v1304 = vsub.f32 0.0, %v1240
        %v1305 = vsub.f32 0.0, %v1241
        %v1306 = vsub.f32 0.0, %v1242
        %v1307 = vsub.f32 0.0, %v1243
        %v1308 = vsub.f32 0.0, %v1244
        %v1309 = vsub.f32 0.0, %v1245
        %v1310 = vsub.f32 0.0, %v1246
        %v1311 = vsub.f32 0.0, %v1247
        %v1312 = vsub.f32 0.0, %v1248
        %v1313 = vsub.f32 0.0, %v1249
        %v1314 = vsub.f32 0.0, %v1250
        %v1315 = vsub.f32 0.0, %v1251
        %v1316 = vsub.f32 0.0, %v1252
        %v1317 = vsub.f32 0.0, %v1253
        %v1318 = vsub.f32 0.0, %v1254
        %v1319 = vsub.f32 0.0, %v1255
        %v1320 = vsub.f32 0.0, %v1256
        %v1321 = vsub.f32 0.0, %v1257
        %v1322 = vsub.f32 0.0, %v1258
        %v1323 = vsub.f32 0.0, %v1259
        %v1324 = vmul.f32 %v1260, 1.442695
        %v1325 = vpow.pop %v1324
        %v1326 = vmul.f32 %v1261, 1.442695
        %v1327 = vpow.pop %v1326
        %v1328 = vmul.f32 %v1262, 1.442695
        %v1329 = vpow.pop %v1328
        %v1330 = vmul.f32 %v1263, 1.442695
        %v1331 = vpow.pop %v1330
        %v1332 = vmul.f32 %v1264, 1.442695
        %v1333 = vpow.pop %v1332
        %v1334 = vmul.f32 %v1265, 1.442695
        %v1335 = vpow.pop %v1334
        %v1336 = vmul.f32 %v1266, 1.442695
        %v1337 = vpow.pop %v1336
        %v1338 = vmul.f32 %v1267, 1.442695
        %v1339 = vpow.pop %v1338
        %v1340 = vmul.f32 %v1268, 1.442695
        %v1341 = vpow.pop %v1340
        %v1342 = vmul.f32 %v1269, 1.442695
        %v1343 = vpow.pop %v1342
        %v1344 = vmul.f32 %v1270, 1.442695
        %v1345 = vpow.pop %v1344
        %v1346 = vmul.f32 %v1271, 1.442695
        %v1347 = vpow.pop %v1346
        %v1348 = vmul.f32 %v1272, 1.442695
        %v1349 = vpow.pop %v1348
        %v1350 = vmul.f32 %v1273, 1.442695
        %v1351 = vpow.pop %v1350
        %v1352 = vmul.f32 %v1274, 1.442695
        %v1353 = vpow.pop %v1352
        %v1354 = vmul.f32 %v1275, 1.442695
        %v1355 = vpow.pop %v1354
        %v1356 = vmul.f32 %v1276, 1.442695
        %v1357 = vpow.pop %v1356
        %v1358 = vmul.f32 %v1277, 1.442695
        %v1359 = vpow.pop %v1358
        %v1360 = vmul.f32 %v1278, 1.442695
        %v1361 = vpow.pop %v1360
        %v1362 = vmul.f32 %v1279, 1.442695
        %v1363 = vpow.pop %v1362
        %v1364 = vmul.f32 %v1280, 1.442695
        %v1365 = vpow.pop %v1364
        %v1366 = vmul.f32 %v1281, 1.442695
        %v1367 = vpow.pop %v1366
        %v1368 = vmul.f32 %v1282, 1.442695
        %v1369 = vpow.pop %v1368
        %v1370 = vmul.f32 %v1283, 1.442695
        %v1371 = vpow.pop %v1370
        %v1372 = vmul.f32 %v1284, 1.442695
        %v1373 = vpow.pop %v1372
        %v1374 = vmul.f32 %v1285, 1.442695
        %v1375 = vpow.pop %v1374
        %v1376 = vmul.f32 %v1286, 1.442695
        %v1377 = vpow.pop %v1376
        %v1378 = vmul.f32 %v1287, 1.442695
        %v1379 = vpow.pop %v1378
        %v1380 = vmul.f32 %v1288, 1.442695
        %v1381 = vpow.pop %v1380
        %v1382 = vmul.f32 %v1289, 1.442695
        %v1383 = vpow.pop %v1382
        %v1384 = vmul.f32 %v1290, 1.442695
        %v1385 = vpow.pop %v1384
        %v1386 = vmul.f32 %v1291, 1.442695
        %v1387 = vpow.pop %v1386
        %v1388 = vmul.f32 %v1292, 1.442695
        %v1389 = vpow.pop %v1388
        %v1390 = vmul.f32 %v1293, 1.442695
        %v1391 = vpow.pop %v1390
        %v1392 = vmul.f32 %v1294, 1.442695
        %v1393 = vpow.pop %v1392
        %v1394 = vmul.f32 %v1295, 1.442695
        %v1395 = vpow.pop %v1394
        %v1396 = vmul.f32 %v1296, 1.442695
        %v1397 = vpow.pop %v1396
        %v1398 = vmul.f32 %v1297, 1.442695
        %v1399 = vpow.pop %v1398
        %v1400 = vmul.f32 %v1298, 1.442695
        %v1401 = vpow.pop %v1400
        %v1402 = vmul.f32 %v1299, 1.442695
        %v1403 = vpow.pop %v1402
        %v1404 = vmul.f32 %v1300, 1.442695
        %v1405 = vpow.pop %v1404
        %v1406 = vmul.f32 %v1301, 1.442695
        %v1407 = vpow.pop %v1406
        %v1408 = vmul.f32 %v1302, 1.442695
        %v1409 = vpow.pop %v1408
        %v1410 = vmul.f32 %v1303, 1.442695
        %v1411 = vpow.pop %v1410
        %v1412 = vmul.f32 %v1304, 1.442695
        %v1413 = vpow.pop %v1412
        %v1414 = vmul.f32 %v1305, 1.442695
        %v1415 = vpow.pop %v1414
        %v1416 = vmul.f32 %v1306, 1.442695
        %v1417 = vpow.pop %v1416
        %v1418 = vmul.f32 %v1307, 1.442695
        %v1419 = vpow.pop %v1418
        %v1420 = vmul.f32 %v1308, 1.442695
        %v1421 = vpow.pop %v1420
        %v1422 = vmul.f32 %v1309, 1.442695
        %v1423 = vpow.pop %v1422
        %v1424 = vmul.f32 %v1310, 1.442695
        %v1425 = vpow.pop %v1424
        %v1426 = vmul.f32 %v1311, 1.442695
        %v1427 = vpow.pop %v1426
        %v1428 = vmul.f32 %v1312, 1.442695
        %v1429 = vpow.pop %v1428
        %v1430 = vmul.f32 %v1313, 1.442695
        %v1431 = vpow.pop %v1430
        %v1432 = vmul.f32 %v1314, 1.442695
        %v1433 = vpow.pop %v1432
        %v1434 = vmul.f32 %v1315, 1.442695
        %v1435 = vpow.pop %v1434
        %v1436 = vmul.f32 %v1316, 1.442695
        %v1437 = vpow.pop %v1436
        %v1438 = vmul.f32 %v1317, 1.442695
        %v1439 = vpow.pop %v1438
        %v1440 = vmul.f32 %v1318, 1.442695
        %v1441 = vpow.pop %v1440
        %v1442 = vmul.f32 %v1319, 1.442695
        %v1443 = vpow.pop %v1442
        %v1444 = vmul.f32 %v1320, 1.442695
        %v1445 = vpow.pop %v1444
        %v1446 = vmul.f32 %v1321, 1.442695
        %v1447 = vpow.pop %v1446
        %v1448 = vmul.f32 %v1322, 1.442695
        %v1449 = vpow.pop %v1448
        %v1450 = vmul.f32 %v1323, 1.442695
        %v1451 = vpow.pop %v1450
        %v1452 = vld [vmem:[%s3] sm:$0xff]
        %v1453 = vld [vmem:[%s3 + $0x8] sm:$0xff]
        %v1454 = vld [vmem:[%s3 + $0x10] sm:$0xff]
        %v1455 = vld [vmem:[%s3 + $0x18] sm:$0xff]
        %v1456 = vld [vmem:[%s4] sm:$0xff]
        %v1457 = vld [vmem:[%s4 + $0x8] sm:$0xff]
        %v1458 = vld [vmem:[%s4 + $0x10] sm:$0xff]
        %v1459 = vld [vmem:[%s4 + $0x18] sm:$0xff]
        %1461 = vset.pattern.permute.xlu0 0
        %1462 = vperm.xlu0 %1461, %v1456
        %v1463 = vpop.permute.xlu0 %1462
        %1466 = vset.pattern.permute.xlu0 0
        %1467 = vperm.xlu0 %1466, %v1457
        %v1468 = vpop.permute.xlu0 %1467
        %1471 = vset.pattern.permute.xlu0 0
        %1472 = vperm.xlu0 %1471, %v1458
        %v1473 = vpop.permute.xlu0 %1472
        %1476 = vset.pattern.permute.xlu0 0
        %1477 = vperm.xlu0 %1476, %v1459
        %v1478 = vpop.permute.xlu0 %1477
        %vm1480 = vcmask 261120
        %v1482 = vsel %vm1480, %v1452, 0
        %v1485 = vsel %vm1480, %v1453, 0
        %v1488 = vsel %vm1480, %v1454, 0
        %v1491 = vsel %vm1480, %v1455, 0
        %1493 = vmatprep.subr.mxu0 0.0
        %1494 = vmatpush1.msra.mxu0 0.0
        %1495 = vmatprep.subr.mxu0 0.0
        %1496 = vmatpush1.msra.mxu0 0.0
        %1497 = vmatprep.subr.mxu0 0.0
        %1498 = vmatpush1.msra.mxu0 0.0
        %1499 = vmatprep.subr.mxu0 0.0
        %1500 = vmatpush1.msra.mxu0 0.0
        %1501 = vmatprep.subr.mxu0 0.0
        %1502 = vmatpush1.msra.mxu0 0.0
        %1503 = vmatprep.subr.mxu0 0.0
        %1504 = vmatpush1.msra.mxu0 0.0
        %1505 = vmatprep.subr.mxu0 0.0
        %1506 = vmatpush1.msra.mxu0 0.0
        %1507 = vmatprep.subr.mxu0 0.0
        %1508 = vmatpush1.msra.mxu0 0.0
        %1509 = vmatprep.subr.mxu0 0.0
        %1510 = vmatpush1.msra.mxu0 0.0
        %1511 = vmatprep.subr.mxu0 0.0
        %1512 = vmatpush1.msra.mxu0 0.0
        %1513 = vmatprep.subr.mxu0 0.0
        %1514 = vmatpush1.msra.mxu0 0.0
        %1515 = vmatprep.subr.mxu0 0.0
        %1516 = vmatpush1.msra.mxu0 0.0
        %1517 = vmatprep.subr.mxu0 %v1423
        %1518 = vmatpush1.msra.mxu0 %v1421
        %1519 = vmatprep.subr.mxu0 %v1391
        %1520 = vmatpush1.msra.mxu0 %v1389
        %1521 = vmatprep.subr.mxu0 %v1359
        %1522 = vmatpush1.msra.mxu0 %v1357
        %1523 = vmatprep.subr.mxu0 %v1327
        %1524 = vmatpush1.msra.mxu0 %v1325
        %1525 = vmatprep.subr.mxu0 0.0
        %1526 = vmatpush2.msra.mxu0 0.0
        %1527 = vmatprep.subr.mxu0 0.0
        %1528 = vmatpush2.msra.mxu0 0.0
        %1529 = vmatprep.subr.mxu0 0.0
        %1530 = vmatpush2.msra.mxu0 0.0
        %1531 = vmatprep.subr.mxu0 0.0
        %1532 = vmatpush2.msra.mxu0 0.0
        %1533 = vmatprep.subr.mxu0 0.0
        %1534 = vmatpush2.msra.mxu0 0.0
        %1535 = vmatprep.subr.mxu0 0.0
        %1536 = vmatpush2.msra.mxu0 0.0
        %1537 = vmatprep.subr.mxu0 0.0
        %1538 = vmatpush2.msra.mxu0 0.0
        %1539 = vmatprep.subr.mxu0 0.0
        %1540 = vmatpush2.msra.mxu0 0.0
        %1541 = vmatprep.subr.mxu0 0.0
        %1542 = vmatpush2.msra.mxu0 0.0
        %1543 = vmatprep.subr.mxu0 0.0
        %1544 = vmatpush2.msra.mxu0 0.0
        %1545 = vmatprep.subr.mxu0 0.0
        %1546 = vmatpush2.msra.mxu0 0.0
        %1547 = vmatprep.subr.mxu0 0.0
        %1548 = vmatpush2.msra.mxu0 0.0
        %1549 = vmatprep.subr.mxu0 0.0
        %1550 = vmatpush2.msra.mxu0 0.0
        %1551 = vmatprep.subr.mxu0 0.0
        %1552 = vmatpush2.msra.mxu0 0.0
        %1553 = vmatprep.subr.mxu0 0.0
        %1554 = vmatpush2.msra.mxu0 0.0
        %1555 = vmatprep.subr.mxu0 0.0
        %1556 = vmatpush2.msra.mxu0 0.0
        %1557 = vmatprep.mubr.f32.mxu0 0.0
        %1558 = vmatmul.mubr.f32.gmra.mxu0 %v1482
        %v1559 = vpop.f32.mrf.mxu0
        %v1560 = vadd.f32 %v1463, %v1559
        %v1561 = vpop.f32.mrf.mxu0
        %v1562 = vadd.f32 %v1463, %v1561
        %1563 = vmatprep.mubr.f32.mxu0 0.0
        %1564 = vmatmul.mubr.f32.gmra.mxu0 %v1485
        %v1565 = vpop.f32.mrf.mxu0
        %v1566 = vadd.f32 %v1468, %v1565
        %v1567 = vpop.f32.mrf.mxu0
        %v1568 = vadd.f32 %v1468, %v1567
        %1569 = vmatprep.mubr.f32.mxu0 0.0
        %1570 = vmatmul.mubr.f32.gmra.mxu0 %v1488
        %v1571 = vpop.f32.mrf.mxu0
        %v1572 = vadd.f32 %v1473, %v1571
        %v1573 = vpop.f32.mrf.mxu0
        %v1574 = vadd.f32 %v1473, %v1573
        %1575 = vmatprep.mubr.f32.mxu0 0.0
        %1576 = vmatmul.mubr.f32.gmra.mxu0 %v1491
        %v1577 = vpop.f32.mrf.mxu0
        %v1578 = vadd.f32 %v1478, %v1577
        %v1579 = vpop.f32.mrf.mxu0
        %v1580 = vadd.f32 %v1478, %v1579
        %1581 = vdwg.mxu0
        %1582 = vmatprep.subr.mxu0 0.0
        %1583 = vmatpush1.msra.mxu0 0.0
        %1584 = vmatprep.subr.mxu0 0.0
        %1585 = vmatpush1.msra.mxu0 0.0
        %1586 = vmatprep.subr.mxu0 0.0
        %1587 = vmatpush1.msra.mxu0 0.0
        %1588 = vmatprep.subr.mxu0 0.0
        %1589 = vmatpush1.msra.mxu0 0.0
        %1590 = vmatprep.subr.mxu0 0.0
        %1591 = vmatpush1.msra.mxu0 0.0
        %1592 = vmatprep.subr.mxu0 0.0
        %1593 = vmatpush1.msra.mxu0 0.0
        %1594 = vmatprep.subr.mxu0 0.0
        %1595 = vmatpush1.msra.mxu0 0.0
        %1596 = vmatprep.subr.mxu0 0.0
        %1597 = vmatpush1.msra.mxu0 0.0
        %1598 = vmatprep.subr.mxu0 0.0
        %1599 = vmatpush1.msra.mxu0 0.0
        %1600 = vmatprep.subr.mxu0 0.0
        %1601 = vmatpush1.msra.mxu0 0.0
        %1602 = vmatprep.subr.mxu0 0.0
        %1603 = vmatpush1.msra.mxu0 0.0
        %1604 = vmatprep.subr.mxu0 0.0
        %1605 = vmatpush1.msra.mxu0 0.0
        %1606 = vmatprep.subr.mxu0 %v1427
        %1607 = vmatpush1.msra.mxu0 %v1425
        %1608 = vmatprep.subr.mxu0 %v1395
        %1609 = vmatpush1.msra.mxu0 %v1393
        %1610 = vmatprep.subr.mxu0 %v1363
        %1611 = vmatpush1.msra.mxu0 %v1361
        %1612 = vmatprep.subr.mxu0 %v1331
        %1613 = vmatpush1.msra.mxu0 %v1329
        %1614 = vmatprep.subr.mxu0 0.0
        %1615 = vmatpush2.msra.mxu0 0.0
        %1616 = vmatprep.subr.mxu0 0.0
        %1617 = vmatpush2.msra.mxu0 0.0
        %1618 = vmatprep.subr.mxu0 0.0
        %1619 = vmatpush2.msra.mxu0 0.0
        %1620 = vmatprep.subr.mxu0 0.0
        %1621 = vmatpush2.msra.mxu0 0.0
        %1622 = vmatprep.subr.mxu0 0.0
        %1623 = vmatpush2.msra.mxu0 0.0
        %1624 = vmatprep.subr.mxu0 0.0
        %1625 = vmatpush2.msra.mxu0 0.0
        %1626 = vmatprep.subr.mxu0 0.0
        %1627 = vmatpush2.msra.mxu0 0.0
        %1628 = vmatprep.subr.mxu0 0.0
        %1629 = vmatpush2.msra.mxu0 0.0
        %1630 = vmatprep.subr.mxu0 0.0
        %1631 = vmatpush2.msra.mxu0 0.0
        %1632 = vmatprep.subr.mxu0 0.0
        %1633 = vmatpush2.msra.mxu0 0.0
        %1634 = vmatprep.subr.mxu0 0.0
        %1635 = vmatpush2.msra.mxu0 0.0
        %1636 = vmatprep.subr.mxu0 0.0
        %1637 = vmatpush2.msra.mxu0 0.0
        %1638 = vmatprep.subr.mxu0 0.0
        %1639 = vmatpush2.msra.mxu0 0.0
        %1640 = vmatprep.subr.mxu0 0.0
        %1641 = vmatpush2.msra.mxu0 0.0
        %1642 = vmatprep.subr.mxu0 0.0
        %1643 = vmatpush2.msra.mxu0 0.0
        %1644 = vmatprep.subr.mxu0 0.0
        %1645 = vmatpush2.msra.mxu0 0.0
        %1646 = vmatprep.mubr.f32.mxu0 0.0
        %1647 = vmatmul.mubr.f32.gmra.mxu0 %v1482
        %v1648 = vpop.f32.mrf.mxu0
        %v1649 = vadd.f32 %v1463, %v1648
        %v1650 = vpop.f32.mrf.mxu0
        %v1651 = vadd.f32 %v1463, %v1650
        %1652 = vmatprep.mubr.f32.mxu0 0.0
        %1653 = vmatmul.mubr.f32.gmra.mxu0 %v1485
        %v1654 = vpop.f32.mrf.mxu0
        %v1655 = vadd.f32 %v1468, %v1654
        %v1656 = vpop.f32.mrf.mxu0
        %v1657 = vadd.f32 %v1468, %v1656
        %1658 = vmatprep.mubr.f32.mxu0 0.0
        %1659 = vmatmul.mubr.f32.gmra.mxu0 %v1488
        %v1660 = vpop.f32.mrf.mxu0
        %v1661 = vadd.f32 %v1473, %v1660
        %v1662 = vpop.f32.mrf.mxu0
        %v1663 = vadd.f32 %v1473, %v1662
        %1664 = vmatprep.mubr.f32.mxu0 0.0
        %1665 = vmatmul.mubr.f32.gmra.mxu0 %v1491
        %v1666 = vpop.f32.mrf.mxu0
        %v1667 = vadd.f32 %v1478, %v1666
        %v1668 = vpop.f32.mrf.mxu0
        %v1669 = vadd.f32 %v1478, %v1668
        %1670 = vdwg.mxu0
        %1671 = vmatprep.subr.mxu0 0.0
        %1672 = vmatpush1.msra.mxu0 0.0
        %1673 = vmatprep.subr.mxu0 0.0
        %1674 = vmatpush1.msra.mxu0 0.0
        %1675 = vmatprep.subr.mxu0 0.0
        %1676 = vmatpush1.msra.mxu0 0.0
        %1677 = vmatprep.subr.mxu0 0.0
        %1678 = vmatpush1.msra.mxu0 0.0
        %1679 = vmatprep.subr.mxu0 0.0
        %1680 = vmatpush1.msra.mxu0 0.0
        %1681 = vmatprep.subr.mxu0 0.0
        %1682 = vmatpush1.msra.mxu0 0.0
        %1683 = vmatprep.subr.mxu0 0.0
        %1684 = vmatpush1.msra.mxu0 0.0
        %1685 = vmatprep.subr.mxu0 0.0
        %1686 = vmatpush1.msra.mxu0 0.0
        %1687 = vmatprep.subr.mxu0 0.0
        %1688 = vmatpush1.msra.mxu0 0.0
        %1689 = vmatprep.subr.mxu0 0.0
        %1690 = vmatpush1.msra.mxu0 0.0
        %1691 = vmatprep.subr.mxu0 0.0
        %1692 = vmatpush1.msra.mxu0 0.0
        %1693 = vmatprep.subr.mxu0 0.0
        %1694 = vmatpush1.msra.mxu0 0.0
        %1695 = vmatprep.subr.mxu0 %v1431
        %1696 = vmatpush1.msra.mxu0 %v1429
        %1697 = vmatprep.subr.mxu0 %v1399
        %1698 = vmatpush1.msra.mxu0 %v1397
        %1699 = vmatprep.subr.mxu0 %v1367
        %1700 = vmatpush1.msra.mxu0 %v1365
        %1701 = vmatprep.subr.mxu0 %v1335
        %1702 = vmatpush1.msra.mxu0 %v1333
        %1703 = vmatprep.subr.mxu0 0.0
        %1704 = vmatpush2.msra.mxu0 0.0
        %1705 = vmatprep.subr.mxu0 0.0
        %1706 = vmatpush2.msra.mxu0 0.0
        %1707 = vmatprep.subr.mxu0 0.0
        %1708 = vmatpush2.msra.mxu0 0.0
        %1709 = vmatprep.subr.mxu0 0.0
        %1710 = vmatpush2.msra.mxu0 0.0
        %1711 = vmatprep.subr.mxu0 0.0
        %1712 = vmatpush2.msra.mxu0 0.0
        %1713 = vmatprep.subr.mxu0 0.0
        %1714 = vmatpush2.msra.mxu0 0.0
        %1715 = vmatprep.subr.mxu0 0.0
        %1716 = vmatpush2.msra.mxu0 0.0
        %1717 = vmatprep.subr.mxu0 0.0
        %1718 = vmatpush2.msra.mxu0 0.0
        %1719 = vmatprep.subr.mxu0 0.0
        %1720 = vmatpush2.msra.mxu0 0.0
        %1721 = vmatprep.subr.mxu0 0.0
        %1722 = vmatpush2.msra.mxu0 0.0
        %1723 = vmatprep.subr.mxu0 0.0
        %1724 = vmatpush2.msra.mxu0 0.0
        %1725 = vmatprep.subr.mxu0 0.0
        %1726 = vmatpush2.msra.mxu0 0.0
        %1727 = vmatprep.subr.mxu0 0.0
        %1728 = vmatpush2.msra.mxu0 0.0
        %1729 = vmatprep.subr.mxu0 0.0
        %1730 = vmatpush2.msra.mxu0 0.0
        %1731 = vmatprep.subr.mxu0 0.0
        %1732 = vmatpush2.msra.mxu0 0.0
        %1733 = vmatprep.subr.mxu0 0.0
        %1734 = vmatpush2.msra.mxu0 0.0
        %1735 = vmatprep.mubr.f32.mxu0 0.0
        %1736 = vmatmul.mubr.f32.gmra.mxu0 %v1482
        %v1737 = vpop.f32.mrf.mxu0
        %v1738 = vadd.f32 %v1463, %v1737
        %v1739 = vpop.f32.mrf.mxu0
        %v1740 = vadd.f32 %v1463, %v1739
        %1741 = vmatprep.mubr.f32.mxu0 0.0
        %1742 = vmatmul.mubr.f32.gmra.mxu0 %v1485
        %v1743 = vpop.f32.mrf.mxu0
        %v1744 = vadd.f32 %v1468, %v1743
        %v1745 = vpop.f32.mrf.mxu0
        %v1746 = vadd.f32 %v1468, %v1745
        %1747 = vmatprep.mubr.f32.mxu0 0.0
        %1748 = vmatmul.mubr.f32.gmra.mxu0 %v1488
        %v1749 = vpop.f32.mrf.mxu0
        %v1750 = vadd.f32 %v1473, %v1749
        %v1751 = vpop.f32.mrf.mxu0
        %v1752 = vadd.f32 %v1473, %v1751
        %1753 = vmatprep.mubr.f32.mxu0 0.0
        %1754 = vmatmul.mubr.f32.gmra.mxu0 %v1491
        %v1755 = vpop.f32.mrf.mxu0
        %v1756 = vadd.f32 %v1478, %v1755
        %v1757 = vpop.f32.mrf.mxu0
        %v1758 = vadd.f32 %v1478, %v1757
        %1759 = vdwg.mxu0
        %1760 = vmatprep.subr.mxu0 0.0
        %1761 = vmatpush1.msra.mxu0 0.0
        %1762 = vmatprep.subr.mxu0 0.0
        %1763 = vmatpush1.msra.mxu0 0.0
        %1764 = vmatprep.subr.mxu0 0.0
        %1765 = vmatpush1.msra.mxu0 0.0
        %1766 = vmatprep.subr.mxu0 0.0
        %1767 = vmatpush1.msra.mxu0 0.0
        %1768 = vmatprep.subr.mxu0 0.0
        %1769 = vmatpush1.msra.mxu0 0.0
        %1770 = vmatprep.subr.mxu0 0.0
        %1771 = vmatpush1.msra.mxu0 0.0
        %1772 = vmatprep.subr.mxu0 0.0
        %1773 = vmatpush1.msra.mxu0 0.0
        %1774 = vmatprep.subr.mxu0 0.0
        %1775 = vmatpush1.msra.mxu0 0.0
        %1776 = vmatprep.subr.mxu0 0.0
        %1777 = vmatpush1.msra.mxu0 0.0
        %1778 = vmatprep.subr.mxu0 0.0
        %1779 = vmatpush1.msra.mxu0 0.0
        %1780 = vmatprep.subr.mxu0 0.0
        %1781 = vmatpush1.msra.mxu0 0.0
        %1782 = vmatprep.subr.mxu0 0.0
        %1783 = vmatpush1.msra.mxu0 0.0
        %1784 = vmatprep.subr.mxu0 %v1435
        %1785 = vmatpush1.msra.mxu0 %v1433
        %1786 = vmatprep.subr.mxu0 %v1403
        %1787 = vmatpush1.msra.mxu0 %v1401
        %1788 = vmatprep.subr.mxu0 %v1371
        %1789 = vmatpush1.msra.mxu0 %v1369
        %1790 = vmatprep.subr.mxu0 %v1339
        %1791 = vmatpush1.msra.mxu0 %v1337
        %1792 = vmatprep.subr.mxu0 0.0
        %1793 = vmatpush2.msra.mxu0 0.0
        %1794 = vmatprep.subr.mxu0 0.0
        %1795 = vmatpush2.msra.mxu0 0.0
        %1796 = vmatprep.subr.mxu0 0.0
        %1797 = vmatpush2.msra.mxu0 0.0
        %1798 = vmatprep.subr.mxu0 0.0
        %1799 = vmatpush2.msra.mxu0 0.0
        %1800 = vmatprep.subr.mxu0 0.0
        %1801 = vmatpush2.msra.mxu0 0.0
        %1802 = vmatprep.subr.mxu0 0.0
        %1803 = vmatpush2.msra.mxu0 0.0
        %1804 = vmatprep.subr.mxu0 0.0
        %1805 = vmatpush2.msra.mxu0 0.0
        %1806 = vmatprep.subr.mxu0 0.0
        %1807 = vmatpush2.msra.mxu0 0.0
        %1808 = vmatprep.subr.mxu0 0.0
        %1809 = vmatpush2.msra.mxu0 0.0
        %1810 = vmatprep.subr.mxu0 0.0
        %1811 = vmatpush2.msra.mxu0 0.0
        %1812 = vmatprep.subr.mxu0 0.0
        %1813 = vmatpush2.msra.mxu0 0.0
        %1814 = vmatprep.subr.mxu0 0.0
        %1815 = vmatpush2.msra.mxu0 0.0
        %1816 = vmatprep.subr.mxu0 0.0
        %1817 = vmatpush2.msra.mxu0 0.0
        %1818 = vmatprep.subr.mxu0 0.0
        %1819 = vmatpush2.msra.mxu0 0.0
        %1820 = vmatprep.subr.mxu0 0.0
        %1821 = vmatpush2.msra.mxu0 0.0
        %1822 = vmatprep.subr.mxu0 0.0
        %1823 = vmatpush2.msra.mxu0 0.0
        %1824 = vmatprep.mubr.f32.mxu0 0.0
        %1825 = vmatmul.mubr.f32.gmra.mxu0 %v1482
        %v1826 = vpop.f32.mrf.mxu0
        %v1827 = vadd.f32 %v1463, %v1826
        %v1828 = vpop.f32.mrf.mxu0
        %v1829 = vadd.f32 %v1463, %v1828
        %1830 = vmatprep.mubr.f32.mxu0 0.0
        %1831 = vmatmul.mubr.f32.gmra.mxu0 %v1485
        %v1832 = vpop.f32.mrf.mxu0
        %v1833 = vadd.f32 %v1468, %v1832
        %v1834 = vpop.f32.mrf.mxu0
        %v1835 = vadd.f32 %v1468, %v1834
        %1836 = vmatprep.mubr.f32.mxu0 0.0
        %1837 = vmatmul.mubr.f32.gmra.mxu0 %v1488
        %v1838 = vpop.f32.mrf.mxu0
        %v1839 = vadd.f32 %v1473, %v1838
        %v1840 = vpop.f32.mrf.mxu0
        %v1841 = vadd.f32 %v1473, %v1840
        %1842 = vmatprep.mubr.f32.mxu0 0.0
        %1843 = vmatmul.mubr.f32.gmra.mxu0 %v1491
        %v1844 = vpop.f32.mrf.mxu0
        %v1845 = vadd.f32 %v1478, %v1844
        %v1846 = vpop.f32.mrf.mxu0
        %v1847 = vadd.f32 %v1478, %v1846
        %1848 = vdwg.mxu0
        %1849 = vmatprep.subr.mxu0 0.0
        %1850 = vmatpush1.msra.mxu0 0.0
        %1851 = vmatprep.subr.mxu0 0.0
        %1852 = vmatpush1.msra.mxu0 0.0
        %1853 = vmatprep.subr.mxu0 0.0
        %1854 = vmatpush1.msra.mxu0 0.0
        %1855 = vmatprep.subr.mxu0 0.0
        %1856 = vmatpush1.msra.mxu0 0.0
        %1857 = vmatprep.subr.mxu0 0.0
        %1858 = vmatpush1.msra.mxu0 0.0
        %1859 = vmatprep.subr.mxu0 0.0
        %1860 = vmatpush1.msra.mxu0 0.0
        %1861 = vmatprep.subr.mxu0 0.0
        %1862 = vmatpush1.msra.mxu0 0.0
        %1863 = vmatprep.subr.mxu0 0.0
        %1864 = vmatpush1.msra.mxu0 0.0
        %1865 = vmatprep.subr.mxu0 0.0
        %1866 = vmatpush1.msra.mxu0 0.0
        %1867 = vmatprep.subr.mxu0 0.0
        %1868 = vmatpush1.msra.mxu0 0.0
        %1869 = vmatprep.subr.mxu0 0.0
        %1870 = vmatpush1.msra.mxu0 0.0
        %1871 = vmatprep.subr.mxu0 0.0
        %1872 = vmatpush1.msra.mxu0 0.0
        %1873 = vmatprep.subr.mxu0 %v1439
        %1874 = vmatpush1.msra.mxu0 %v1437
        %1875 = vmatprep.subr.mxu0 %v1407
        %1876 = vmatpush1.msra.mxu0 %v1405
        %1877 = vmatprep.subr.mxu0 %v1375
        %1878 = vmatpush1.msra.mxu0 %v1373
        %1879 = vmatprep.subr.mxu0 %v1343
        %1880 = vmatpush1.msra.mxu0 %v1341
        %1881 = vmatprep.subr.mxu0 0.0
        %1882 = vmatpush2.msra.mxu0 0.0
        %1883 = vmatprep.subr.mxu0 0.0
        %1884 = vmatpush2.msra.mxu0 0.0
        %1885 = vmatprep.subr.mxu0 0.0
        %1886 = vmatpush2.msra.mxu0 0.0
        %1887 = vmatprep.subr.mxu0 0.0
        %1888 = vmatpush2.msra.mxu0 0.0
        %1889 = vmatprep.subr.mxu0 0.0
        %1890 = vmatpush2.msra.mxu0 0.0
        %1891 = vmatprep.subr.mxu0 0.0
        %1892 = vmatpush2.msra.mxu0 0.0
        %1893 = vmatprep.subr.mxu0 0.0
        %1894 = vmatpush2.msra.mxu0 0.0
        %1895 = vmatprep.subr.mxu0 0.0
        %1896 = vmatpush2.msra.mxu0 0.0
        %1897 = vmatprep.subr.mxu0 0.0
        %1898 = vmatpush2.msra.mxu0 0.0
        %1899 = vmatprep.subr.mxu0 0.0
        %1900 = vmatpush2.msra.mxu0 0.0
        %1901 = vmatprep.subr.mxu0 0.0
        %1902 = vmatpush2.msra.mxu0 0.0
        %1903 = vmatprep.subr.mxu0 0.0
        %1904 = vmatpush2.msra.mxu0 0.0
        %1905 = vmatprep.subr.mxu0 0.0
        %1906 = vmatpush2.msra.mxu0 0.0
        %1907 = vmatprep.subr.mxu0 0.0
        %1908 = vmatpush2.msra.mxu0 0.0
        %1909 = vmatprep.subr.mxu0 0.0
        %1910 = vmatpush2.msra.mxu0 0.0
        %1911 = vmatprep.subr.mxu0 0.0
        %1912 = vmatpush2.msra.mxu0 0.0
        %1913 = vmatprep.mubr.f32.mxu0 0.0
        %1914 = vmatmul.mubr.f32.gmra.mxu0 %v1482
        %v1915 = vpop.f32.mrf.mxu0
        %v1916 = vadd.f32 %v1463, %v1915
        %v1917 = vpop.f32.mrf.mxu0
        %v1918 = vadd.f32 %v1463, %v1917
        %1919 = vmatprep.mubr.f32.mxu0 0.0
        %1920 = vmatmul.mubr.f32.gmra.mxu0 %v1485
        %v1921 = vpop.f32.mrf.mxu0
        %v1922 = vadd.f32 %v1468, %v1921
        %v1923 = vpop.f32.mrf.mxu0
        %v1924 = vadd.f32 %v1468, %v1923
        %1925 = vmatprep.mubr.f32.mxu0 0.0
        %1926 = vmatmul.mubr.f32.gmra.mxu0 %v1488
        %v1927 = vpop.f32.mrf.mxu0
        %v1928 = vadd.f32 %v1473, %v1927
        %v1929 = vpop.f32.mrf.mxu0
        %v1930 = vadd.f32 %v1473, %v1929
        %1931 = vmatprep.mubr.f32.mxu0 0.0
        %1932 = vmatmul.mubr.f32.gmra.mxu0 %v1491
        %v1933 = vpop.f32.mrf.mxu0
        %v1934 = vadd.f32 %v1478, %v1933
        %v1935 = vpop.f32.mrf.mxu0
        %v1936 = vadd.f32 %v1478, %v1935
        %1937 = vdwg.mxu0
        %1938 = vmatprep.subr.mxu0 0.0
        %1939 = vmatpush1.msra.mxu0 0.0
        %1940 = vmatprep.subr.mxu0 0.0
        %1941 = vmatpush1.msra.mxu0 0.0
        %1942 = vmatprep.subr.mxu0 0.0
        %1943 = vmatpush1.msra.mxu0 0.0
        %1944 = vmatprep.subr.mxu0 0.0
        %1945 = vmatpush1.msra.mxu0 0.0
        %1946 = vmatprep.subr.mxu0 0.0
        %1947 = vmatpush1.msra.mxu0 0.0
        %1948 = vmatprep.subr.mxu0 0.0
        %1949 = vmatpush1.msra.mxu0 0.0
        %1950 = vmatprep.subr.mxu0 0.0
        %1951 = vmatpush1.msra.mxu0 0.0
        %1952 = vmatprep.subr.mxu0 0.0
        %1953 = vmatpush1.msra.mxu0 0.0
        %1954 = vmatprep.subr.mxu0 0.0
        %1955 = vmatpush1.msra.mxu0 0.0
        %1956 = vmatprep.subr.mxu0 0.0
        %1957 = vmatpush1.msra.mxu0 0.0
        %1958 = vmatprep.subr.mxu0 0.0
        %1959 = vmatpush1.msra.mxu0 0.0
        %1960 = vmatprep.subr.mxu0 0.0
        %1961 = vmatpush1.msra.mxu0 0.0
        %1962 = vmatprep.subr.mxu0 %v1443
        %1963 = vmatpush1.msra.mxu0 %v1441
        %1964 = vmatprep.subr.mxu0 %v1411
        %1965 = vmatpush1.msra.mxu0 %v1409
        %1966 = vmatprep.subr.mxu0 %v1379
        %1967 = vmatpush1.msra.mxu0 %v1377
        %1968 = vmatprep.subr.mxu0 %v1347
        %1969 = vmatpush1.msra.mxu0 %v1345
        %1970 = vmatprep.subr.mxu0 0.0
        %1971 = vmatpush2.msra.mxu0 0.0
        %1972 = vmatprep.subr.mxu0 0.0
        %1973 = vmatpush2.msra.mxu0 0.0
        %1974 = vmatprep.subr.mxu0 0.0
        %1975 = vmatpush2.msra.mxu0 0.0
        %1976 = vmatprep.subr.mxu0 0.0
        %1977 = vmatpush2.msra.mxu0 0.0
        %1978 = vmatprep.subr.mxu0 0.0
        %1979 = vmatpush2.msra.mxu0 0.0
        %1980 = vmatprep.subr.mxu0 0.0
        %1981 = vmatpush2.msra.mxu0 0.0
        %1982 = vmatprep.subr.mxu0 0.0
        %1983 = vmatpush2.msra.mxu0 0.0
        %1984 = vmatprep.subr.mxu0 0.0
        %1985 = vmatpush2.msra.mxu0 0.0
        %1986 = vmatprep.subr.mxu0 0.0
        %1987 = vmatpush2.msra.mxu0 0.0
        %1988 = vmatprep.subr.mxu0 0.0
        %1989 = vmatpush2.msra.mxu0 0.0
        %1990 = vmatprep.subr.mxu0 0.0
        %1991 = vmatpush2.msra.mxu0 0.0
        %1992 = vmatprep.subr.mxu0 0.0
        %1993 = vmatpush2.msra.mxu0 0.0
        %1994 = vmatprep.subr.mxu0 0.0
        %1995 = vmatpush2.msra.mxu0 0.0
        %1996 = vmatprep.subr.mxu0 0.0
        %1997 = vmatpush2.msra.mxu0 0.0
        %1998 = vmatprep.subr.mxu0 0.0
        %1999 = vmatpush2.msra.mxu0 0.0
        %2000 = vmatprep.subr.mxu0 0.0
        %2001 = vmatpush2.msra.mxu0 0.0
        %2002 = vmatprep.mubr.f32.mxu0 0.0
        %2003 = vmatmul.mubr.f32.gmra.mxu0 %v1482
        %v2004 = vpop.f32.mrf.mxu0
        %v2005 = vadd.f32 %v1463, %v2004
        %v2006 = vpop.f32.mrf.mxu0
        %v2007 = vadd.f32 %v1463, %v2006
        %2008 = vmatprep.mubr.f32.mxu0 0.0
        %2009 = vmatmul.mubr.f32.gmra.mxu0 %v1485
        %v2010 = vpop.f32.mrf.mxu0
        %v2011 = vadd.f32 %v1468, %v2010
        %v2012 = vpop.f32.mrf.mxu0
        %v2013 = vadd.f32 %v1468, %v2012
        %2014 = vmatprep.mubr.f32.mxu0 0.0
        %2015 = vmatmul.mubr.f32.gmra.mxu0 %v1488
        %v2016 = vpop.f32.mrf.mxu0
        %v2017 = vadd.f32 %v1473, %v2016
        %v2018 = vpop.f32.mrf.mxu0
        %v2019 = vadd.f32 %v1473, %v2018
        %2020 = vmatprep.mubr.f32.mxu0 0.0
        %2021 = vmatmul.mubr.f32.gmra.mxu0 %v1491
        %v2022 = vpop.f32.mrf.mxu0
        %v2023 = vadd.f32 %v1478, %v2022
        %v2024 = vpop.f32.mrf.mxu0
        %v2025 = vadd.f32 %v1478, %v2024
        %2026 = vdwg.mxu0
        %2027 = vmatprep.subr.mxu0 0.0
        %2028 = vmatpush1.msra.mxu0 0.0
        %2029 = vmatprep.subr.mxu0 0.0
        %2030 = vmatpush1.msra.mxu0 0.0
        %2031 = vmatprep.subr.mxu0 0.0
        %2032 = vmatpush1.msra.mxu0 0.0
        %2033 = vmatprep.subr.mxu0 0.0
        %2034 = vmatpush1.msra.mxu0 0.0
        %2035 = vmatprep.subr.mxu0 0.0
        %2036 = vmatpush1.msra.mxu0 0.0
        %2037 = vmatprep.subr.mxu0 0.0
        %2038 = vmatpush1.msra.mxu0 0.0
        %2039 = vmatprep.subr.mxu0 0.0
        %2040 = vmatpush1.msra.mxu0 0.0
        %2041 = vmatprep.subr.mxu0 0.0
        %2042 = vmatpush1.msra.mxu0 0.0
        %2043 = vmatprep.subr.mxu0 0.0
        %2044 = vmatpush1.msra.mxu0 0.0
        %2045 = vmatprep.subr.mxu0 0.0
        %2046 = vmatpush1.msra.mxu0 0.0
        %2047 = vmatprep.subr.mxu0 0.0
        %2048 = vmatpush1.msra.mxu0 0.0
        %2049 = vmatprep.subr.mxu0 0.0
        %2050 = vmatpush1.msra.mxu0 0.0
        %2051 = vmatprep.subr.mxu0 %v1447
        %2052 = vmatpush1.msra.mxu0 %v1445
        %2053 = vmatprep.subr.mxu0 %v1415
        %2054 = vmatpush1.msra.mxu0 %v1413
        %2055 = vmatprep.subr.mxu0 %v1383
        %2056 = vmatpush1.msra.mxu0 %v1381
        %2057 = vmatprep.subr.mxu0 %v1351
        %2058 = vmatpush1.msra.mxu0 %v1349
        %2059 = vmatprep.subr.mxu0 0.0
        %2060 = vmatpush2.msra.mxu0 0.0
        %2061 = vmatprep.subr.mxu0 0.0
        %2062 = vmatpush2.msra.mxu0 0.0
        %2063 = vmatprep.subr.mxu0 0.0
        %2064 = vmatpush2.msra.mxu0 0.0
        %2065 = vmatprep.subr.mxu0 0.0
        %2066 = vmatpush2.msra.mxu0 0.0
        %2067 = vmatprep.subr.mxu0 0.0
        %2068 = vmatpush2.msra.mxu0 0.0
        %2069 = vmatprep.subr.mxu0 0.0
        %2070 = vmatpush2.msra.mxu0 0.0
        %2071 = vmatprep.subr.mxu0 0.0
        %2072 = vmatpush2.msra.mxu0 0.0
        %2073 = vmatprep.subr.mxu0 0.0
        %2074 = vmatpush2.msra.mxu0 0.0
        %2075 = vmatprep.subr.mxu0 0.0
        %2076 = vmatpush2.msra.mxu0 0.0
        %2077 = vmatprep.subr.mxu0 0.0
        %2078 = vmatpush2.msra.mxu0 0.0
        %2079 = vmatprep.subr.mxu0 0.0
        %2080 = vmatpush2.msra.mxu0 0.0
        %2081 = vmatprep.subr.mxu0 0.0
        %2082 = vmatpush2.msra.mxu0 0.0
        %2083 = vmatprep.subr.mxu0 0.0
        %2084 = vmatpush2.msra.mxu0 0.0
        %2085 = vmatprep.subr.mxu0 0.0
        %2086 = vmatpush2.msra.mxu0 0.0
        %2087 = vmatprep.subr.mxu0 0.0
        %2088 = vmatpush2.msra.mxu0 0.0
        %2089 = vmatprep.subr.mxu0 0.0
        %2090 = vmatpush2.msra.mxu0 0.0
        %2091 = vmatprep.mubr.f32.mxu0 0.0
        %2092 = vmatmul.mubr.f32.gmra.mxu0 %v1482
        %v2093 = vpop.f32.mrf.mxu0
        %v2094 = vadd.f32 %v1463, %v2093
        %v2095 = vpop.f32.mrf.mxu0
        %v2096 = vadd.f32 %v1463, %v2095
        %2097 = vmatprep.mubr.f32.mxu0 0.0
        %2098 = vmatmul.mubr.f32.gmra.mxu0 %v1485
        %v2099 = vpop.f32.mrf.mxu0
        %v2100 = vadd.f32 %v1468, %v2099
        %v2101 = vpop.f32.mrf.mxu0
        %v2102 = vadd.f32 %v1468, %v2101
        %2103 = vmatprep.mubr.f32.mxu0 0.0
        %2104 = vmatmul.mubr.f32.gmra.mxu0 %v1488
        %v2105 = vpop.f32.mrf.mxu0
        %v2106 = vadd.f32 %v1473, %v2105
        %v2107 = vpop.f32.mrf.mxu0
        %v2108 = vadd.f32 %v1473, %v2107
        %2109 = vmatprep.mubr.f32.mxu0 0.0
        %2110 = vmatmul.mubr.f32.gmra.mxu0 %v1491
        %v2111 = vpop.f32.mrf.mxu0
        %v2112 = vadd.f32 %v1478, %v2111
        %v2113 = vpop.f32.mrf.mxu0
        %v2114 = vadd.f32 %v1478, %v2113
        %2115 = vdwg.mxu0
        %2116 = vmatprep.subr.mxu0 0.0
        %2117 = vmatpush1.msra.mxu0 0.0
        %2118 = vmatprep.subr.mxu0 0.0
        %2119 = vmatpush1.msra.mxu0 0.0
        %2120 = vmatprep.subr.mxu0 0.0
        %2121 = vmatpush1.msra.mxu0 0.0
        %2122 = vmatprep.subr.mxu0 0.0
        %2123 = vmatpush1.msra.mxu0 0.0
        %2124 = vmatprep.subr.mxu0 0.0
        %2125 = vmatpush1.msra.mxu0 0.0
        %2126 = vmatprep.subr.mxu0 0.0
        %2127 = vmatpush1.msra.mxu0 0.0
        %2128 = vmatprep.subr.mxu0 0.0
        %2129 = vmatpush1.msra.mxu0 0.0
        %2130 = vmatprep.subr.mxu0 0.0
        %2131 = vmatpush1.msra.mxu0 0.0
        %2132 = vmatprep.subr.mxu0 0.0
        %2133 = vmatpush1.msra.mxu0 0.0
        %2134 = vmatprep.subr.mxu0 0.0
        %2135 = vmatpush1.msra.mxu0 0.0
        %2136 = vmatprep.subr.mxu0 0.0
        %2137 = vmatpush1.msra.mxu0 0.0
        %2138 = vmatprep.subr.mxu0 0.0
        %2139 = vmatpush1.msra.mxu0 0.0
        %2140 = vmatprep.subr.mxu0 %v1451
        %2141 = vmatpush1.msra.mxu0 %v1449
        %2142 = vmatprep.subr.mxu0 %v1419
        %2143 = vmatpush1.msra.mxu0 %v1417
        %2144 = vmatprep.subr.mxu0 %v1387
        %2145 = vmatpush1.msra.mxu0 %v1385
        %2146 = vmatprep.subr.mxu0 %v1355
        %2147 = vmatpush1.msra.mxu0 %v1353
        %2148 = vmatprep.subr.mxu0 0.0
        %2149 = vmatpush2.msra.mxu0 0.0
        %2150 = vmatprep.subr.mxu0 0.0
        %2151 = vmatpush2.msra.mxu0 0.0
        %2152 = vmatprep.subr.mxu0 0.0
        %2153 = vmatpush2.msra.mxu0 0.0
        %2154 = vmatprep.subr.mxu0 0.0
        %2155 = vmatpush2.msra.mxu0 0.0
        %2156 = vmatprep.subr.mxu0 0.0
        %2157 = vmatpush2.msra.mxu0 0.0
        %2158 = vmatprep.subr.mxu0 0.0
        %2159 = vmatpush2.msra.mxu0 0.0
        %2160 = vmatprep.subr.mxu0 0.0
        %2161 = vmatpush2.msra.mxu0 0.0
        %2162 = vmatprep.subr.mxu0 0.0
        %2163 = vmatpush2.msra.mxu0 0.0
        %2164 = vmatprep.subr.mxu0 0.0
        %2165 = vmatpush2.msra.mxu0 0.0
        %2166 = vmatprep.subr.mxu0 0.0
        %2167 = vmatpush2.msra.mxu0 0.0
        %2168 = vmatprep.subr.mxu0 0.0
        %2169 = vmatpush2.msra.mxu0 0.0
        %2170 = vmatprep.subr.mxu0 0.0
        %2171 = vmatpush2.msra.mxu0 0.0
        %2172 = vmatprep.subr.mxu0 0.0
        %2173 = vmatpush2.msra.mxu0 0.0
        %2174 = vmatprep.subr.mxu0 0.0
        %2175 = vmatpush2.msra.mxu0 0.0
        %2176 = vmatprep.subr.mxu0 0.0
        %2177 = vmatpush2.msra.mxu0 0.0
        %2178 = vmatprep.subr.mxu0 0.0
        %2179 = vmatpush2.msra.mxu0 0.0
        %2180 = vmatprep.mubr.f32.mxu0 0.0
        %2181 = vmatmul.mubr.f32.gmra.mxu0 %v1482
        %v2182 = vpop.f32.mrf.mxu0
        %v2183 = vadd.f32 %v1463, %v2182
        %v2184 = vpop.f32.mrf.mxu0
        %v2185 = vadd.f32 %v1463, %v2184
        %2186 = vmatprep.mubr.f32.mxu0 0.0
        %2187 = vmatmul.mubr.f32.gmra.mxu0 %v1485
        %v2188 = vpop.f32.mrf.mxu0
        %v2189 = vadd.f32 %v1468, %v2188
        %v2190 = vpop.f32.mrf.mxu0
        %v2191 = vadd.f32 %v1468, %v2190
        %2192 = vmatprep.mubr.f32.mxu0 0.0
        %2193 = vmatmul.mubr.f32.gmra.mxu0 %v1488
        %v2194 = vpop.f32.mrf.mxu0
        %v2195 = vadd.f32 %v1473, %v2194
        %v2196 = vpop.f32.mrf.mxu0
        %v2197 = vadd.f32 %v1473, %v2196
        %2198 = vmatprep.mubr.f32.mxu0 0.0
        %2199 = vmatmul.mubr.f32.gmra.mxu0 %v1491
        %v2200 = vpop.f32.mrf.mxu0
        %v2201 = vadd.f32 %v1478, %v2200
        %v2202 = vpop.f32.mrf.mxu0
        %v2203 = vadd.f32 %v1478, %v2202
        %2204 = vdwg.mxu0
        %v2205 = vmul.f32 %v1560, %v1560
        %v2206 = vmul.f32 %v1562, %v1562
        %v2207 = vmul.f32 %v1649, %v1649
        %v2208 = vmul.f32 %v1651, %v1651
        %v2209 = vmul.f32 %v1738, %v1738
        %v2210 = vmul.f32 %v1740, %v1740
        %v2211 = vmul.f32 %v1827, %v1827
        %v2212 = vmul.f32 %v1829, %v1829
        %v2213 = vmul.f32 %v1916, %v1916
        %v2214 = vmul.f32 %v1918, %v1918
        %v2215 = vmul.f32 %v2005, %v2005
        %v2216 = vmul.f32 %v2007, %v2007
        %v2217 = vmul.f32 %v2094, %v2094
        %v2218 = vmul.f32 %v2096, %v2096
        %v2219 = vmul.f32 %v2183, %v2183
        %v2220 = vmul.f32 %v2185, %v2185
        %v2221 = vmul.f32 %v1566, %v1566
        %v2222 = vmul.f32 %v1568, %v1568
        %v2223 = vmul.f32 %v1655, %v1655
        %v2224 = vmul.f32 %v1657, %v1657
        %v2225 = vmul.f32 %v1744, %v1744
        %v2226 = vmul.f32 %v1746, %v1746
        %v2227 = vmul.f32 %v1833, %v1833
        %v2228 = vmul.f32 %v1835, %v1835
        %v2229 = vmul.f32 %v1922, %v1922
        %v2230 = vmul.f32 %v1924, %v1924
        %v2231 = vmul.f32 %v2011, %v2011
        %v2232 = vmul.f32 %v2013, %v2013
        %v2233 = vmul.f32 %v2100, %v2100
        %v2234 = vmul.f32 %v2102, %v2102
        %v2235 = vmul.f32 %v2189, %v2189
        %v2236 = vmul.f32 %v2191, %v2191
        %v2237 = vmul.f32 %v1572, %v1572
        %v2238 = vmul.f32 %v1574, %v1574
        %v2239 = vmul.f32 %v1661, %v1661
        %v2240 = vmul.f32 %v1663, %v1663
        %v2241 = vmul.f32 %v1750, %v1750
        %v2242 = vmul.f32 %v1752, %v1752
        %v2243 = vmul.f32 %v1839, %v1839
        %v2244 = vmul.f32 %v1841, %v1841
        %v2245 = vmul.f32 %v1928, %v1928
        %v2246 = vmul.f32 %v1930, %v1930
        %v2247 = vmul.f32 %v2017, %v2017
        %v2248 = vmul.f32 %v2019, %v2019
        %v2249 = vmul.f32 %v2106, %v2106
        %v2250 = vmul.f32 %v2108, %v2108
        %v2251 = vmul.f32 %v2195, %v2195
        %v2252 = vmul.f32 %v2197, %v2197
        %v2253 = vmul.f32 %v1578, %v1578
        %v2254 = vmul.f32 %v1580, %v1580
        %v2255 = vmul.f32 %v1667, %v1667
        %v2256 = vmul.f32 %v1669, %v1669
        %v2257 = vmul.f32 %v1756, %v1756
        %v2258 = vmul.f32 %v1758, %v1758
        %v2259 = vmul.f32 %v1845, %v1845
        %v2260 = vmul.f32 %v1847, %v1847
        %v2261 = vmul.f32 %v1934, %v1934
        %v2262 = vmul.f32 %v1936, %v1936
        %v2263 = vmul.f32 %v2023, %v2023
        %v2264 = vmul.f32 %v2025, %v2025
        %v2265 = vmul.f32 %v2112, %v2112
        %v2266 = vmul.f32 %v2114, %v2114
        %v2267 = vmul.f32 %v2201, %v2201
        %v2268 = vmul.f32 %v2203, %v2203
        %v2269 = vsub.f32 0.0, %v2205
        %v2270 = vsub.f32 0.0, %v2206
        %v2271 = vsub.f32 0.0, %v2207
        %v2272 = vsub.f32 0.0, %v2208
        %v2273 = vsub.f32 0.0, %v2209
        %v2274 = vsub.f32 0.0, %v2210
        %v2275 = vsub.f32 0.0, %v2211
        %v2276 = vsub.f32 0.0, %v2212
        %v2277 = vsub.f32 0.0, %v2213
        %v2278 = vsub.f32 0.0, %v2214
        %v2279 = vsub.f32 0.0, %v2215
        %v2280 = vsub.f32 0.0, %v2216
        %v2281 = vsub.f32 0.0, %v2217
        %v2282 = vsub.f32 0.0, %v2218
        %v2283 = vsub.f32 0.0, %v2219
        %v2284 = vsub.f32 0.0, %v2220
        %v2285 = vsub.f32 0.0, %v2221
        %v2286 = vsub.f32 0.0, %v2222
        %v2287 = vsub.f32 0.0, %v2223
        %v2288 = vsub.f32 0.0, %v2224
        %v2289 = vsub.f32 0.0, %v2225
        %v2290 = vsub.f32 0.0, %v2226
        %v2291 = vsub.f32 0.0, %v2227
        %v2292 = vsub.f32 0.0, %v2228
        %v2293 = vsub.f32 0.0, %v2229
        %v2294 = vsub.f32 0.0, %v2230
        %v2295 = vsub.f32 0.0, %v2231
        %v2296 = vsub.f32 0.0, %v2232
        %v2297 = vsub.f32 0.0, %v2233
        %v2298 = vsub.f32 0.0, %v2234
        %v2299 = vsub.f32 0.0, %v2235
        %v2300 = vsub.f32 0.0, %v2236
        %v2301 = vsub.f32 0.0, %v2237
        %v2302 = vsub.f32 0.0, %v2238
        %v2303 = vsub.f32 0.0, %v2239
        %v2304 = vsub.f32 0.0, %v2240
        %v2305 = vsub.f32 0.0, %v2241
        %v2306 = vsub.f32 0.0, %v2242
        %v2307 = vsub.f32 0.0, %v2243
        %v2308 = vsub.f32 0.0, %v2244
        %v2309 = vsub.f32 0.0, %v2245
        %v2310 = vsub.f32 0.0, %v2246
        %v2311 = vsub.f32 0.0, %v2247
        %v2312 = vsub.f32 0.0, %v2248
        %v2313 = vsub.f32 0.0, %v2249
        %v2314 = vsub.f32 0.0, %v2250
        %v2315 = vsub.f32 0.0, %v2251
        %v2316 = vsub.f32 0.0, %v2252
        %v2317 = vsub.f32 0.0, %v2253
        %v2318 = vsub.f32 0.0, %v2254
        %v2319 = vsub.f32 0.0, %v2255
        %v2320 = vsub.f32 0.0, %v2256
        %v2321 = vsub.f32 0.0, %v2257
        %v2322 = vsub.f32 0.0, %v2258
        %v2323 = vsub.f32 0.0, %v2259
        %v2324 = vsub.f32 0.0, %v2260
        %v2325 = vsub.f32 0.0, %v2261
        %v2326 = vsub.f32 0.0, %v2262
        %v2327 = vsub.f32 0.0, %v2263
        %v2328 = vsub.f32 0.0, %v2264
        %v2329 = vsub.f32 0.0, %v2265
        %v2330 = vsub.f32 0.0, %v2266
        %v2331 = vsub.f32 0.0, %v2267
        %v2332 = vsub.f32 0.0, %v2268
        %v2333 = vmul.f32 %v2269, 1.442695
        %v2334 = vpow.pop %v2333
        %v2335 = vmul.f32 %v2270, 1.442695
        %v2336 = vpow.pop %v2335
        %v2337 = vmul.f32 %v2271, 1.442695
        %v2338 = vpow.pop %v2337
        %v2339 = vmul.f32 %v2272, 1.442695
        %v2340 = vpow.pop %v2339
        %v2341 = vmul.f32 %v2273, 1.442695
        %v2342 = vpow.pop %v2341
        %v2343 = vmul.f32 %v2274, 1.442695
        %v2344 = vpow.pop %v2343
        %v2345 = vmul.f32 %v2275, 1.442695
        %v2346 = vpow.pop %v2345
        %v2347 = vmul.f32 %v2276, 1.442695
        %v2348 = vpow.pop %v2347
        %v2349 = vmul.f32 %v2277, 1.442695
        %v2350 = vpow.pop %v2349
        %v2351 = vmul.f32 %v2278, 1.442695
        %v2352 = vpow.pop %v2351
        %v2353 = vmul.f32 %v2279, 1.442695
        %v2354 = vpow.pop %v2353
        %v2355 = vmul.f32 %v2280, 1.442695
        %v2356 = vpow.pop %v2355
        %v2357 = vmul.f32 %v2281, 1.442695
        %v2358 = vpow.pop %v2357
        %v2359 = vmul.f32 %v2282, 1.442695
        %v2360 = vpow.pop %v2359
        %v2361 = vmul.f32 %v2283, 1.442695
        %v2362 = vpow.pop %v2361
        %v2363 = vmul.f32 %v2284, 1.442695
        %v2364 = vpow.pop %v2363
        %v2365 = vmul.f32 %v2285, 1.442695
        %v2366 = vpow.pop %v2365
        %v2367 = vmul.f32 %v2286, 1.442695
        %v2368 = vpow.pop %v2367
        %v2369 = vmul.f32 %v2287, 1.442695
        %v2370 = vpow.pop %v2369
        %v2371 = vmul.f32 %v2288, 1.442695
        %v2372 = vpow.pop %v2371
        %v2373 = vmul.f32 %v2289, 1.442695
        %v2374 = vpow.pop %v2373
        %v2375 = vmul.f32 %v2290, 1.442695
        %v2376 = vpow.pop %v2375
        %v2377 = vmul.f32 %v2291, 1.442695
        %v2378 = vpow.pop %v2377
        %v2379 = vmul.f32 %v2292, 1.442695
        %v2380 = vpow.pop %v2379
        %v2381 = vmul.f32 %v2293, 1.442695
        %v2382 = vpow.pop %v2381
        %v2383 = vmul.f32 %v2294, 1.442695
        %v2384 = vpow.pop %v2383
        %v2385 = vmul.f32 %v2295, 1.442695
        %v2386 = vpow.pop %v2385
        %v2387 = vmul.f32 %v2296, 1.442695
        %v2388 = vpow.pop %v2387
        %v2389 = vmul.f32 %v2297, 1.442695
        %v2390 = vpow.pop %v2389
        %v2391 = vmul.f32 %v2298, 1.442695
        %v2392 = vpow.pop %v2391
        %v2393 = vmul.f32 %v2299, 1.442695
        %v2394 = vpow.pop %v2393
        %v2395 = vmul.f32 %v2300, 1.442695
        %v2396 = vpow.pop %v2395
        %v2397 = vmul.f32 %v2301, 1.442695
        %v2398 = vpow.pop %v2397
        %v2399 = vmul.f32 %v2302, 1.442695
        %v2400 = vpow.pop %v2399
        %v2401 = vmul.f32 %v2303, 1.442695
        %v2402 = vpow.pop %v2401
        %v2403 = vmul.f32 %v2304, 1.442695
        %v2404 = vpow.pop %v2403
        %v2405 = vmul.f32 %v2305, 1.442695
        %v2406 = vpow.pop %v2405
        %v2407 = vmul.f32 %v2306, 1.442695
        %v2408 = vpow.pop %v2407
        %v2409 = vmul.f32 %v2307, 1.442695
        %v2410 = vpow.pop %v2409
        %v2411 = vmul.f32 %v2308, 1.442695
        %v2412 = vpow.pop %v2411
        %v2413 = vmul.f32 %v2309, 1.442695
        %v2414 = vpow.pop %v2413
        %v2415 = vmul.f32 %v2310, 1.442695
        %v2416 = vpow.pop %v2415
        %v2417 = vmul.f32 %v2311, 1.442695
        %v2418 = vpow.pop %v2417
        %v2419 = vmul.f32 %v2312, 1.442695
        %v2420 = vpow.pop %v2419
        %v2421 = vmul.f32 %v2313, 1.442695
        %v2422 = vpow.pop %v2421
        %v2423 = vmul.f32 %v2314, 1.442695
        %v2424 = vpow.pop %v2423
        %v2425 = vmul.f32 %v2315, 1.442695
        %v2426 = vpow.pop %v2425
        %v2427 = vmul.f32 %v2316, 1.442695
        %v2428 = vpow.pop %v2427
        %v2429 = vmul.f32 %v2317, 1.442695
        %v2430 = vpow.pop %v2429
        %v2431 = vmul.f32 %v2318, 1.442695
        %v2432 = vpow.pop %v2431
        %v2433 = vmul.f32 %v2319, 1.442695
        %v2434 = vpow.pop %v2433
        %v2435 = vmul.f32 %v2320, 1.442695
        %v2436 = vpow.pop %v2435
        %v2437 = vmul.f32 %v2321, 1.442695
        %v2438 = vpow.pop %v2437
        %v2439 = vmul.f32 %v2322, 1.442695
        %v2440 = vpow.pop %v2439
        %v2441 = vmul.f32 %v2323, 1.442695
        %v2442 = vpow.pop %v2441
        %v2443 = vmul.f32 %v2324, 1.442695
        %v2444 = vpow.pop %v2443
        %v2445 = vmul.f32 %v2325, 1.442695
        %v2446 = vpow.pop %v2445
        %v2447 = vmul.f32 %v2326, 1.442695
        %v2448 = vpow.pop %v2447
        %v2449 = vmul.f32 %v2327, 1.442695
        %v2450 = vpow.pop %v2449
        %v2451 = vmul.f32 %v2328, 1.442695
        %v2452 = vpow.pop %v2451
        %v2453 = vmul.f32 %v2329, 1.442695
        %v2454 = vpow.pop %v2453
        %v2455 = vmul.f32 %v2330, 1.442695
        %v2456 = vpow.pop %v2455
        %v2457 = vmul.f32 %v2331, 1.442695
        %v2458 = vpow.pop %v2457
        %v2459 = vmul.f32 %v2332, 1.442695
        %v2460 = vpow.pop %v2459
        %v2461 = vld [vmem:[%s5] sm:$0xff]
        %v2462 = vld [vmem:[%s5 + $0x8] sm:$0xff]
        %v2463 = vld [vmem:[%s5 + $0x10] sm:$0xff]
        %v2464 = vld [vmem:[%s5 + $0x18] sm:$0xff]
        %v2465 = vld [vmem:[%s6] sm:$0xff]
        %v2466 = vld [vmem:[%s6 + $0x8] sm:$0xff]
        %v2467 = vld [vmem:[%s6 + $0x10] sm:$0xff]
        %v2468 = vld [vmem:[%s6 + $0x18] sm:$0xff]
        %2470 = vset.pattern.permute.xlu0 0
        %2471 = vperm.xlu0 %2470, %v2465
        %v2472 = vpop.permute.xlu0 %2471
        %2475 = vset.pattern.permute.xlu0 0
        %2476 = vperm.xlu0 %2475, %v2466
        %v2477 = vpop.permute.xlu0 %2476
        %2480 = vset.pattern.permute.xlu0 0
        %2481 = vperm.xlu0 %2480, %v2467
        %v2482 = vpop.permute.xlu0 %2481
        %2485 = vset.pattern.permute.xlu0 0
        %2486 = vperm.xlu0 %2485, %v2468
        %v2487 = vpop.permute.xlu0 %2486
        %v2490 = vsel %vm1480, %v2461, 0
        %v2493 = vsel %vm1480, %v2462, 0
        %v2496 = vsel %vm1480, %v2463, 0
        %v2499 = vsel %vm1480, %v2464, 0
        %2501 = vmatprep.subr.mxu0 0.0
        %2502 = vmatpush1.msra.mxu0 0.0
        %2503 = vmatprep.subr.mxu0 0.0
        %2504 = vmatpush1.msra.mxu0 0.0
        %2505 = vmatprep.subr.mxu0 0.0
        %2506 = vmatpush1.msra.mxu0 0.0
        %2507 = vmatprep.subr.mxu0 0.0
        %2508 = vmatpush1.msra.mxu0 0.0
        %2509 = vmatprep.subr.mxu0 0.0
        %2510 = vmatpush1.msra.mxu0 0.0
        %2511 = vmatprep.subr.mxu0 0.0
        %2512 = vmatpush1.msra.mxu0 0.0
        %2513 = vmatprep.subr.mxu0 0.0
        %2514 = vmatpush1.msra.mxu0 0.0
        %2515 = vmatprep.subr.mxu0 0.0
        %2516 = vmatpush1.msra.mxu0 0.0
        %2517 = vmatprep.subr.mxu0 0.0
        %2518 = vmatpush1.msra.mxu0 0.0
        %2519 = vmatprep.subr.mxu0 0.0
        %2520 = vmatpush1.msra.mxu0 0.0
        %2521 = vmatprep.subr.mxu0 0.0
        %2522 = vmatpush1.msra.mxu0 0.0
        %2523 = vmatprep.subr.mxu0 0.0
        %2524 = vmatpush1.msra.mxu0 0.0
        %2525 = vmatprep.subr.mxu0 %v2432
        %2526 = vmatpush1.msra.mxu0 %v2430
        %2527 = vmatprep.subr.mxu0 %v2400
        %2528 = vmatpush1.msra.mxu0 %v2398
        %2529 = vmatprep.subr.mxu0 %v2368
        %2530 = vmatpush1.msra.mxu0 %v2366
        %2531 = vmatprep.subr.mxu0 %v2336
        %2532 = vmatpush1.msra.mxu0 %v2334
        %2533 = vmatprep.subr.mxu0 0.0
        %2534 = vmatpush2.msra.mxu0 0.0
        %2535 = vmatprep.subr.mxu0 0.0
        %2536 = vmatpush2.msra.mxu0 0.0
        %2537 = vmatprep.subr.mxu0 0.0
        %2538 = vmatpush2.msra.mxu0 0.0
        %2539 = vmatprep.subr.mxu0 0.0
        %2540 = vmatpush2.msra.mxu0 0.0
        %2541 = vmatprep.subr.mxu0 0.0
        %2542 = vmatpush2.msra.mxu0 0.0
        %2543 = vmatprep.subr.mxu0 0.0
        %2544 = vmatpush2.msra.mxu0 0.0
        %2545 = vmatprep.subr.mxu0 0.0
        %2546 = vmatpush2.msra.mxu0 0.0
        %2547 = vmatprep.subr.mxu0 0.0
        %2548 = vmatpush2.msra.mxu0 0.0
        %2549 = vmatprep.subr.mxu0 0.0
        %2550 = vmatpush2.msra.mxu0 0.0
        %2551 = vmatprep.subr.mxu0 0.0
        %2552 = vmatpush2.msra.mxu0 0.0
        %2553 = vmatprep.subr.mxu0 0.0
        %2554 = vmatpush2.msra.mxu0 0.0
        %2555 = vmatprep.subr.mxu0 0.0
        %2556 = vmatpush2.msra.mxu0 0.0
        %2557 = vmatprep.subr.mxu0 0.0
        %2558 = vmatpush2.msra.mxu0 0.0
        %2559 = vmatprep.subr.mxu0 0.0
        %2560 = vmatpush2.msra.mxu0 0.0
        %2561 = vmatprep.subr.mxu0 0.0
        %2562 = vmatpush2.msra.mxu0 0.0
        %2563 = vmatprep.subr.mxu0 0.0
        %2564 = vmatpush2.msra.mxu0 0.0
        %2565 = vmatprep.mubr.f32.mxu0 0.0
        %2566 = vmatmul.mubr.f32.gmra.mxu0 %v2490
        %v2567 = vpop.f32.mrf.mxu0
        %v2568 = vadd.f32 %v2472, %v2567
        %v2569 = vpop.f32.mrf.mxu0
        %v2570 = vadd.f32 %v2472, %v2569
        %2571 = vmatprep.mubr.f32.mxu0 0.0
        %2572 = vmatmul.mubr.f32.gmra.mxu0 %v2493
        %v2573 = vpop.f32.mrf.mxu0
        %v2574 = vadd.f32 %v2477, %v2573
        %v2575 = vpop.f32.mrf.mxu0
        %v2576 = vadd.f32 %v2477, %v2575
        %2577 = vmatprep.mubr.f32.mxu0 0.0
        %2578 = vmatmul.mubr.f32.gmra.mxu0 %v2496
        %v2579 = vpop.f32.mrf.mxu0
        %v2580 = vadd.f32 %v2482, %v2579
        %v2581 = vpop.f32.mrf.mxu0
        %v2582 = vadd.f32 %v2482, %v2581
        %2583 = vmatprep.mubr.f32.mxu0 0.0
        %2584 = vmatmul.mubr.f32.gmra.mxu0 %v2499
        %v2585 = vpop.f32.mrf.mxu0
        %v2586 = vadd.f32 %v2487, %v2585
        %v2587 = vpop.f32.mrf.mxu0
        %v2588 = vadd.f32 %v2487, %v2587
        %2589 = vdwg.mxu0
        %2590 = vmatprep.subr.mxu0 0.0
        %2591 = vmatpush1.msra.mxu0 0.0
        %2592 = vmatprep.subr.mxu0 0.0
        %2593 = vmatpush1.msra.mxu0 0.0
        %2594 = vmatprep.subr.mxu0 0.0
        %2595 = vmatpush1.msra.mxu0 0.0
        %2596 = vmatprep.subr.mxu0 0.0
        %2597 = vmatpush1.msra.mxu0 0.0
        %2598 = vmatprep.subr.mxu0 0.0
        %2599 = vmatpush1.msra.mxu0 0.0
        %2600 = vmatprep.subr.mxu0 0.0
        %2601 = vmatpush1.msra.mxu0 0.0
        %2602 = vmatprep.subr.mxu0 0.0
        %2603 = vmatpush1.msra.mxu0 0.0
        %2604 = vmatprep.subr.mxu0 0.0
        %2605 = vmatpush1.msra.mxu0 0.0
        %2606 = vmatprep.subr.mxu0 0.0
        %2607 = vmatpush1.msra.mxu0 0.0
        %2608 = vmatprep.subr.mxu0 0.0
        %2609 = vmatpush1.msra.mxu0 0.0
        %2610 = vmatprep.subr.mxu0 0.0
        %2611 = vmatpush1.msra.mxu0 0.0
        %2612 = vmatprep.subr.mxu0 0.0
        %2613 = vmatpush1.msra.mxu0 0.0
        %2614 = vmatprep.subr.mxu0 %v2436
        %2615 = vmatpush1.msra.mxu0 %v2434
        %2616 = vmatprep.subr.mxu0 %v2404
        %2617 = vmatpush1.msra.mxu0 %v2402
        %2618 = vmatprep.subr.mxu0 %v2372
        %2619 = vmatpush1.msra.mxu0 %v2370
        %2620 = vmatprep.subr.mxu0 %v2340
        %2621 = vmatpush1.msra.mxu0 %v2338
        %2622 = vmatprep.subr.mxu0 0.0
        %2623 = vmatpush2.msra.mxu0 0.0
        %2624 = vmatprep.subr.mxu0 0.0
        %2625 = vmatpush2.msra.mxu0 0.0
        %2626 = vmatprep.subr.mxu0 0.0
        %2627 = vmatpush2.msra.mxu0 0.0
        %2628 = vmatprep.subr.mxu0 0.0
        %2629 = vmatpush2.msra.mxu0 0.0
        %2630 = vmatprep.subr.mxu0 0.0
        %2631 = vmatpush2.msra.mxu0 0.0
        %2632 = vmatprep.subr.mxu0 0.0
        %2633 = vmatpush2.msra.mxu0 0.0
        %2634 = vmatprep.subr.mxu0 0.0
        %2635 = vmatpush2.msra.mxu0 0.0
        %2636 = vmatprep.subr.mxu0 0.0
        %2637 = vmatpush2.msra.mxu0 0.0
        %2638 = vmatprep.subr.mxu0 0.0
        %2639 = vmatpush2.msra.mxu0 0.0
        %2640 = vmatprep.subr.mxu0 0.0
        %2641 = vmatpush2.msra.mxu0 0.0
        %2642 = vmatprep.subr.mxu0 0.0
        %2643 = vmatpush2.msra.mxu0 0.0
        %2644 = vmatprep.subr.mxu0 0.0
        %2645 = vmatpush2.msra.mxu0 0.0
        %2646 = vmatprep.subr.mxu0 0.0
        %2647 = vmatpush2.msra.mxu0 0.0
        %2648 = vmatprep.subr.mxu0 0.0
        %2649 = vmatpush2.msra.mxu0 0.0
        %2650 = vmatprep.subr.mxu0 0.0
        %2651 = vmatpush2.msra.mxu0 0.0
        %2652 = vmatprep.subr.mxu0 0.0
        %2653 = vmatpush2.msra.mxu0 0.0
        %2654 = vmatprep.mubr.f32.mxu0 0.0
        %2655 = vmatmul.mubr.f32.gmra.mxu0 %v2490
        %v2656 = vpop.f32.mrf.mxu0
        %v2657 = vadd.f32 %v2472, %v2656
        %v2658 = vpop.f32.mrf.mxu0
        %v2659 = vadd.f32 %v2472, %v2658
        %2660 = vmatprep.mubr.f32.mxu0 0.0
        %2661 = vmatmul.mubr.f32.gmra.mxu0 %v2493
        %v2662 = vpop.f32.mrf.mxu0
        %v2663 = vadd.f32 %v2477, %v2662
        %v2664 = vpop.f32.mrf.mxu0
        %v2665 = vadd.f32 %v2477, %v2664
        %2666 = vmatprep.mubr.f32.mxu0 0.0
        %2667 = vmatmul.mubr.f32.gmra.mxu0 %v2496
        %v2668 = vpop.f32.mrf.mxu0
        %v2669 = vadd.f32 %v2482, %v2668
        %v2670 = vpop.f32.mrf.mxu0
        %v2671 = vadd.f32 %v2482, %v2670
        %2672 = vmatprep.mubr.f32.mxu0 0.0
        %2673 = vmatmul.mubr.f32.gmra.mxu0 %v2499
        %v2674 = vpop.f32.mrf.mxu0
        %v2675 = vadd.f32 %v2487, %v2674
        %v2676 = vpop.f32.mrf.mxu0
        %v2677 = vadd.f32 %v2487, %v2676
        %2678 = vdwg.mxu0
        %2679 = vmatprep.subr.mxu0 0.0
        %2680 = vmatpush1.msra.mxu0 0.0
        %2681 = vmatprep.subr.mxu0 0.0
        %2682 = vmatpush1.msra.mxu0 0.0
        %2683 = vmatprep.subr.mxu0 0.0
        %2684 = vmatpush1.msra.mxu0 0.0
        %2685 = vmatprep.subr.mxu0 0.0
        %2686 = vmatpush1.msra.mxu0 0.0
        %2687 = vmatprep.subr.mxu0 0.0
        %2688 = vmatpush1.msra.mxu0 0.0
        %2689 = vmatprep.subr.mxu0 0.0
        %2690 = vmatpush1.msra.mxu0 0.0
        %2691 = vmatprep.subr.mxu0 0.0
        %2692 = vmatpush1.msra.mxu0 0.0
        %2693 = vmatprep.subr.mxu0 0.0
        %2694 = vmatpush1.msra.mxu0 0.0
        %2695 = vmatprep.subr.mxu0 0.0
        %2696 = vmatpush1.msra.mxu0 0.0
        %2697 = vmatprep.subr.mxu0 0.0
        %2698 = vmatpush1.msra.mxu0 0.0
        %2699 = vmatprep.subr.mxu0 0.0
        %2700 = vmatpush1.msra.mxu0 0.0
        %2701 = vmatprep.subr.mxu0 0.0
        %2702 = vmatpush1.msra.mxu0 0.0
        %2703 = vmatprep.subr.mxu0 %v2440
        %2704 = vmatpush1.msra.mxu0 %v2438
        %2705 = vmatprep.subr.mxu0 %v2408
        %2706 = vmatpush1.msra.mxu0 %v2406
        %2707 = vmatprep.subr.mxu0 %v2376
        %2708 = vmatpush1.msra.mxu0 %v2374
        %2709 = vmatprep.subr.mxu0 %v2344
        %2710 = vmatpush1.msra.mxu0 %v2342
        %2711 = vmatprep.subr.mxu0 0.0
        %2712 = vmatpush2.msra.mxu0 0.0
        %2713 = vmatprep.subr.mxu0 0.0
        %2714 = vmatpush2.msra.mxu0 0.0
        %2715 = vmatprep.subr.mxu0 0.0
        %2716 = vmatpush2.msra.mxu0 0.0
        %2717 = vmatprep.subr.mxu0 0.0
        %2718 = vmatpush2.msra.mxu0 0.0
        %2719 = vmatprep.subr.mxu0 0.0
        %2720 = vmatpush2.msra.mxu0 0.0
        %2721 = vmatprep.subr.mxu0 0.0
        %2722 = vmatpush2.msra.mxu0 0.0
        %2723 = vmatprep.subr.mxu0 0.0
        %2724 = vmatpush2.msra.mxu0 0.0
        %2725 = vmatprep.subr.mxu0 0.0
        %2726 = vmatpush2.msra.mxu0 0.0
        %2727 = vmatprep.subr.mxu0 0.0
        %2728 = vmatpush2.msra.mxu0 0.0
        %2729 = vmatprep.subr.mxu0 0.0
        %2730 = vmatpush2.msra.mxu0 0.0
        %2731 = vmatprep.subr.mxu0 0.0
        %2732 = vmatpush2.msra.mxu0 0.0
        %2733 = vmatprep.subr.mxu0 0.0
        %2734 = vmatpush2.msra.mxu0 0.0
        %2735 = vmatprep.subr.mxu0 0.0
        %2736 = vmatpush2.msra.mxu0 0.0
        %2737 = vmatprep.subr.mxu0 0.0
        %2738 = vmatpush2.msra.mxu0 0.0
        %2739 = vmatprep.subr.mxu0 0.0
        %2740 = vmatpush2.msra.mxu0 0.0
        %2741 = vmatprep.subr.mxu0 0.0
        %2742 = vmatpush2.msra.mxu0 0.0
        %2743 = vmatprep.mubr.f32.mxu0 0.0
        %2744 = vmatmul.mubr.f32.gmra.mxu0 %v2490
        %v2745 = vpop.f32.mrf.mxu0
        %v2746 = vadd.f32 %v2472, %v2745
        %v2747 = vpop.f32.mrf.mxu0
        %v2748 = vadd.f32 %v2472, %v2747
        %2749 = vmatprep.mubr.f32.mxu0 0.0
        %2750 = vmatmul.mubr.f32.gmra.mxu0 %v2493
        %v2751 = vpop.f32.mrf.mxu0
        %v2752 = vadd.f32 %v2477, %v2751
        %v2753 = vpop.f32.mrf.mxu0
        %v2754 = vadd.f32 %v2477, %v2753
        %2755 = vmatprep.mubr.f32.mxu0 0.0
        %2756 = vmatmul.mubr.f32.gmra.mxu0 %v2496
        %v2757 = vpop.f32.mrf.mxu0
        %v2758 = vadd.f32 %v2482, %v2757
        %v2759 = vpop.f32.mrf.mxu0
        %v2760 = vadd.f32 %v2482, %v2759
        %2761 = vmatprep.mubr.f32.mxu0 0.0
        %2762 = vmatmul.mubr.f32.gmra.mxu0 %v2499
        %v2763 = vpop.f32.mrf.mxu0
        %v2764 = vadd.f32 %v2487, %v2763
        %v2765 = vpop.f32.mrf.mxu0
        %v2766 = vadd.f32 %v2487, %v2765
        %2767 = vdwg.mxu0
        %2768 = vmatprep.subr.mxu0 0.0
        %2769 = vmatpush1.msra.mxu0 0.0
        %2770 = vmatprep.subr.mxu0 0.0
        %2771 = vmatpush1.msra.mxu0 0.0
        %2772 = vmatprep.subr.mxu0 0.0
        %2773 = vmatpush1.msra.mxu0 0.0
        %2774 = vmatprep.subr.mxu0 0.0
        %2775 = vmatpush1.msra.mxu0 0.0
        %2776 = vmatprep.subr.mxu0 0.0
        %2777 = vmatpush1.msra.mxu0 0.0
        %2778 = vmatprep.subr.mxu0 0.0
        %2779 = vmatpush1.msra.mxu0 0.0
        %2780 = vmatprep.subr.mxu0 0.0
        %2781 = vmatpush1.msra.mxu0 0.0
        %2782 = vmatprep.subr.mxu0 0.0
        %2783 = vmatpush1.msra.mxu0 0.0
        %2784 = vmatprep.subr.mxu0 0.0
        %2785 = vmatpush1.msra.mxu0 0.0
        %2786 = vmatprep.subr.mxu0 0.0
        %2787 = vmatpush1.msra.mxu0 0.0
        %2788 = vmatprep.subr.mxu0 0.0
        %2789 = vmatpush1.msra.mxu0 0.0
        %2790 = vmatprep.subr.mxu0 0.0
        %2791 = vmatpush1.msra.mxu0 0.0
        %2792 = vmatprep.subr.mxu0 %v2444
        %2793 = vmatpush1.msra.mxu0 %v2442
        %2794 = vmatprep.subr.mxu0 %v2412
        %2795 = vmatpush1.msra.mxu0 %v2410
        %2796 = vmatprep.subr.mxu0 %v2380
        %2797 = vmatpush1.msra.mxu0 %v2378
        %2798 = vmatprep.subr.mxu0 %v2348
        %2799 = vmatpush1.msra.mxu0 %v2346
        %2800 = vmatprep.subr.mxu0 0.0
        %2801 = vmatpush2.msra.mxu0 0.0
        %2802 = vmatprep.subr.mxu0 0.0
        %2803 = vmatpush2.msra.mxu0 0.0
        %2804 = vmatprep.subr.mxu0 0.0
        %2805 = vmatpush2.msra.mxu0 0.0
        %2806 = vmatprep.subr.mxu0 0.0
        %2807 = vmatpush2.msra.mxu0 0.0
        %2808 = vmatprep.subr.mxu0 0.0
        %2809 = vmatpush2.msra.mxu0 0.0
        %2810 = vmatprep.subr.mxu0 0.0
        %2811 = vmatpush2.msra.mxu0 0.0
        %2812 = vmatprep.subr.mxu0 0.0
        %2813 = vmatpush2.msra.mxu0 0.0
        %2814 = vmatprep.subr.mxu0 0.0
        %2815 = vmatpush2.msra.mxu0 0.0
        %2816 = vmatprep.subr.mxu0 0.0
        %2817 = vmatpush2.msra.mxu0 0.0
        %2818 = vmatprep.subr.mxu0 0.0
        %2819 = vmatpush2.msra.mxu0 0.0
        %2820 = vmatprep.subr.mxu0 0.0
        %2821 = vmatpush2.msra.mxu0 0.0
        %2822 = vmatprep.subr.mxu0 0.0
        %2823 = vmatpush2.msra.mxu0 0.0
        %2824 = vmatprep.subr.mxu0 0.0
        %2825 = vmatpush2.msra.mxu0 0.0
        %2826 = vmatprep.subr.mxu0 0.0
        %2827 = vmatpush2.msra.mxu0 0.0
        %2828 = vmatprep.subr.mxu0 0.0
        %2829 = vmatpush2.msra.mxu0 0.0
        %2830 = vmatprep.subr.mxu0 0.0
        %2831 = vmatpush2.msra.mxu0 0.0
        %2832 = vmatprep.mubr.f32.mxu0 0.0
        %2833 = vmatmul.mubr.f32.gmra.mxu0 %v2490
        %v2834 = vpop.f32.mrf.mxu0
        %v2835 = vadd.f32 %v2472, %v2834
        %v2836 = vpop.f32.mrf.mxu0
        %v2837 = vadd.f32 %v2472, %v2836
        %2838 = vmatprep.mubr.f32.mxu0 0.0
        %2839 = vmatmul.mubr.f32.gmra.mxu0 %v2493
        %v2840 = vpop.f32.mrf.mxu0
        %v2841 = vadd.f32 %v2477, %v2840
        %v2842 = vpop.f32.mrf.mxu0
        %v2843 = vadd.f32 %v2477, %v2842
        %2844 = vmatprep.mubr.f32.mxu0 0.0
        %2845 = vmatmul.mubr.f32.gmra.mxu0 %v2496
        %v2846 = vpop.f32.mrf.mxu0
        %v2847 = vadd.f32 %v2482, %v2846
        %v2848 = vpop.f32.mrf.mxu0
        %v2849 = vadd.f32 %v2482, %v2848
        %2850 = vmatprep.mubr.f32.mxu0 0.0
        %2851 = vmatmul.mubr.f32.gmra.mxu0 %v2499
        %v2852 = vpop.f32.mrf.mxu0
        %v2853 = vadd.f32 %v2487, %v2852
        %v2854 = vpop.f32.mrf.mxu0
        %v2855 = vadd.f32 %v2487, %v2854
        %2856 = vdwg.mxu0
        %2857 = vmatprep.subr.mxu0 0.0
        %2858 = vmatpush1.msra.mxu0 0.0
        %2859 = vmatprep.subr.mxu0 0.0
        %2860 = vmatpush1.msra.mxu0 0.0
        %2861 = vmatprep.subr.mxu0 0.0
        %2862 = vmatpush1.msra.mxu0 0.0
        %2863 = vmatprep.subr.mxu0 0.0
        %2864 = vmatpush1.msra.mxu0 0.0
        %2865 = vmatprep.subr.mxu0 0.0
        %2866 = vmatpush1.msra.mxu0 0.0
        %2867 = vmatprep.subr.mxu0 0.0
        %2868 = vmatpush1.msra.mxu0 0.0
        %2869 = vmatprep.subr.mxu0 0.0
        %2870 = vmatpush1.msra.mxu0 0.0
        %2871 = vmatprep.subr.mxu0 0.0
        %2872 = vmatpush1.msra.mxu0 0.0
        %2873 = vmatprep.subr.mxu0 0.0
        %2874 = vmatpush1.msra.mxu0 0.0
        %2875 = vmatprep.subr.mxu0 0.0
        %2876 = vmatpush1.msra.mxu0 0.0
        %2877 = vmatprep.subr.mxu0 0.0
        %2878 = vmatpush1.msra.mxu0 0.0
        %2879 = vmatprep.subr.mxu0 0.0
        %2880 = vmatpush1.msra.mxu0 0.0
        %2881 = vmatprep.subr.mxu0 %v2448
        %2882 = vmatpush1.msra.mxu0 %v2446
        %2883 = vmatprep.subr.mxu0 %v2416
        %2884 = vmatpush1.msra.mxu0 %v2414
        %2885 = vmatprep.subr.mxu0 %v2384
        %2886 = vmatpush1.msra.mxu0 %v2382
        %2887 = vmatprep.subr.mxu0 %v2352
        %2888 = vmatpush1.msra.mxu0 %v2350
        %2889 = vmatprep.subr.mxu0 0.0
        %2890 = vmatpush2.msra.mxu0 0.0
        %2891 = vmatprep.subr.mxu0 0.0
        %2892 = vmatpush2.msra.mxu0 0.0
        %2893 = vmatprep.subr.mxu0 0.0
        %2894 = vmatpush2.msra.mxu0 0.0
        %2895 = vmatprep.subr.mxu0 0.0
        %2896 = vmatpush2.msra.mxu0 0.0
        %2897 = vmatprep.subr.mxu0 0.0
        %2898 = vmatpush2.msra.mxu0 0.0
        %2899 = vmatprep.subr.mxu0 0.0
        %2900 = vmatpush2.msra.mxu0 0.0
        %2901 = vmatprep.subr.mxu0 0.0
        %2902 = vmatpush2.msra.mxu0 0.0
        %2903 = vmatprep.subr.mxu0 0.0
        %2904 = vmatpush2.msra.mxu0 0.0
        %2905 = vmatprep.subr.mxu0 0.0
        %2906 = vmatpush2.msra.mxu0 0.0
        %2907 = vmatprep.subr.mxu0 0.0
        %2908 = vmatpush2.msra.mxu0 0.0
        %2909 = vmatprep.subr.mxu0 0.0
        %2910 = vmatpush2.msra.mxu0 0.0
        %2911 = vmatprep.subr.mxu0 0.0
        %2912 = vmatpush2.msra.mxu0 0.0
        %2913 = vmatprep.subr.mxu0 0.0
        %2914 = vmatpush2.msra.mxu0 0.0
        %2915 = vmatprep.subr.mxu0 0.0
        %2916 = vmatpush2.msra.mxu0 0.0
        %2917 = vmatprep.subr.mxu0 0.0
        %2918 = vmatpush2.msra.mxu0 0.0
        %2919 = vmatprep.subr.mxu0 0.0
        %2920 = vmatpush2.msra.mxu0 0.0
        %2921 = vmatprep.mubr.f32.mxu0 0.0
        %2922 = vmatmul.mubr.f32.gmra.mxu0 %v2490
        %v2923 = vpop.f32.mrf.mxu0
        %v2924 = vadd.f32 %v2472, %v2923
        %v2925 = vpop.f32.mrf.mxu0
        %v2926 = vadd.f32 %v2472, %v2925
        %2927 = vmatprep.mubr.f32.mxu0 0.0
        %2928 = vmatmul.mubr.f32.gmra.mxu0 %v2493
        %v2929 = vpop.f32.mrf.mxu0
        %v2930 = vadd.f32 %v2477, %v2929
        %v2931 = vpop.f32.mrf.mxu0
        %v2932 = vadd.f32 %v2477, %v2931
        %2933 = vmatprep.mubr.f32.mxu0 0.0
        %2934 = vmatmul.mubr.f32.gmra.mxu0 %v2496
        %v2935 = vpop.f32.mrf.mxu0
        %v2936 = vadd.f32 %v2482, %v2935
        %v2937 = vpop.f32.mrf.mxu0
        %v2938 = vadd.f32 %v2482, %v2937
        %2939 = vmatprep.mubr.f32.mxu0 0.0
        %2940 = vmatmul.mubr.f32.gmra.mxu0 %v2499
        %v2941 = vpop.f32.mrf.mxu0
        %v2942 = vadd.f32 %v2487, %v2941
        %v2943 = vpop.f32.mrf.mxu0
        %v2944 = vadd.f32 %v2487, %v2943
        %2945 = vdwg.mxu0
        %2946 = vmatprep.subr.mxu0 0.0
        %2947 = vmatpush1.msra.mxu0 0.0
        %2948 = vmatprep.subr.mxu0 0.0
        %2949 = vmatpush1.msra.mxu0 0.0
        %2950 = vmatprep.subr.mxu0 0.0
        %2951 = vmatpush1.msra.mxu0 0.0
        %2952 = vmatprep.subr.mxu0 0.0
        %2953 = vmatpush1.msra.mxu0 0.0
        %2954 = vmatprep.subr.mxu0 0.0
        %2955 = vmatpush1.msra.mxu0 0.0
        %2956 = vmatprep.subr.mxu0 0.0
        %2957 = vmatpush1.msra.mxu0 0.0
        %2958 = vmatprep.subr.mxu0 0.0
        %2959 = vmatpush1.msra.mxu0 0.0
        %2960 = vmatprep.subr.mxu0 0.0
        %2961 = vmatpush1.msra.mxu0 0.0
        %2962 = vmatprep.subr.mxu0 0.0
        %2963 = vmatpush1.msra.mxu0 0.0
        %2964 = vmatprep.subr.mxu0 0.0
        %2965 = vmatpush1.msra.mxu0 0.0
        %2966 = vmatprep.subr.mxu0 0.0
        %2967 = vmatpush1.msra.mxu0 0.0
        %2968 = vmatprep.subr.mxu0 0.0
        %2969 = vmatpush1.msra.mxu0 0.0
        %2970 = vmatprep.subr.mxu0 %v2452
        %2971 = vmatpush1.msra.mxu0 %v2450
        %2972 = vmatprep.subr.mxu0 %v2420
        %2973 = vmatpush1.msra.mxu0 %v2418
        %2974 = vmatprep.subr.mxu0 %v2388
        %2975 = vmatpush1.msra.mxu0 %v2386
        %2976 = vmatprep.subr.mxu0 %v2356
        %2977 = vmatpush1.msra.mxu0 %v2354
        %2978 = vmatprep.subr.mxu0 0.0
        %2979 = vmatpush2.msra.mxu0 0.0
        %2980 = vmatprep.subr.mxu0 0.0
        %2981 = vmatpush2.msra.mxu0 0.0
        %2982 = vmatprep.subr.mxu0 0.0
        %2983 = vmatpush2.msra.mxu0 0.0
        %2984 = vmatprep.subr.mxu0 0.0
        %2985 = vmatpush2.msra.mxu0 0.0
        %2986 = vmatprep.subr.mxu0 0.0
        %2987 = vmatpush2.msra.mxu0 0.0
        %2988 = vmatprep.subr.mxu0 0.0
        %2989 = vmatpush2.msra.mxu0 0.0
        %2990 = vmatprep.subr.mxu0 0.0
        %2991 = vmatpush2.msra.mxu0 0.0
        %2992 = vmatprep.subr.mxu0 0.0
        %2993 = vmatpush2.msra.mxu0 0.0
        %2994 = vmatprep.subr.mxu0 0.0
        %2995 = vmatpush2.msra.mxu0 0.0
        %2996 = vmatprep.subr.mxu0 0.0
        %2997 = vmatpush2.msra.mxu0 0.0
        %2998 = vmatprep.subr.mxu0 0.0
        %2999 = vmatpush2.msra.mxu0 0.0
        %3000 = vmatprep.subr.mxu0 0.0
        %3001 = vmatpush2.msra.mxu0 0.0
        %3002 = vmatprep.subr.mxu0 0.0
        %3003 = vmatpush2.msra.mxu0 0.0
        %3004 = vmatprep.subr.mxu0 0.0
        %3005 = vmatpush2.msra.mxu0 0.0
        %3006 = vmatprep.subr.mxu0 0.0
        %3007 = vmatpush2.msra.mxu0 0.0
        %3008 = vmatprep.subr.mxu0 0.0
        %3009 = vmatpush2.msra.mxu0 0.0
        %3010 = vmatprep.mubr.f32.mxu0 0.0
        %3011 = vmatmul.mubr.f32.gmra.mxu0 %v2490
        %v3012 = vpop.f32.mrf.mxu0
        %v3013 = vadd.f32 %v2472, %v3012
        %v3014 = vpop.f32.mrf.mxu0
        %v3015 = vadd.f32 %v2472, %v3014
        %3016 = vmatprep.mubr.f32.mxu0 0.0
        %3017 = vmatmul.mubr.f32.gmra.mxu0 %v2493
        %v3018 = vpop.f32.mrf.mxu0
        %v3019 = vadd.f32 %v2477, %v3018
        %v3020 = vpop.f32.mrf.mxu0
        %v3021 = vadd.f32 %v2477, %v3020
        %3022 = vmatprep.mubr.f32.mxu0 0.0
        %3023 = vmatmul.mubr.f32.gmra.mxu0 %v2496
        %v3024 = vpop.f32.mrf.mxu0
        %v3025 = vadd.f32 %v2482, %v3024
        %v3026 = vpop.f32.mrf.mxu0
        %v3027 = vadd.f32 %v2482, %v3026
        %3028 = vmatprep.mubr.f32.mxu0 0.0
        %3029 = vmatmul.mubr.f32.gmra.mxu0 %v2499
        %v3030 = vpop.f32.mrf.mxu0
        %v3031 = vadd.f32 %v2487, %v3030
        %v3032 = vpop.f32.mrf.mxu0
        %v3033 = vadd.f32 %v2487, %v3032
        %3034 = vdwg.mxu0
        %3035 = vmatprep.subr.mxu0 0.0
        %3036 = vmatpush1.msra.mxu0 0.0
        %3037 = vmatprep.subr.mxu0 0.0
        %3038 = vmatpush1.msra.mxu0 0.0
        %3039 = vmatprep.subr.mxu0 0.0
        %3040 = vmatpush1.msra.mxu0 0.0
        %3041 = vmatprep.subr.mxu0 0.0
        %3042 = vmatpush1.msra.mxu0 0.0
        %3043 = vmatprep.subr.mxu0 0.0
        %3044 = vmatpush1.msra.mxu0 0.0
        %3045 = vmatprep.subr.mxu0 0.0
        %3046 = vmatpush1.msra.mxu0 0.0
        %3047 = vmatprep.subr.mxu0 0.0
        %3048 = vmatpush1.msra.mxu0 0.0
        %3049 = vmatprep.subr.mxu0 0.0
        %3050 = vmatpush1.msra.mxu0 0.0
        %3051 = vmatprep.subr.mxu0 0.0
        %3052 = vmatpush1.msra.mxu0 0.0
        %3053 = vmatprep.subr.mxu0 0.0
        %3054 = vmatpush1.msra.mxu0 0.0
        %3055 = vmatprep.subr.mxu0 0.0
        %3056 = vmatpush1.msra.mxu0 0.0
        %3057 = vmatprep.subr.mxu0 0.0
        %3058 = vmatpush1.msra.mxu0 0.0
        %3059 = vmatprep.subr.mxu0 %v2456
        %3060 = vmatpush1.msra.mxu0 %v2454
        %3061 = vmatprep.subr.mxu0 %v2424
        %3062 = vmatpush1.msra.mxu0 %v2422
        %3063 = vmatprep.subr.mxu0 %v2392
        %3064 = vmatpush1.msra.mxu0 %v2390
        %3065 = vmatprep.subr.mxu0 %v2360
        %3066 = vmatpush1.msra.mxu0 %v2358
        %3067 = vmatprep.subr.mxu0 0.0
        %3068 = vmatpush2.msra.mxu0 0.0
        %3069 = vmatprep.subr.mxu0 0.0
        %3070 = vmatpush2.msra.mxu0 0.0
        %3071 = vmatprep.subr.mxu0 0.0
        %3072 = vmatpush2.msra.mxu0 0.0
        %3073 = vmatprep.subr.mxu0 0.0
        %3074 = vmatpush2.msra.mxu0 0.0
        %3075 = vmatprep.subr.mxu0 0.0
        %3076 = vmatpush2.msra.mxu0 0.0
        %3077 = vmatprep.subr.mxu0 0.0
        %3078 = vmatpush2.msra.mxu0 0.0
        %3079 = vmatprep.subr.mxu0 0.0
        %3080 = vmatpush2.msra.mxu0 0.0
        %3081 = vmatprep.subr.mxu0 0.0
        %3082 = vmatpush2.msra.mxu0 0.0
        %3083 = vmatprep.subr.mxu0 0.0
        %3084 = vmatpush2.msra.mxu0 0.0
        %3085 = vmatprep.subr.mxu0 0.0
        %3086 = vmatpush2.msra.mxu0 0.0
        %3087 = vmatprep.subr.mxu0 0.0
        %3088 = vmatpush2.msra.mxu0 0.0
        %3089 = vmatprep.subr.mxu0 0.0
        %3090 = vmatpush2.msra.mxu0 0.0
        %3091 = vmatprep.subr.mxu0 0.0
        %3092 = vmatpush2.msra.mxu0 0.0
        %3093 = vmatprep.subr.mxu0 0.0
        %3094 = vmatpush2.msra.mxu0 0.0
        %3095 = vmatprep.subr.mxu0 0.0
        %3096 = vmatpush2.msra.mxu0 0.0
        %3097 = vmatprep.subr.mxu0 0.0
        %3098 = vmatpush2.msra.mxu0 0.0
        %3099 = vmatprep.mubr.f32.mxu0 0.0
        %3100 = vmatmul.mubr.f32.gmra.mxu0 %v2490
        %v3101 = vpop.f32.mrf.mxu0
        %v3102 = vadd.f32 %v2472, %v3101
        %v3103 = vpop.f32.mrf.mxu0
        %v3104 = vadd.f32 %v2472, %v3103
        %3105 = vmatprep.mubr.f32.mxu0 0.0
        %3106 = vmatmul.mubr.f32.gmra.mxu0 %v2493
        %v3107 = vpop.f32.mrf.mxu0
        %v3108 = vadd.f32 %v2477, %v3107
        %v3109 = vpop.f32.mrf.mxu0
        %v3110 = vadd.f32 %v2477, %v3109
        %3111 = vmatprep.mubr.f32.mxu0 0.0
        %3112 = vmatmul.mubr.f32.gmra.mxu0 %v2496
        %v3113 = vpop.f32.mrf.mxu0
        %v3114 = vadd.f32 %v2482, %v3113
        %v3115 = vpop.f32.mrf.mxu0
        %v3116 = vadd.f32 %v2482, %v3115
        %3117 = vmatprep.mubr.f32.mxu0 0.0
        %3118 = vmatmul.mubr.f32.gmra.mxu0 %v2499
        %v3119 = vpop.f32.mrf.mxu0
        %v3120 = vadd.f32 %v2487, %v3119
        %v3121 = vpop.f32.mrf.mxu0
        %v3122 = vadd.f32 %v2487, %v3121
        %3123 = vdwg.mxu0
        %3124 = vmatprep.subr.mxu0 0.0
        %3125 = vmatpush1.msra.mxu0 0.0
        %3126 = vmatprep.subr.mxu0 0.0
        %3127 = vmatpush1.msra.mxu0 0.0
        %3128 = vmatprep.subr.mxu0 0.0
        %3129 = vmatpush1.msra.mxu0 0.0
        %3130 = vmatprep.subr.mxu0 0.0
        %3131 = vmatpush1.msra.mxu0 0.0
        %3132 = vmatprep.subr.mxu0 0.0
        %3133 = vmatpush1.msra.mxu0 0.0
        %3134 = vmatprep.subr.mxu0 0.0
        %3135 = vmatpush1.msra.mxu0 0.0
        %3136 = vmatprep.subr.mxu0 0.0
        %3137 = vmatpush1.msra.mxu0 0.0
        %3138 = vmatprep.subr.mxu0 0.0
        %3139 = vmatpush1.msra.mxu0 0.0
        %3140 = vmatprep.subr.mxu0 0.0
        %3141 = vmatpush1.msra.mxu0 0.0
        %3142 = vmatprep.subr.mxu0 0.0
        %3143 = vmatpush1.msra.mxu0 0.0
        %3144 = vmatprep.subr.mxu0 0.0
        %3145 = vmatpush1.msra.mxu0 0.0
        %3146 = vmatprep.subr.mxu0 0.0
        %3147 = vmatpush1.msra.mxu0 0.0
        %3148 = vmatprep.subr.mxu0 %v2460
        %3149 = vmatpush1.msra.mxu0 %v2458
        %3150 = vmatprep.subr.mxu0 %v2428
        %3151 = vmatpush1.msra.mxu0 %v2426
        %3152 = vmatprep.subr.mxu0 %v2396
        %3153 = vmatpush1.msra.mxu0 %v2394
        %3154 = vmatprep.subr.mxu0 %v2364
        %3155 = vmatpush1.msra.mxu0 %v2362
        %3156 = vmatprep.subr.mxu0 0.0
        %3157 = vmatpush2.msra.mxu0 0.0
        %3158 = vmatprep.subr.mxu0 0.0
        %3159 = vmatpush2.msra.mxu0 0.0
        %3160 = vmatprep.subr.mxu0 0.0
        %3161 = vmatpush2.msra.mxu0 0.0
        %3162 = vmatprep.subr.mxu0 0.0
        %3163 = vmatpush2.msra.mxu0 0.0
        %3164 = vmatprep.subr.mxu0 0.0
        %3165 = vmatpush2.msra.mxu0 0.0
        %3166 = vmatprep.subr.mxu0 0.0
        %3167 = vmatpush2.msra.mxu0 0.0
        %3168 = vmatprep.subr.mxu0 0.0
        %3169 = vmatpush2.msra.mxu0 0.0
        %3170 = vmatprep.subr.mxu0 0.0
        %3171 = vmatpush2.msra.mxu0 0.0
        %3172 = vmatprep.subr.mxu0 0.0
        %3173 = vmatpush2.msra.mxu0 0.0
        %3174 = vmatprep.subr.mxu0 0.0
        %3175 = vmatpush2.msra.mxu0 0.0
        %3176 = vmatprep.subr.mxu0 0.0
        %3177 = vmatpush2.msra.mxu0 0.0
        %3178 = vmatprep.subr.mxu0 0.0
        %3179 = vmatpush2.msra.mxu0 0.0
        %3180 = vmatprep.subr.mxu0 0.0
        %3181 = vmatpush2.msra.mxu0 0.0
        %3182 = vmatprep.subr.mxu0 0.0
        %3183 = vmatpush2.msra.mxu0 0.0
        %3184 = vmatprep.subr.mxu0 0.0
        %3185 = vmatpush2.msra.mxu0 0.0
        %3186 = vmatprep.subr.mxu0 0.0
        %3187 = vmatpush2.msra.mxu0 0.0
        %3188 = vmatprep.mubr.f32.mxu0 0.0
        %3189 = vmatmul.mubr.f32.gmra.mxu0 %v2490
        %v3190 = vpop.f32.mrf.mxu0
        %v3191 = vadd.f32 %v2472, %v3190
        %v3192 = vpop.f32.mrf.mxu0
        %v3193 = vadd.f32 %v2472, %v3192
        %3194 = vmatprep.mubr.f32.mxu0 0.0
        %3195 = vmatmul.mubr.f32.gmra.mxu0 %v2493
        %v3196 = vpop.f32.mrf.mxu0
        %v3197 = vadd.f32 %v2477, %v3196
        %v3198 = vpop.f32.mrf.mxu0
        %v3199 = vadd.f32 %v2477, %v3198
        %3200 = vmatprep.mubr.f32.mxu0 0.0
        %3201 = vmatmul.mubr.f32.gmra.mxu0 %v2496
        %v3202 = vpop.f32.mrf.mxu0
        %v3203 = vadd.f32 %v2482, %v3202
        %v3204 = vpop.f32.mrf.mxu0
        %v3205 = vadd.f32 %v2482, %v3204
        %3206 = vmatprep.mubr.f32.mxu0 0.0
        %3207 = vmatmul.mubr.f32.gmra.mxu0 %v2499
        %v3208 = vpop.f32.mrf.mxu0
        %v3209 = vadd.f32 %v2487, %v3208
        %v3210 = vpop.f32.mrf.mxu0
        %v3211 = vadd.f32 %v2487, %v3210
        %3212 = vdwg.mxu0
        %v3213 = vmul.f32 %v2568, %v2568
        %v3214 = vmul.f32 %v2570, %v2570
        %v3215 = vmul.f32 %v2657, %v2657
        %v3216 = vmul.f32 %v2659, %v2659
        %v3217 = vmul.f32 %v2746, %v2746
        %v3218 = vmul.f32 %v2748, %v2748
        %v3219 = vmul.f32 %v2835, %v2835
        %v3220 = vmul.f32 %v2837, %v2837
        %v3221 = vmul.f32 %v2924, %v2924
        %v3222 = vmul.f32 %v2926, %v2926
        %v3223 = vmul.f32 %v3013, %v3013
        %v3224 = vmul.f32 %v3015, %v3015
        %v3225 = vmul.f32 %v3102, %v3102
        %v3226 = vmul.f32 %v3104, %v3104
        %v3227 = vmul.f32 %v3191, %v3191
        %v3228 = vmul.f32 %v3193, %v3193
        %v3229 = vmul.f32 %v2574, %v2574
        %v3230 = vmul.f32 %v2576, %v2576
        %v3231 = vmul.f32 %v2663, %v2663
        %v3232 = vmul.f32 %v2665, %v2665
        %v3233 = vmul.f32 %v2752, %v2752
        %v3234 = vmul.f32 %v2754, %v2754
        %v3235 = vmul.f32 %v2841, %v2841
        %v3236 = vmul.f32 %v2843, %v2843
        %v3237 = vmul.f32 %v2930, %v2930
        %v3238 = vmul.f32 %v2932, %v2932
        %v3239 = vmul.f32 %v3019, %v3019
        %v3240 = vmul.f32 %v3021, %v3021
        %v3241 = vmul.f32 %v3108, %v3108
        %v3242 = vmul.f32 %v3110, %v3110
        %v3243 = vmul.f32 %v3197, %v3197
        %v3244 = vmul.f32 %v3199, %v3199
        %v3245 = vmul.f32 %v2580, %v2580
        %v3246 = vmul.f32 %v2582, %v2582
        %v3247 = vmul.f32 %v2669, %v2669
        %v3248 = vmul.f32 %v2671, %v2671
        %v3249 = vmul.f32 %v2758, %v2758
        %v3250 = vmul.f32 %v2760, %v2760
        %v3251 = vmul.f32 %v2847, %v2847
        %v3252 = vmul.f32 %v2849, %v2849
        %v3253 = vmul.f32 %v2936, %v2936
        %v3254 = vmul.f32 %v2938, %v2938
        %v3255 = vmul.f32 %v3025, %v3025
        %v3256 = vmul.f32 %v3027, %v3027
        %v3257 = vmul.f32 %v3114, %v3114
        %v3258 = vmul.f32 %v3116, %v3116
        %v3259 = vmul.f32 %v3203, %v3203
        %v3260 = vmul.f32 %v3205, %v3205
        %v3261 = vmul.f32 %v2586, %v2586
        %v3262 = vmul.f32 %v2588, %v2588
        %v3263 = vmul.f32 %v2675, %v2675
        %v3264 = vmul.f32 %v2677, %v2677
        %v3265 = vmul.f32 %v2764, %v2764
        %v3266 = vmul.f32 %v2766, %v2766
        %v3267 = vmul.f32 %v2853, %v2853
        %v3268 = vmul.f32 %v2855, %v2855
        %v3269 = vmul.f32 %v2942, %v2942
        %v3270 = vmul.f32 %v2944, %v2944
        %v3271 = vmul.f32 %v3031, %v3031
        %v3272 = vmul.f32 %v3033, %v3033
        %v3273 = vmul.f32 %v3120, %v3120
        %v3274 = vmul.f32 %v3122, %v3122
        %v3275 = vmul.f32 %v3209, %v3209
        %v3276 = vmul.f32 %v3211, %v3211
        %v3277 = vsub.f32 0.0, %v3213
        %v3278 = vsub.f32 0.0, %v3214
        %v3279 = vsub.f32 0.0, %v3215
        %v3280 = vsub.f32 0.0, %v3216
        %v3281 = vsub.f32 0.0, %v3217
        %v3282 = vsub.f32 0.0, %v3218
        %v3283 = vsub.f32 0.0, %v3219
        %v3284 = vsub.f32 0.0, %v3220
        %v3285 = vsub.f32 0.0, %v3221
        %v3286 = vsub.f32 0.0, %v3222
        %v3287 = vsub.f32 0.0, %v3223
        %v3288 = vsub.f32 0.0, %v3224
        %v3289 = vsub.f32 0.0, %v3225
        %v3290 = vsub.f32 0.0, %v3226
        %v3291 = vsub.f32 0.0, %v3227
        %v3292 = vsub.f32 0.0, %v3228
        %v3293 = vsub.f32 0.0, %v3229
        %v3294 = vsub.f32 0.0, %v3230
        %v3295 = vsub.f32 0.0, %v3231
        %v3296 = vsub.f32 0.0, %v3232
        %v3297 = vsub.f32 0.0, %v3233
        %v3298 = vsub.f32 0.0, %v3234
        %v3299 = vsub.f32 0.0, %v3235
        %v3300 = vsub.f32 0.0, %v3236
        %v3301 = vsub.f32 0.0, %v3237
        %v3302 = vsub.f32 0.0, %v3238
        %v3303 = vsub.f32 0.0, %v3239
        %v3304 = vsub.f32 0.0, %v3240
        %v3305 = vsub.f32 0.0, %v3241
        %v3306 = vsub.f32 0.0, %v3242
        %v3307 = vsub.f32 0.0, %v3243
        %v3308 = vsub.f32 0.0, %v3244
        %v3309 = vsub.f32 0.0, %v3245
        %v3310 = vsub.f32 0.0, %v3246
        %v3311 = vsub.f32 0.0, %v3247
        %v3312 = vsub.f32 0.0, %v3248
        %v3313 = vsub.f32 0.0, %v3249
        %v3314 = vsub.f32 0.0, %v3250
        %v3315 = vsub.f32 0.0, %v3251
        %v3316 = vsub.f32 0.0, %v3252
        %v3317 = vsub.f32 0.0, %v3253
        %v3318 = vsub.f32 0.0, %v3254
        %v3319 = vsub.f32 0.0, %v3255
        %v3320 = vsub.f32 0.0, %v3256
        %v3321 = vsub.f32 0.0, %v3257
        %v3322 = vsub.f32 0.0, %v3258
        %v3323 = vsub.f32 0.0, %v3259
        %v3324 = vsub.f32 0.0, %v3260
        %v3325 = vsub.f32 0.0, %v3261
        %v3326 = vsub.f32 0.0, %v3262
        %v3327 = vsub.f32 0.0, %v3263
        %v3328 = vsub.f32 0.0, %v3264
        %v3329 = vsub.f32 0.0, %v3265
        %v3330 = vsub.f32 0.0, %v3266
        %v3331 = vsub.f32 0.0, %v3267
        %v3332 = vsub.f32 0.0, %v3268
        %v3333 = vsub.f32 0.0, %v3269
        %v3334 = vsub.f32 0.0, %v3270
        %v3335 = vsub.f32 0.0, %v3271
        %v3336 = vsub.f32 0.0, %v3272
        %v3337 = vsub.f32 0.0, %v3273
        %v3338 = vsub.f32 0.0, %v3274
        %v3339 = vsub.f32 0.0, %v3275
        %v3340 = vsub.f32 0.0, %v3276
        %v3341 = vmul.f32 %v3277, 1.442695
        %v3342 = vpow.pop %v3341
        %v3343 = vmul.f32 %v3278, 1.442695
        %v3344 = vpow.pop %v3343
        %v3345 = vmul.f32 %v3279, 1.442695
        %v3346 = vpow.pop %v3345
        %v3347 = vmul.f32 %v3280, 1.442695
        %v3348 = vpow.pop %v3347
        %v3349 = vmul.f32 %v3281, 1.442695
        %v3350 = vpow.pop %v3349
        %v3351 = vmul.f32 %v3282, 1.442695
        %v3352 = vpow.pop %v3351
        %v3353 = vmul.f32 %v3283, 1.442695
        %v3354 = vpow.pop %v3353
        %v3355 = vmul.f32 %v3284, 1.442695
        %v3356 = vpow.pop %v3355
        %v3357 = vmul.f32 %v3285, 1.442695
        %v3358 = vpow.pop %v3357
        %v3359 = vmul.f32 %v3286, 1.442695
        %v3360 = vpow.pop %v3359
        %v3361 = vmul.f32 %v3287, 1.442695
        %v3362 = vpow.pop %v3361
        %v3363 = vmul.f32 %v3288, 1.442695
        %v3364 = vpow.pop %v3363
        %v3365 = vmul.f32 %v3289, 1.442695
        %v3366 = vpow.pop %v3365
        %v3367 = vmul.f32 %v3290, 1.442695
        %v3368 = vpow.pop %v3367
        %v3369 = vmul.f32 %v3291, 1.442695
        %v3370 = vpow.pop %v3369
        %v3371 = vmul.f32 %v3292, 1.442695
        %v3372 = vpow.pop %v3371
        %v3373 = vmul.f32 %v3293, 1.442695
        %v3374 = vpow.pop %v3373
        %v3375 = vmul.f32 %v3294, 1.442695
        %v3376 = vpow.pop %v3375
        %v3377 = vmul.f32 %v3295, 1.442695
        %v3378 = vpow.pop %v3377
        %v3379 = vmul.f32 %v3296, 1.442695
        %v3380 = vpow.pop %v3379
        %v3381 = vmul.f32 %v3297, 1.442695
        %v3382 = vpow.pop %v3381
        %v3383 = vmul.f32 %v3298, 1.442695
        %v3384 = vpow.pop %v3383
        %v3385 = vmul.f32 %v3299, 1.442695
        %v3386 = vpow.pop %v3385
        %v3387 = vmul.f32 %v3300, 1.442695
        %v3388 = vpow.pop %v3387
        %v3389 = vmul.f32 %v3301, 1.442695
        %v3390 = vpow.pop %v3389
        %v3391 = vmul.f32 %v3302, 1.442695
        %v3392 = vpow.pop %v3391
        %v3393 = vmul.f32 %v3303, 1.442695
        %v3394 = vpow.pop %v3393
        %v3395 = vmul.f32 %v3304, 1.442695
        %v3396 = vpow.pop %v3395
        %v3397 = vmul.f32 %v3305, 1.442695
        %v3398 = vpow.pop %v3397
        %v3399 = vmul.f32 %v3306, 1.442695
        %v3400 = vpow.pop %v3399
        %v3401 = vmul.f32 %v3307, 1.442695
        %v3402 = vpow.pop %v3401
        %v3403 = vmul.f32 %v3308, 1.442695
        %v3404 = vpow.pop %v3403
        %v3405 = vmul.f32 %v3309, 1.442695
        %v3406 = vpow.pop %v3405
        %v3407 = vmul.f32 %v3310, 1.442695
        %v3408 = vpow.pop %v3407
        %v3409 = vmul.f32 %v3311, 1.442695
        %v3410 = vpow.pop %v3409
        %v3411 = vmul.f32 %v3312, 1.442695
        %v3412 = vpow.pop %v3411
        %v3413 = vmul.f32 %v3313, 1.442695
        %v3414 = vpow.pop %v3413
        %v3415 = vmul.f32 %v3314, 1.442695
        %v3416 = vpow.pop %v3415
        %v3417 = vmul.f32 %v3315, 1.442695
        %v3418 = vpow.pop %v3417
        %v3419 = vmul.f32 %v3316, 1.442695
        %v3420 = vpow.pop %v3419
        %v3421 = vmul.f32 %v3317, 1.442695
        %v3422 = vpow.pop %v3421
        %v3423 = vmul.f32 %v3318, 1.442695
        %v3424 = vpow.pop %v3423
        %v3425 = vmul.f32 %v3319, 1.442695
        %v3426 = vpow.pop %v3425
        %v3427 = vmul.f32 %v3320, 1.442695
        %v3428 = vpow.pop %v3427
        %v3429 = vmul.f32 %v3321, 1.442695
        %v3430 = vpow.pop %v3429
        %v3431 = vmul.f32 %v3322, 1.442695
        %v3432 = vpow.pop %v3431
        %v3433 = vmul.f32 %v3323, 1.442695
        %v3434 = vpow.pop %v3433
        %v3435 = vmul.f32 %v3324, 1.442695
        %v3436 = vpow.pop %v3435
        %v3437 = vmul.f32 %v3325, 1.442695
        %v3438 = vpow.pop %v3437
        %v3439 = vmul.f32 %v3326, 1.442695
        %v3440 = vpow.pop %v3439
        %v3441 = vmul.f32 %v3327, 1.442695
        %v3442 = vpow.pop %v3441
        %v3443 = vmul.f32 %v3328, 1.442695
        %v3444 = vpow.pop %v3443
        %v3445 = vmul.f32 %v3329, 1.442695
        %v3446 = vpow.pop %v3445
        %v3447 = vmul.f32 %v3330, 1.442695
        %v3448 = vpow.pop %v3447
        %v3449 = vmul.f32 %v3331, 1.442695
        %v3450 = vpow.pop %v3449
        %v3451 = vmul.f32 %v3332, 1.442695
        %v3452 = vpow.pop %v3451
        %v3453 = vmul.f32 %v3333, 1.442695
        %v3454 = vpow.pop %v3453
        %v3455 = vmul.f32 %v3334, 1.442695
        %v3456 = vpow.pop %v3455
        %v3457 = vmul.f32 %v3335, 1.442695
        %v3458 = vpow.pop %v3457
        %v3459 = vmul.f32 %v3336, 1.442695
        %v3460 = vpow.pop %v3459
        %v3461 = vmul.f32 %v3337, 1.442695
        %v3462 = vpow.pop %v3461
        %v3463 = vmul.f32 %v3338, 1.442695
        %v3464 = vpow.pop %v3463
        %v3465 = vmul.f32 %v3339, 1.442695
        %v3466 = vpow.pop %v3465
        %v3467 = vmul.f32 %v3340, 1.442695
        %v3468 = vpow.pop %v3467
        %v3469 = vld [vmem:[%s7] sm:$0x7]
        %v3470 = vld [vmem:[%s8] sm:$0x7]
        %3472 = vset.pattern.permute.xlu0 0
        %3473 = vperm.xlu0 %3472, %v3470
        %v3474 = vpop.permute.xlu0 %3473
        %v3477 = vsel %vm1480, %v3469, 0
        %3479 = vmatprep.subr.mxu0 0.0
        %3480 = vmatpush1.msra.mxu0 0.0
        %3481 = vmatprep.subr.mxu0 0.0
        %3482 = vmatpush1.msra.mxu0 0.0
        %3483 = vmatprep.subr.mxu0 0.0
        %3484 = vmatpush1.msra.mxu0 0.0
        %3485 = vmatprep.subr.mxu0 0.0
        %3486 = vmatpush1.msra.mxu0 0.0
        %3487 = vmatprep.subr.mxu0 0.0
        %3488 = vmatpush1.msra.mxu0 0.0
        %3489 = vmatprep.subr.mxu0 0.0
        %3490 = vmatpush1.msra.mxu0 0.0
        %3491 = vmatprep.subr.mxu0 0.0
        %3492 = vmatpush1.msra.mxu0 0.0
        %3493 = vmatprep.subr.mxu0 0.0
        %3494 = vmatpush1.msra.mxu0 0.0
        %3495 = vmatprep.subr.mxu0 0.0
        %3496 = vmatpush1.msra.mxu0 0.0
        %3497 = vmatprep.subr.mxu0 0.0
        %3498 = vmatpush1.msra.mxu0 0.0
        %3499 = vmatprep.subr.mxu0 0.0
        %3500 = vmatpush1.msra.mxu0 0.0
        %3501 = vmatprep.subr.mxu0 0.0
        %3502 = vmatpush1.msra.mxu0 0.0
        %3503 = vmatprep.subr.mxu0 %v3440
        %3504 = vmatpush1.msra.mxu0 %v3438
        %3505 = vmatprep.subr.mxu0 %v3408
        %3506 = vmatpush1.msra.mxu0 %v3406
        %3507 = vmatprep.subr.mxu0 %v3376
        %3508 = vmatpush1.msra.mxu0 %v3374
        %3509 = vmatprep.subr.mxu0 %v3344
        %3510 = vmatpush1.msra.mxu0 %v3342
        %3511 = vmatprep.subr.mxu0 0.0
        %3512 = vmatpush2.msra.mxu0 0.0
        %3513 = vmatprep.subr.mxu0 0.0
        %3514 = vmatpush2.msra.mxu0 0.0
        %3515 = vmatprep.subr.mxu0 0.0
        %3516 = vmatpush2.msra.mxu0 0.0
        %3517 = vmatprep.subr.mxu0 0.0
        %3518 = vmatpush2.msra.mxu0 0.0
        %3519 = vmatprep.subr.mxu0 0.0
        %3520 = vmatpush2.msra.mxu0 0.0
        %3521 = vmatprep.subr.mxu0 0.0
        %3522 = vmatpush2.msra.mxu0 0.0
        %3523 = vmatprep.subr.mxu0 0.0
        %3524 = vmatpush2.msra.mxu0 0.0
        %3525 = vmatprep.subr.mxu0 0.0
        %3526 = vmatpush2.msra.mxu0 0.0
        %3527 = vmatprep.subr.mxu0 0.0
        %3528 = vmatpush2.msra.mxu0 0.0
        %3529 = vmatprep.subr.mxu0 0.0
        %3530 = vmatpush2.msra.mxu0 0.0
        %3531 = vmatprep.subr.mxu0 0.0
        %3532 = vmatpush2.msra.mxu0 0.0
        %3533 = vmatprep.subr.mxu0 0.0
        %3534 = vmatpush2.msra.mxu0 0.0
        %3535 = vmatprep.subr.mxu0 0.0
        %3536 = vmatpush2.msra.mxu0 0.0
        %3537 = vmatprep.subr.mxu0 0.0
        %3538 = vmatpush2.msra.mxu0 0.0
        %3539 = vmatprep.subr.mxu0 0.0
        %3540 = vmatpush2.msra.mxu0 0.0
        %3541 = vmatprep.subr.mxu0 0.0
        %3542 = vmatpush2.msra.mxu0 0.0
        %3543 = vmatprep.mubr.f32.mxu0 0.0
        %3544 = vmatmul.mubr.f32.gmra.mxu0 %v3477
        %v3545 = vpop.f32.mrf.mxu0
        %v3546 = vadd.f32 %v3474, %v3545
        %v3547 = vpop.f32.mrf.mxu0
        %v3548 = vadd.f32 %v3474, %v3547
        %3549 = vdwg.mxu0
        %3550 = vmatprep.subr.mxu0 0.0
        %3551 = vmatpush1.msra.mxu0 0.0
        %3552 = vmatprep.subr.mxu0 0.0
        %3553 = vmatpush1.msra.mxu0 0.0
        %3554 = vmatprep.subr.mxu0 0.0
        %3555 = vmatpush1.msra.mxu0 0.0
        %3556 = vmatprep.subr.mxu0 0.0
        %3557 = vmatpush1.msra.mxu0 0.0
        %3558 = vmatprep.subr.mxu0 0.0
        %3559 = vmatpush1.msra.mxu0 0.0
        %3560 = vmatprep.subr.mxu0 0.0
        %3561 = vmatpush1.msra.mxu0 0.0
        %3562 = vmatprep.subr.mxu0 0.0
        %3563 = vmatpush1.msra.mxu0 0.0
        %3564 = vmatprep.subr.mxu0 0.0
        %3565 = vmatpush1.msra.mxu0 0.0
        %3566 = vmatprep.subr.mxu0 0.0
        %3567 = vmatpush1.msra.mxu0 0.0
        %3568 = vmatprep.subr.mxu0 0.0
        %3569 = vmatpush1.msra.mxu0 0.0
        %3570 = vmatprep.subr.mxu0 0.0
        %3571 = vmatpush1.msra.mxu0 0.0
        %3572 = vmatprep.subr.mxu0 0.0
        %3573 = vmatpush1.msra.mxu0 0.0
        %3574 = vmatprep.subr.mxu0 %v3444
        %3575 = vmatpush1.msra.mxu0 %v3442
        %3576 = vmatprep.subr.mxu0 %v3412
        %3577 = vmatpush1.msra.mxu0 %v3410
        %3578 = vmatprep.subr.mxu0 %v3380
        %3579 = vmatpush1.msra.mxu0 %v3378
        %3580 = vmatprep.subr.mxu0 %v3348
        %3581 = vmatpush1.msra.mxu0 %v3346
        %3582 = vmatprep.subr.mxu0 0.0
        %3583 = vmatpush2.msra.mxu0 0.0
        %3584 = vmatprep.subr.mxu0 0.0
        %3585 = vmatpush2.msra.mxu0 0.0
        %3586 = vmatprep.subr.mxu0 0.0
        %3587 = vmatpush2.msra.mxu0 0.0
        %3588 = vmatprep.subr.mxu0 0.0
        %3589 = vmatpush2.msra.mxu0 0.0
        %3590 = vmatprep.subr.mxu0 0.0
        %3591 = vmatpush2.msra.mxu0 0.0
        %3592 = vmatprep.subr.mxu0 0.0
        %3593 = vmatpush2.msra.mxu0 0.0
        %3594 = vmatprep.subr.mxu0 0.0
        %3595 = vmatpush2.msra.mxu0 0.0
        %3596 = vmatprep.subr.mxu0 0.0
        %3597 = vmatpush2.msra.mxu0 0.0
        %3598 = vmatprep.subr.mxu0 0.0
        %3599 = vmatpush2.msra.mxu0 0.0
        %3600 = vmatprep.subr.mxu0 0.0
        %3601 = vmatpush2.msra.mxu0 0.0
        %3602 = vmatprep.subr.mxu0 0.0
        %3603 = vmatpush2.msra.mxu0 0.0
        %3604 = vmatprep.subr.mxu0 0.0
        %3605 = vmatpush2.msra.mxu0 0.0
        %3606 = vmatprep.subr.mxu0 0.0
        %3607 = vmatpush2.msra.mxu0 0.0
        %3608 = vmatprep.subr.mxu0 0.0
        %3609 = vmatpush2.msra.mxu0 0.0
        %3610 = vmatprep.subr.mxu0 0.0
        %3611 = vmatpush2.msra.mxu0 0.0
        %3612 = vmatprep.subr.mxu0 0.0
        %3613 = vmatpush2.msra.mxu0 0.0
        %3614 = vmatprep.mubr.f32.mxu0 0.0
        %3615 = vmatmul.mubr.f32.gmra.mxu0 %v3477
        %v3616 = vpop.f32.mrf.mxu0
        %v3617 = vadd.f32 %v3474, %v3616
        %v3618 = vpop.f32.mrf.mxu0
        %v3619 = vadd.f32 %v3474, %v3618
        %3620 = vdwg.mxu0
        %3621 = vmatprep.subr.mxu0 0.0
        %3622 = vmatpush1.msra.mxu0 0.0
        %3623 = vmatprep.subr.mxu0 0.0
        %3624 = vmatpush1.msra.mxu0 0.0
        %3625 = vmatprep.subr.mxu0 0.0
        %3626 = vmatpush1.msra.mxu0 0.0
        %3627 = vmatprep.subr.mxu0 0.0
        %3628 = vmatpush1.msra.mxu0 0.0
        %3629 = vmatprep.subr.mxu0 0.0
        %3630 = vmatpush1.msra.mxu0 0.0
        %3631 = vmatprep.subr.mxu0 0.0
        %3632 = vmatpush1.msra.mxu0 0.0
        %3633 = vmatprep.subr.mxu0 0.0
        %3634 = vmatpush1.msra.mxu0 0.0
        %3635 = vmatprep.subr.mxu0 0.0
        %3636 = vmatpush1.msra.mxu0 0.0
        %3637 = vmatprep.subr.mxu0 0.0
        %3638 = vmatpush1.msra.mxu0 0.0
        %3639 = vmatprep.subr.mxu0 0.0
        %3640 = vmatpush1.msra.mxu0 0.0
        %3641 = vmatprep.subr.mxu0 0.0
        %3642 = vmatpush1.msra.mxu0 0.0
        %3643 = vmatprep.subr.mxu0 0.0
        %3644 = vmatpush1.msra.mxu0 0.0
        %3645 = vmatprep.subr.mxu0 %v3448
        %3646 = vmatpush1.msra.mxu0 %v3446
        %3647 = vmatprep.subr.mxu0 %v3416
        %3648 = vmatpush1.msra.mxu0 %v3414
        %3649 = vmatprep.subr.mxu0 %v3384
        %3650 = vmatpush1.msra.mxu0 %v3382
        %3651 = vmatprep.subr.mxu0 %v3352
        %3652 = vmatpush1.msra.mxu0 %v3350
        %3653 = vmatprep.subr.mxu0 0.0
        %3654 = vmatpush2.msra.mxu0 0.0
        %3655 = vmatprep.subr.mxu0 0.0
        %3656 = vmatpush2.msra.mxu0 0.0
        %3657 = vmatprep.subr.mxu0 0.0
        %3658 = vmatpush2.msra.mxu0 0.0
        %3659 = vmatprep.subr.mxu0 0.0
        %3660 = vmatpush2.msra.mxu0 0.0
        %3661 = vmatprep.subr.mxu0 0.0
        %3662 = vmatpush2.msra.mxu0 0.0
        %3663 = vmatprep.subr.mxu0 0.0
        %3664 = vmatpush2.msra.mxu0 0.0
        %3665 = vmatprep.subr.mxu0 0.0
        %3666 = vmatpush2.msra.mxu0 0.0
        %3667 = vmatprep.subr.mxu0 0.0
        %3668 = vmatpush2.msra.mxu0 0.0
        %3669 = vmatprep.subr.mxu0 0.0
        %3670 = vmatpush2.msra.mxu0 0.0
        %3671 = vmatprep.subr.mxu0 0.0
        %3672 = vmatpush2.msra.mxu0 0.0
        %3673 = vmatprep.subr.mxu0 0.0
        %3674 = vmatpush2.msra.mxu0 0.0
        %3675 = vmatprep.subr.mxu0 0.0
        %3676 = vmatpush2.msra.mxu0 0.0
        %3677 = vmatprep.subr.mxu0 0.0
        %3678 = vmatpush2.msra.mxu0 0.0
        %3679 = vmatprep.subr.mxu0 0.0
        %3680 = vmatpush2.msra.mxu0 0.0
        %3681 = vmatprep.subr.mxu0 0.0
        %3682 = vmatpush2.msra.mxu0 0.0
        %3683 = vmatprep.subr.mxu0 0.0
        %3684 = vmatpush2.msra.mxu0 0.0
        %3685 = vmatprep.mubr.f32.mxu0 0.0
        %3686 = vmatmul.mubr.f32.gmra.mxu0 %v3477
        %v3687 = vpop.f32.mrf.mxu0
        %v3688 = vadd.f32 %v3474, %v3687
        %v3689 = vpop.f32.mrf.mxu0
        %v3690 = vadd.f32 %v3474, %v3689
        %3691 = vdwg.mxu0
        %3692 = vmatprep.subr.mxu0 0.0
        %3693 = vmatpush1.msra.mxu0 0.0
        %3694 = vmatprep.subr.mxu0 0.0
        %3695 = vmatpush1.msra.mxu0 0.0
        %3696 = vmatprep.subr.mxu0 0.0
        %3697 = vmatpush1.msra.mxu0 0.0
        %3698 = vmatprep.subr.mxu0 0.0
        %3699 = vmatpush1.msra.mxu0 0.0
        %3700 = vmatprep.subr.mxu0 0.0
        %3701 = vmatpush1.msra.mxu0 0.0
        %3702 = vmatprep.subr.mxu0 0.0
        %3703 = vmatpush1.msra.mxu0 0.0
        %3704 = vmatprep.subr.mxu0 0.0
        %3705 = vmatpush1.msra.mxu0 0.0
        %3706 = vmatprep.subr.mxu0 0.0
        %3707 = vmatpush1.msra.mxu0 0.0
        %3708 = vmatprep.subr.mxu0 0.0
        %3709 = vmatpush1.msra.mxu0 0.0
        %3710 = vmatprep.subr.mxu0 0.0
        %3711 = vmatpush1.msra.mxu0 0.0
        %3712 = vmatprep.subr.mxu0 0.0
        %3713 = vmatpush1.msra.mxu0 0.0
        %3714 = vmatprep.subr.mxu0 0.0
        %3715 = vmatpush1.msra.mxu0 0.0
        %3716 = vmatprep.subr.mxu0 %v3452
        %3717 = vmatpush1.msra.mxu0 %v3450
        %3718 = vmatprep.subr.mxu0 %v3420
        %3719 = vmatpush1.msra.mxu0 %v3418
        %3720 = vmatprep.subr.mxu0 %v3388
        %3721 = vmatpush1.msra.mxu0 %v3386
        %3722 = vmatprep.subr.mxu0 %v3356
        %3723 = vmatpush1.msra.mxu0 %v3354
        %3724 = vmatprep.subr.mxu0 0.0
        %3725 = vmatpush2.msra.mxu0 0.0
        %3726 = vmatprep.subr.mxu0 0.0
        %3727 = vmatpush2.msra.mxu0 0.0
        %3728 = vmatprep.subr.mxu0 0.0
        %3729 = vmatpush2.msra.mxu0 0.0
        %3730 = vmatprep.subr.mxu0 0.0
        %3731 = vmatpush2.msra.mxu0 0.0
        %3732 = vmatprep.subr.mxu0 0.0
        %3733 = vmatpush2.msra.mxu0 0.0
        %3734 = vmatprep.subr.mxu0 0.0
        %3735 = vmatpush2.msra.mxu0 0.0
        %3736 = vmatprep.subr.mxu0 0.0
        %3737 = vmatpush2.msra.mxu0 0.0
        %3738 = vmatprep.subr.mxu0 0.0
        %3739 = vmatpush2.msra.mxu0 0.0
        %3740 = vmatprep.subr.mxu0 0.0
        %3741 = vmatpush2.msra.mxu0 0.0
        %3742 = vmatprep.subr.mxu0 0.0
        %3743 = vmatpush2.msra.mxu0 0.0
        %3744 = vmatprep.subr.mxu0 0.0
        %3745 = vmatpush2.msra.mxu0 0.0
        %3746 = vmatprep.subr.mxu0 0.0
        %3747 = vmatpush2.msra.mxu0 0.0
        %3748 = vmatprep.subr.mxu0 0.0
        %3749 = vmatpush2.msra.mxu0 0.0
        %3750 = vmatprep.subr.mxu0 0.0
        %3751 = vmatpush2.msra.mxu0 0.0
        %3752 = vmatprep.subr.mxu0 0.0
        %3753 = vmatpush2.msra.mxu0 0.0
        %3754 = vmatprep.subr.mxu0 0.0
        %3755 = vmatpush2.msra.mxu0 0.0
        %3756 = vmatprep.mubr.f32.mxu0 0.0
        %3757 = vmatmul.mubr.f32.gmra.mxu0 %v3477
        %v3758 = vpop.f32.mrf.mxu0
        %v3759 = vadd.f32 %v3474, %v3758
        %v3760 = vpop.f32.mrf.mxu0
        %v3761 = vadd.f32 %v3474, %v3760
        %3762 = vdwg.mxu0
        %3763 = vmatprep.subr.mxu0 0.0
        %3764 = vmatpush1.msra.mxu0 0.0
        %3765 = vmatprep.subr.mxu0 0.0
        %3766 = vmatpush1.msra.mxu0 0.0
        %3767 = vmatprep.subr.mxu0 0.0
        %3768 = vmatpush1.msra.mxu0 0.0
        %3769 = vmatprep.subr.mxu0 0.0
        %3770 = vmatpush1.msra.mxu0 0.0
        %3771 = vmatprep.subr.mxu0 0.0
        %3772 = vmatpush1.msra.mxu0 0.0
        %3773 = vmatprep.subr.mxu0 0.0
        %3774 = vmatpush1.msra.mxu0 0.0
        %3775 = vmatprep.subr.mxu0 0.0
        %3776 = vmatpush1.msra.mxu0 0.0
        %3777 = vmatprep.subr.mxu0 0.0
        %3778 = vmatpush1.msra.mxu0 0.0
        %3779 = vmatprep.subr.mxu0 0.0
        %3780 = vmatpush1.msra.mxu0 0.0
        %3781 = vmatprep.subr.mxu0 0.0
        %3782 = vmatpush1.msra.mxu0 0.0
        %3783 = vmatprep.subr.mxu0 0.0
        %3784 = vmatpush1.msra.mxu0 0.0
        %3785 = vmatprep.subr.mxu0 0.0
        %3786 = vmatpush1.msra.mxu0 0.0
        %3787 = vmatprep.subr.mxu0 %v3456
        %3788 = vmatpush1.msra.mxu0 %v3454
        %3789 = vmatprep.subr.mxu0 %v3424
        %3790 = vmatpush1.msra.mxu0 %v3422
        %3791 = vmatprep.subr.mxu0 %v3392
        %3792 = vmatpush1.msra.mxu0 %v3390
        %3793 = vmatprep.subr.mxu0 %v3360
        %3794 = vmatpush1.msra.mxu0 %v3358
        %3795 = vmatprep.subr.mxu0 0.0
        %3796 = vmatpush2.msra.mxu0 0.0
        %3797 = vmatprep.subr.mxu0 0.0
        %3798 = vmatpush2.msra.mxu0 0.0
        %3799 = vmatprep.subr.mxu0 0.0
        %3800 = vmatpush2.msra.mxu0 0.0
        %3801 = vmatprep.subr.mxu0 0.0
        %3802 = vmatpush2.msra.mxu0 0.0
        %3803 = vmatprep.subr.mxu0 0.0
        %3804 = vmatpush2.msra.mxu0 0.0
        %3805 = vmatprep.subr.mxu0 0.0
        %3806 = vmatpush2.msra.mxu0 0.0
        %3807 = vmatprep.subr.mxu0 0.0
        %3808 = vmatpush2.msra.mxu0 0.0
        %3809 = vmatprep.subr.mxu0 0.0
        %3810 = vmatpush2.msra.mxu0 0.0
        %3811 = vmatprep.subr.mxu0 0.0
        %3812 = vmatpush2.msra.mxu0 0.0
        %3813 = vmatprep.subr.mxu0 0.0
        %3814 = vmatpush2.msra.mxu0 0.0
        %3815 = vmatprep.subr.mxu0 0.0
        %3816 = vmatpush2.msra.mxu0 0.0
        %3817 = vmatprep.subr.mxu0 0.0
        %3818 = vmatpush2.msra.mxu0 0.0
        %3819 = vmatprep.subr.mxu0 0.0
        %3820 = vmatpush2.msra.mxu0 0.0
        %3821 = vmatprep.subr.mxu0 0.0
        %3822 = vmatpush2.msra.mxu0 0.0
        %3823 = vmatprep.subr.mxu0 0.0
        %3824 = vmatpush2.msra.mxu0 0.0
        %3825 = vmatprep.subr.mxu0 0.0
        %3826 = vmatpush2.msra.mxu0 0.0
        %3827 = vmatprep.mubr.f32.mxu0 0.0
        %3828 = vmatmul.mubr.f32.gmra.mxu0 %v3477
        %v3829 = vpop.f32.mrf.mxu0
        %v3830 = vadd.f32 %v3474, %v3829
        %v3831 = vpop.f32.mrf.mxu0
        %v3832 = vadd.f32 %v3474, %v3831
        %3833 = vdwg.mxu0
        %3834 = vmatprep.subr.mxu0 0.0
        %3835 = vmatpush1.msra.mxu0 0.0
        %3836 = vmatprep.subr.mxu0 0.0
        %3837 = vmatpush1.msra.mxu0 0.0
        %3838 = vmatprep.subr.mxu0 0.0
        %3839 = vmatpush1.msra.mxu0 0.0
        %3840 = vmatprep.subr.mxu0 0.0
        %3841 = vmatpush1.msra.mxu0 0.0
        %3842 = vmatprep.subr.mxu0 0.0
        %3843 = vmatpush1.msra.mxu0 0.0
        %3844 = vmatprep.subr.mxu0 0.0
        %3845 = vmatpush1.msra.mxu0 0.0
        %3846 = vmatprep.subr.mxu0 0.0
        %3847 = vmatpush1.msra.mxu0 0.0
        %3848 = vmatprep.subr.mxu0 0.0
        %3849 = vmatpush1.msra.mxu0 0.0
        %3850 = vmatprep.subr.mxu0 0.0
        %3851 = vmatpush1.msra.mxu0 0.0
        %3852 = vmatprep.subr.mxu0 0.0
        %3853 = vmatpush1.msra.mxu0 0.0
        %3854 = vmatprep.subr.mxu0 0.0
        %3855 = vmatpush1.msra.mxu0 0.0
        %3856 = vmatprep.subr.mxu0 0.0
        %3857 = vmatpush1.msra.mxu0 0.0
        %3858 = vmatprep.subr.mxu0 %v3460
        %3859 = vmatpush1.msra.mxu0 %v3458
        %3860 = vmatprep.subr.mxu0 %v3428
        %3861 = vmatpush1.msra.mxu0 %v3426
        %3862 = vmatprep.subr.mxu0 %v3396
        %3863 = vmatpush1.msra.mxu0 %v3394
        %3864 = vmatprep.subr.mxu0 %v3364
        %3865 = vmatpush1.msra.mxu0 %v3362
        %3866 = vmatprep.subr.mxu0 0.0
        %3867 = vmatpush2.msra.mxu0 0.0
        %3868 = vmatprep.subr.mxu0 0.0
        %3869 = vmatpush2.msra.mxu0 0.0
        %3870 = vmatprep.subr.mxu0 0.0
        %3871 = vmatpush2.msra.mxu0 0.0
        %3872 = vmatprep.subr.mxu0 0.0
        %3873 = vmatpush2.msra.mxu0 0.0
        %3874 = vmatprep.subr.mxu0 0.0
        %3875 = vmatpush2.msra.mxu0 0.0
        %3876 = vmatprep.subr.mxu0 0.0
        %3877 = vmatpush2.msra.mxu0 0.0
        %3878 = vmatprep.subr.mxu0 0.0
        %3879 = vmatpush2.msra.mxu0 0.0
        %3880 = vmatprep.subr.mxu0 0.0
        %3881 = vmatpush2.msra.mxu0 0.0
        %3882 = vmatprep.subr.mxu0 0.0
        %3883 = vmatpush2.msra.mxu0 0.0
        %3884 = vmatprep.subr.mxu0 0.0
        %3885 = vmatpush2.msra.mxu0 0.0
        %3886 = vmatprep.subr.mxu0 0.0
        %3887 = vmatpush2.msra.mxu0 0.0
        %3888 = vmatprep.subr.mxu0 0.0
        %3889 = vmatpush2.msra.mxu0 0.0
        %3890 = vmatprep.subr.mxu0 0.0
        %3891 = vmatpush2.msra.mxu0 0.0
        %3892 = vmatprep.subr.mxu0 0.0
        %3893 = vmatpush2.msra.mxu0 0.0
        %3894 = vmatprep.subr.mxu0 0.0
        %3895 = vmatpush2.msra.mxu0 0.0
        %3896 = vmatprep.subr.mxu0 0.0
        %3897 = vmatpush2.msra.mxu0 0.0
        %3898 = vmatprep.mubr.f32.mxu0 0.0
        %3899 = vmatmul.mubr.f32.gmra.mxu0 %v3477
        %v3900 = vpop.f32.mrf.mxu0
        %v3901 = vadd.f32 %v3474, %v3900
        %v3902 = vpop.f32.mrf.mxu0
        %v3903 = vadd.f32 %v3474, %v3902
        %3904 = vdwg.mxu0
        %3905 = vmatprep.subr.mxu0 0.0
        %3906 = vmatpush1.msra.mxu0 0.0
        %3907 = vmatprep.subr.mxu0 0.0
        %3908 = vmatpush1.msra.mxu0 0.0
        %3909 = vmatprep.subr.mxu0 0.0
        %3910 = vmatpush1.msra.mxu0 0.0
        %3911 = vmatprep.subr.mxu0 0.0
        %3912 = vmatpush1.msra.mxu0 0.0
        %3913 = vmatprep.subr.mxu0 0.0
        %3914 = vmatpush1.msra.mxu0 0.0
        %3915 = vmatprep.subr.mxu0 0.0
        %3916 = vmatpush1.msra.mxu0 0.0
        %3917 = vmatprep.subr.mxu0 0.0
        %3918 = vmatpush1.msra.mxu0 0.0
        %3919 = vmatprep.subr.mxu0 0.0
        %3920 = vmatpush1.msra.mxu0 0.0
        %3921 = vmatprep.subr.mxu0 0.0
        %3922 = vmatpush1.msra.mxu0 0.0
        %3923 = vmatprep.subr.mxu0 0.0
        %3924 = vmatpush1.msra.mxu0 0.0
        %3925 = vmatprep.subr.mxu0 0.0
        %3926 = vmatpush1.msra.mxu0 0.0
        %3927 = vmatprep.subr.mxu0 0.0
        %3928 = vmatpush1.msra.mxu0 0.0
        %3929 = vmatprep.subr.mxu0 %v3464
        %3930 = vmatpush1.msra.mxu0 %v3462
        %3931 = vmatprep.subr.mxu0 %v3432
        %3932 = vmatpush1.msra.mxu0 %v3430
        %3933 = vmatprep.subr.mxu0 %v3400
        %3934 = vmatpush1.msra.mxu0 %v3398
        %3935 = vmatprep.subr.mxu0 %v3368
        %3936 = vmatpush1.msra.mxu0 %v3366
        %3937 = vmatprep.subr.mxu0 0.0
        %3938 = vmatpush2.msra.mxu0 0.0
        %3939 = vmatprep.subr.mxu0 0.0
        %3940 = vmatpush2.msra.mxu0 0.0
        %3941 = vmatprep.subr.mxu0 0.0
        %3942 = vmatpush2.msra.mxu0 0.0
        %3943 = vmatprep.subr.mxu0 0.0
        %3944 = vmatpush2.msra.mxu0 0.0
        %3945 = vmatprep.subr.mxu0 0.0
        %3946 = vmatpush2.msra.mxu0 0.0
        %3947 = vmatprep.subr.mxu0 0.0
        %3948 = vmatpush2.msra.mxu0 0.0
        %3949 = vmatprep.subr.mxu0 0.0
        %3950 = vmatpush2.msra.mxu0 0.0
        %3951 = vmatprep.subr.mxu0 0.0
        %3952 = vmatpush2.msra.mxu0 0.0
        %3953 = vmatprep.subr.mxu0 0.0
        %3954 = vmatpush2.msra.mxu0 0.0
        %3955 = vmatprep.subr.mxu0 0.0
        %3956 = vmatpush2.msra.mxu0 0.0
        %3957 = vmatprep.subr.mxu0 0.0
        %3958 = vmatpush2.msra.mxu0 0.0
        %3959 = vmatprep.subr.mxu0 0.0
        %3960 = vmatpush2.msra.mxu0 0.0
        %3961 = vmatprep.subr.mxu0 0.0
        %3962 = vmatpush2.msra.mxu0 0.0
        %3963 = vmatprep.subr.mxu0 0.0
        %3964 = vmatpush2.msra.mxu0 0.0
        %3965 = vmatprep.subr.mxu0 0.0
        %3966 = vmatpush2.msra.mxu0 0.0
        %3967 = vmatprep.subr.mxu0 0.0
        %3968 = vmatpush2.msra.mxu0 0.0
        %3969 = vmatprep.mubr.f32.mxu0 0.0
        %3970 = vmatmul.mubr.f32.gmra.mxu0 %v3477
        %v3971 = vpop.f32.mrf.mxu0
        %v3972 = vadd.f32 %v3474, %v3971
        %v3973 = vpop.f32.mrf.mxu0
        %v3974 = vadd.f32 %v3474, %v3973
        %3975 = vdwg.mxu0
        %3976 = vmatprep.subr.mxu0 0.0
        %3977 = vmatpush1.msra.mxu0 0.0
        %3978 = vmatprep.subr.mxu0 0.0
        %3979 = vmatpush1.msra.mxu0 0.0
        %3980 = vmatprep.subr.mxu0 0.0
        %3981 = vmatpush1.msra.mxu0 0.0
        %3982 = vmatprep.subr.mxu0 0.0
        %3983 = vmatpush1.msra.mxu0 0.0
        %3984 = vmatprep.subr.mxu0 0.0
        %3985 = vmatpush1.msra.mxu0 0.0
        %3986 = vmatprep.subr.mxu0 0.0
        %3987 = vmatpush1.msra.mxu0 0.0
        %3988 = vmatprep.subr.mxu0 0.0
        %3989 = vmatpush1.msra.mxu0 0.0
        %3990 = vmatprep.subr.mxu0 0.0
        %3991 = vmatpush1.msra.mxu0 0.0
        %3992 = vmatprep.subr.mxu0 0.0
        %3993 = vmatpush1.msra.mxu0 0.0
        %3994 = vmatprep.subr.mxu0 0.0
        %3995 = vmatpush1.msra.mxu0 0.0
        %3996 = vmatprep.subr.mxu0 0.0
        %3997 = vmatpush1.msra.mxu0 0.0
        %3998 = vmatprep.subr.mxu0 0.0
        %3999 = vmatpush1.msra.mxu0 0.0
        %4000 = vmatprep.subr.mxu0 %v3468
        %4001 = vmatpush1.msra.mxu0 %v3466
        %4002 = vmatprep.subr.mxu0 %v3436
        %4003 = vmatpush1.msra.mxu0 %v3434
        %4004 = vmatprep.subr.mxu0 %v3404
        %4005 = vmatpush1.msra.mxu0 %v3402
        %4006 = vmatprep.subr.mxu0 %v3372
        %4007 = vmatpush1.msra.mxu0 %v3370
        %4008 = vmatprep.subr.mxu0 0.0
        %4009 = vmatpush2.msra.mxu0 0.0
        %4010 = vmatprep.subr.mxu0 0.0
        %4011 = vmatpush2.msra.mxu0 0.0
        %4012 = vmatprep.subr.mxu0 0.0
        %4013 = vmatpush2.msra.mxu0 0.0
        %4014 = vmatprep.subr.mxu0 0.0
        %4015 = vmatpush2.msra.mxu0 0.0
        %4016 = vmatprep.subr.mxu0 0.0
        %4017 = vmatpush2.msra.mxu0 0.0
        %4018 = vmatprep.subr.mxu0 0.0
        %4019 = vmatpush2.msra.mxu0 0.0
        %4020 = vmatprep.subr.mxu0 0.0
        %4021 = vmatpush2.msra.mxu0 0.0
        %4022 = vmatprep.subr.mxu0 0.0
        %4023 = vmatpush2.msra.mxu0 0.0
        %4024 = vmatprep.subr.mxu0 0.0
        %4025 = vmatpush2.msra.mxu0 0.0
        %4026 = vmatprep.subr.mxu0 0.0
        %4027 = vmatpush2.msra.mxu0 0.0
        %4028 = vmatprep.subr.mxu0 0.0
        %4029 = vmatpush2.msra.mxu0 0.0
        %4030 = vmatprep.subr.mxu0 0.0
        %4031 = vmatpush2.msra.mxu0 0.0
        %4032 = vmatprep.subr.mxu0 0.0
        %4033 = vmatpush2.msra.mxu0 0.0
        %4034 = vmatprep.subr.mxu0 0.0
        %4035 = vmatpush2.msra.mxu0 0.0
        %4036 = vmatprep.subr.mxu0 0.0
        %4037 = vmatpush2.msra.mxu0 0.0
        %4038 = vmatprep.subr.mxu0 0.0
        %4039 = vmatpush2.msra.mxu0 0.0
        %4040 = vmatprep.mubr.f32.mxu0 0.0
        %4041 = vmatmul.mubr.f32.gmra.mxu0 %v3477
        %v4042 = vpop.f32.mrf.mxu0
        %v4043 = vadd.f32 %v3474, %v4042
        %v4044 = vpop.f32.mrf.mxu0
        %v4045 = vadd.f32 %v3474, %v4044
        %4046 = vdwg.mxu0
        %v4063 = vcombine.low %v3546, %v3548
        %v4064 = vcombine.low %v3617, %v3619
        %v4065 = vcombine.low %v3688, %v3690
        %v4066 = vcombine.low %v3759, %v3761
        %v4067 = vcombine.low %v3830, %v3832
        %v4068 = vcombine.low %v3901, %v3903
        %v4069 = vcombine.low %v3972, %v3974
        %v4070 = vcombine.low %v4043, %v4045
        %4079 = vst [vmem:[%s326] sm:$0x77] %v4063
        %4080 = vst [vmem:[%s326 + $0x8] sm:$0x77] %v4064
        %4081 = vst [vmem:[%s326 + $0x10] sm:$0x77] %v4065
        %4082 = vst [vmem:[%s326 + $0x18] sm:$0x77] %v4066
        %4083 = vst [vmem:[%s326 + $0x20] sm:$0x77] %v4067
        %4084 = vst [vmem:[%s326 + $0x28] sm:$0x77] %v4068
        %4085 = vst [vmem:[%s326 + $0x30] sm:$0x77] %v4069
        %4086 = vst [vmem:[%s326 + $0x38] sm:$0x77] %v4070
        %s4087 = sand.u32 %s225, 1
        %s4088 = scalar_lea.sflag [#allocation3], %s4087
        %s4089 = sand.u32 %s225, 1
        %s4090 = smul.addr %s4089, 64
        %s4091 = scalar_lea.vmem [#allocation2], %s4090
        // Predicated region
        $region57: #{tpu_custom_call.1} parent=55 // pred_check
          %p4092 = pneg %p235
        $region58: #{tpu_custom_call.1} parent=55 // pred_check_branch
          %4094 = sbr.rel (%p4092) target = $region60
        $region59: #{tpu_custom_call.1} parent=55 // pred_region
          %s4095 = smul.u32 16, %s23
          %s4097 = ssub.s32 1024, 1024
          %4098 = vsyncadd %s4088, %s4097
          %s4099 = smul.addr %s4095, 64
          %s4100 = scalar_lea.hbm %s9, %s4099
          %s4102 = sshll.u32 %s4091, 4
          %s4103 = int_to_ptr.vmem [resolvable:$true] %s4102
          %4105 = dma.vmem_to_hbm [thread:$0]  %s4103, 1024, %s4100, %s4088
        $region60: #{tpu_custom_call.1} parent=55 // pred_fallthru
          _
      $region56: #{tpu_custom_call.1} parent=5 // pred_fallthru
        _
      %p4106 = scmp.le.s32.totalorder 2, %s18
      // Predicated region
      $region61: #{tpu_custom_call.1} parent=5 // pred_check
        %p4107 = pneg %p4106
      $region62: #{tpu_custom_call.1} parent=5 // pred_check_branch
        %4109 = sbr.rel (%p4107) target = $region64
      $region63: #{tpu_custom_call.1} parent=5 // pred_region
        %s4110 = ssub.s32 %s18, 2
        // Predicated region
        $region65: #{tpu_custom_call.1} parent=63 // pred_check
          %p4111 = pneg %p241
        $region66: #{tpu_custom_call.1} parent=63 // pred_check_branch
          %4113 = sbr.rel (%p4111) target = $region68
        $region67: #{tpu_custom_call.1} parent=63 // pred_region
          %s4114 = sand.u32 %s226, 1
          %s4115 = scalar_lea.sflag [#allocation3], %s4114
          %s4116 = sand.u32 %s226, 1
          %s4117 = smul.addr %s4116, 64
          %s4118 = scalar_lea.vmem [#allocation2], %s4117
          %4119 = dma.done %s4115, 1024
        $region68: #{tpu_custom_call.1} parent=63 // pred_fallthru
          _
      $region64: #{tpu_custom_call.1} parent=5 // pred_fallthru
        _
    $region6: #{tpu_custom_call.1} parent=1 // loop_footer
      %s22 = sadd.s32 1, %s18
    $region7: #{tpu_custom_call.1} parent=1 // loop_footer_branch
      %17 = sbr.rel target = $region3
    $region8: #{tpu_custom_call.1} parent=1 // loop_exit
      _
    %4120 = vsyncpa [#allocation3], 1
    %s4121 = scalar_lea.sflag [#allocation3], 1
    %4122 = vsyncpa %s4121, 1

</llo_original>
